<compile_context>
chip_gen: v7x
topology: tpu7x:2x2x1
jax: 0.10.0
libtpu: 0.0.40
codegen_flags: <defaults>
</compile_context>

<pallas_src>
import functools
import math

import jax
import jax.numpy as jnp
from jax import lax
from jax.experimental import pallas as pl
from jax.experimental.pallas import tpu as pltpu

# ---------------- small, forward-consistent config ----------------
EMBED_DIM = 32
NUM_LAYERS = 2
NUM_HEADS = 4
FF_DIM = 64
VOCAB = 64
VOCAB_PAD = 128  # lane-dense lm head / logits output
MAX_SEQ = 16
HEAD_DIM = EMBED_DIM // NUM_HEADS
LN_EPS = 1e-5
NEG_INF = -1e30  # finite large-negative mask value (avoids -inf -> NaN risk)

_PARAM_ORDER = ("tok_emb", "ln1_g", "ln1_b", "w_qkv", "b_qkv", "wo", "bo",
                "ln2_g", "ln2_b", "w1", "b1", "w2", "b2", "lnf_g", "lnf_b",
                "lm_w", "lm_b")


# ---------------- in-kernel helpers ----------------
def _layernorm(x, g, b):
    mean = jnp.mean(x, axis=-1, keepdims=True)
    var = jnp.mean(jnp.square(x - mean), axis=-1, keepdims=True)
    return (x - mean) * lax.rsqrt(var + LN_EPS) * g + b


def _forward_rows(ids_ref, pos_ref, p, *, S):
    """Transformer forward for one sequence (S rows). Returns (S, VOCAB_PAD) logits."""
    (tok_emb, ln1_g, ln1_b, w_qkv, b_qkv, wo, bo, ln2_g, ln2_b,
     w1, b1, w2, b2, lnf_g, lnf_b, lm_w, lm_b) = p
    D, H, Dh = EMBED_DIM, NUM_HEADS, HEAD_DIM
    scale = 1.0 / math.sqrt(Dh)

    # --- in-kernel token embedding (one-hot matmul on MXU) + positional add ---
    ids = ids_ref[...]                                           # (S, 1) int32
    vcol = lax.broadcasted_iota(jnp.int32, (S, VOCAB), 1)
    onehot = (ids == vcol).astype(jnp.float32)                   # (S, V)
    h = jnp.dot(onehot, tok_emb[...],
                preferred_element_type=jnp.float32) + pos_ref[...]   # (S, D)

    # causal mask, built once per grid step
    row = lax.broadcasted_iota(jnp.int32, (S, S), 0)
    col = lax.broadcasted_iota(jnp.int32, (S, S), 1)
    causal = col <= row

    # NOTE: NUM_LAYERS=2 so a static unroll is fine; at scale move this to a
    # grid axis / lax.fori_loop with pl.ds-indexed weights.
    for l in range(NUM_LAYERS):
        # --- LN1 + fused QKV projection (one lane-dense matmul) ---
        hn = _layernorm(h, ln1_g[l], ln1_b[l])
        qkv = jnp.dot(hn, w_qkv[l],
                      preferred_element_type=jnp.float32) + b_qkv[l]  # (S, 3*D)

        # --- per-head causal attention; heads concatenated for one output proj ---
        heads = []
        for hd in range(H):
            q = qkv[:, hd * Dh:(hd + 1) * Dh]
            k = qkv[:, D + hd * Dh:D + (hd + 1) * Dh]
            v = qkv[:, 2 * D + hd * Dh:2 * D + (hd + 1) * Dh]
            s = jnp.dot(q, k.T, preferred_element_type=jnp.float32) * scale
            s = jnp.where(causal, s, NEG_INF)
            m = jnp.max(s, axis=-1, keepdims=True)
            e = jnp.exp(s - m)
            pa = e / jnp.sum(e, axis=-1, keepdims=True)          # exact softmax
            heads.append(jnp.dot(pa, v, preferred_element_type=jnp.float32))
        attn = jnp.concatenate(heads, axis=-1)                   # (S, H*Dh = D)
        h = h + jnp.dot(attn, wo[l],
                        preferred_element_type=jnp.float32) + bo[l]

        # --- LN2 + FF ---
        hn2 = _layernorm(h, ln2_g[l], ln2_b[l])
        # TODO(synk): PyTorch nn.GELU default is exact (erf); tanh approximation
        # used here (erf has no guaranteed Mosaic lowering).
        f = jax.nn.gelu(
            jnp.dot(hn2, w1[l], preferred_element_type=jnp.float32) + b1[l],
            approximate=True)
        h = h + jnp.dot(f, w2[l], preferred_element_type=jnp.float32) + b2[l]

    # --- final LN + lane-padded lm head ---
    hf = _layernorm(h, lnf_g[...], lnf_b[...])
    return jnp.dot(hf, lm_w[...], preferred_element_type=jnp.float32) + lm_b[...]


def _logits_kernel(ids_ref, pos_ref, *refs, S):
    *param_refs, out_ref = refs
    out_ref[...] = _forward_rows(ids_ref, pos_ref, param_refs, S=S)


def _loss_kernel(ids_ref, pos_ref, labels_ref, *refs, S):
    *param_refs, loss_ref = refs
    logits = _forward_rows(ids_ref, pos_ref, param_refs, S=S)    # (S, VOCAB_PAD)
    labels = labels_ref[...]                                     # (S, 1) int32
    valid = (labels >= 0).astype(jnp.float32)                    # (S, 1)
    m = jnp.max(logits, axis=-1, keepdims=True)
    lse = jnp.log(jnp.sum(jnp.exp(logits - m), axis=-1, keepdims=True)) + m
    vcol = lax.broadcasted_iota(jnp.int32, (S, VOCAB_PAD), 1)
    sel = labels == vcol                                         # in-kernel label gather
    label_logit = jnp.sum(jnp.where(sel, logits, 0.0), axis=-1, keepdims=True)
    loss_b = jnp.sum((lse - label_logit) * valid)                # per-sequence loss sum
    loss_ref[...] = jnp.zeros(loss_ref.shape, jnp.float32) + loss_b


# ---------------- pallas_call wrappers ----------------
def _full_spec(a):
    nd = a.ndim
    return pl.BlockSpec(a.shape, lambda b, _nd=nd: (0,) * _nd)


def _fused_logits(params, ids_col, pos_slice, B, S):
    inputs = [ids_col, pos_slice] + [params[k] for k in _PARAM_ORDER]
    kernel = functools.partial(_logits_kernel, S=S)
    return pl.pallas_call(
        kernel,
        out_shape=jax.ShapeDtypeStruct((B * S, VOCAB_PAD), jnp.float32),
        grid=(B,),
        in_specs=[pl.BlockSpec((S, 1), lambda b: (b, 0)),
                  pl.BlockSpec((S, EMBED_DIM), lambda b: (0, 0))]
                 + [_full_spec(params[k]) for k in _PARAM_ORDER],
        out_specs=pl.BlockSpec((S, VOCAB_PAD), lambda b: (b, 0)),
        compiler_params=pltpu.CompilerParams(
            dimension_semantics=("parallel",)),
    )(*inputs)


def _fused_loss(params, ids_col, pos_slice, labels_col, B, S):
    inputs = [ids_col, pos_slice, labels_col] + [params[k] for k in _PARAM_ORDER]
    kernel = functools.partial(_loss_kernel, S=S)
    # Per-sequence loss sums, written lane-dense (one (8,128) block per batch);
    # summed outside. Keeps the grid fully "parallel" (v7x: both TCs usable).
    per_batch = pl.pallas_call(
        kernel,
        out_shape=jax.ShapeDtypeStruct((B, 8, VOCAB_PAD), jnp.float32),
        grid=(B,),
        in_specs=[pl.BlockSpec((S, 1), lambda b: (b, 0)),
                  pl.BlockSpec((S, EMBED_DIM), lambda b: (0, 0)),
                  pl.BlockSpec((S, 1), lambda b: (b, 0))]
                 + [_full_spec(params[k]) for k in _PARAM_ORDER],
        out_specs=pl.BlockSpec((1, 8, VOCAB_PAD), lambda b: (b, 0, 0)),
        compiler_params=pltpu.CompilerParams(
            dimension_semantics=("parallel",)),
    )(*inputs)
    return jnp.sum(per_batch[:, 0, 0])


# ---------------- parameters & forward (JAX glue) ----------------
def init_params(key):
    D, F, V, L = EMBED_DIM, FF_DIM, VOCAB, NUM_LAYERS
    VP = VOCAB_PAD
    ks = jax.random.split(key, 8)

    def nrm(k, shape):
        return jax.random.normal(k, shape, jnp.float32) * 0.02

    # lm head lane-padded to 128; pad biases are -inf-ish so LSE/argmax ignore them.
    lm_w = jnp.concatenate(
        [nrm(ks[6], (D, V)), jnp.zeros((D, VP - V), jnp.float32)], axis=1)
    lm_b = jnp.concatenate(
        [jnp.zeros((1, V), jnp.float32),
         jnp.full((1, VP - V), NEG_INF, jnp.float32)], axis=1)

    return {
        "tok_emb": nrm(ks[0], (V, D)),
        "pos_emb": nrm(ks[1], (MAX_SEQ, D)),
        # fused QKV projection: (L, D, 3*H*Dh) -- mathematically identical to the
        # reference's separate per-head projections, but lane-dense on the MXU.
        "w_qkv": nrm(ks[2], (L, D, 3 * D)),
        "b_qkv": jnp.zeros((L, 1, 3 * D), jnp.float32),
        # fused output projection over concatenated heads: (L, H*Dh, D).
        "wo": nrm(ks[3], (L, D, D)),
        "bo": jnp.zeros((L, 1, D), jnp.float32),
        "w1": nrm(ks[4], (L, D, F)),
        "b1": jnp.zeros((L, 1, F), jnp.float32),
        "w2": nrm(ks[5], (L, F, D)),
        "b2": jnp.zeros((L, 1, D), jnp.float32),
        "ln1_g": jnp.ones((L, 1, D), jnp.float32),
        "ln1_b": jnp.zeros((L, 1, D), jnp.float32),
        "ln2_g": jnp.ones((L, 1, D), jnp.float32),
        "ln2_b": jnp.zeros((L, 1, D), jnp.float32),
        "lnf_g": jnp.ones((1, D), jnp.float32),
        "lnf_b": jnp.zeros((1, D), jnp.float32),
        "lm_w": lm_w,
        "lm_b": lm_b,
    }


def _pad_ids(ids, s_pad, fill):
    B, S = ids.shape
    if S == s_pad:
        return ids
    return jnp.concatenate(
        [ids, jnp.full((B, s_pad - S), fill, ids.dtype)], axis=1)


def transformer_forward(params, input_ids):
    B, S = input_ids.shape
    s_pad = ((S + 7) // 8) * 8
    assert s_pad <= MAX_SEQ, "sequence longer than max_seq_len"
    ids = _pad_ids(input_ids.astype(jnp.int32), s_pad, 0).reshape(B * s_pad, 1)
    pos = params["pos_emb"][:s_pad]
    logits = _fused_logits(params, ids, pos, B, s_pad)
    return logits.reshape(B, s_pad, VOCAB_PAD)[:, :S, :VOCAB]


def cot_forward(params, input_ids, target_ids=None):
    """Mirrors CoTModel.forward: logits (B, S, V) or scalar loss if target_ids given."""
    if target_ids is None:
        return transformer_forward(params, input_ids)

    Li = input_ids.shape[1]
    x_ids = jnp.concatenate([input_ids, target_ids[:, :-1]], axis=1)
    B, S = x_ids.shape
    s_pad = ((S + 7) // 8) * 8
    assert s_pad <= MAX_SEQ, "sequence longer than max_seq_len"

    # Labels aligned so that row Li + t predicts target_ids[:, 1 + t]; other
    # rows get ignore_index = -1 (same semantics as F.cross_entropy ignore_index).
    # TODO(synk): the reference slices logits[:, Li-1:, :] against target_ids[:, 1:],
    # which is length-mismatched (would error in PyTorch); the consistent
    # next-token alignment is used instead.
    pad_lab = jnp.full((B, Li), -1, jnp.int32)
    labels = jnp.concatenate([pad_lab, target_ids[:, 1:].astype(jnp.int32)], axis=1)

    ids = _pad_ids(x_ids.astype(jnp.int32), s_pad, 0).reshape(B * s_pad, 1)
    labels = _pad_ids(labels, s_pad, -1).reshape(B * s_pad, 1)
    pos = params["pos_emb"][:s_pad]

    count = jnp.sum((labels != -1).astype(jnp.float32))
    loss_sum = _fused_loss(params, ids, pos, labels, B, s_pad)
    return loss_sum / jnp.maximum(count, 1.0)


if __name__ == "__main__":
    key = jax.random.PRNGKey(0)
    pkey, ikey, tkey = jax.random.split(key, 3)
    params = init_params(pkey)

    B, S = 2, 8
    input_ids = jax.random.randint(ikey, (B, S), 0, VOCAB, dtype=jnp.int32)
    target_ids = jax.random.randint(tkey, (B, S), 0, VOCAB, dtype=jnp.int32)

    # inference path: logits (B, S, VOCAB)
    logits = jax.block_until_ready(cot_forward(params, input_ids))
    assert logits.shape == (B, S, VOCAB)
    assert bool(jnp.all(jnp.isfinite(logits)))

    # training path: scalar cross-entropy loss
    loss = jax.block_until_ready(cot_forward(params, input_ids, target_ids))
    assert loss.shape == ()
    assert bool(jnp.isfinite(loss))

    print("KERNEL_OK")
</pallas_src>

<mosaic_0001>
module attributes {stable_mosaic.version = 11 : i64} {
  func.func @_logits_kernel(%arg0: i32, %arg1: memref<8x1xi32, #tpu.memory_space<vmem>>, %arg2: memref<8x32xf32, #tpu.memory_space<vmem>>, %arg3: memref<64x32xf32, #tpu.memory_space<vmem>>, %arg4: memref<2x1x32xf32, #tpu.memory_space<vmem>>, %arg5: memref<2x1x32xf32, #tpu.memory_space<vmem>>, %arg6: memref<2x32x96xf32, #tpu.memory_space<vmem>>, %arg7: memref<2x1x96xf32, #tpu.memory_space<vmem>>, %arg8: memref<2x32x32xf32, #tpu.memory_space<vmem>>, %arg9: memref<2x1x32xf32, #tpu.memory_space<vmem>>, %arg10: memref<2x1x32xf32, #tpu.memory_space<vmem>>, %arg11: memref<2x1x32xf32, #tpu.memory_space<vmem>>, %arg12: memref<2x32x64xf32, #tpu.memory_space<vmem>>, %arg13: memref<2x1x64xf32, #tpu.memory_space<vmem>>, %arg14: memref<2x64x32xf32, #tpu.memory_space<vmem>>, %arg15: memref<2x1x32xf32, #tpu.memory_space<vmem>>, %arg16: memref<1x32xf32, #tpu.memory_space<vmem>>, %arg17: memref<1x32xf32, #tpu.memory_space<vmem>>, %arg18: memref<32x128xf32, #tpu.memory_space<vmem>>, %arg19: memref<1x128xf32, #tpu.memory_space<vmem>>, %arg20: memref<8x128xf32, #tpu.memory_space<vmem>>) attributes {dimension_semantics = [#tpu.dimension_semantics<parallel>], iteration_bounds = array<i64: 2>, scalar_prefetch = 0 : i64, scratch_operands = 0 : i64, tpu.core_type = #tpu.core_type<tc>, window_params = [{transform_indices = @transform_0, window_bounds = array<i64: 8, 1>}, {pipeline_mode = #tpu.pipeline_mode<synchronous>, transform_indices = @transform_1, window_bounds = array<i64: 8, 32>}, {pipeline_mode = #tpu.pipeline_mode<synchronous>, transform_indices = @transform_2, window_bounds = array<i64: 64, 32>}, {pipeline_mode = #tpu.pipeline_mode<synchronous>, transform_indices = @transform_3, window_bounds = array<i64: 2, 1, 32>}, {pipeline_mode = #tpu.pipeline_mode<synchronous>, transform_indices = @transform_4, window_bounds = array<i64: 2, 1, 32>}, {pipeline_mode = #tpu.pipeline_mode<synchronous>, transform_indices = @transform_5, window_bounds = array<i64: 2, 32, 96>}, {pipeline_mode = #tpu.pipeline_mode<synchronous>, transform_indices = @transform_6, window_bounds = array<i64: 2, 1, 96>}, {pipeline_mode = #tpu.pipeline_mode<synchronous>, transform_indices = @transform_7, window_bounds = array<i64: 2, 32, 32>}, {pipeline_mode = #tpu.pipeline_mode<synchronous>, transform_indices = @transform_8, window_bounds = array<i64: 2, 1, 32>}, {pipeline_mode = #tpu.pipeline_mode<synchronous>, transform_indices = @transform_9, window_bounds = array<i64: 2, 1, 32>}, {pipeline_mode = #tpu.pipeline_mode<synchronous>, transform_indices = @transform_10, window_bounds = array<i64: 2, 1, 32>}, {pipeline_mode = #tpu.pipeline_mode<synchronous>, transform_indices = @transform_11, window_bounds = array<i64: 2, 32, 64>}, {pipeline_mode = #tpu.pipeline_mode<synchronous>, transform_indices = @transform_12, window_bounds = array<i64: 2, 1, 64>}, {pipeline_mode = #tpu.pipeline_mode<synchronous>, transform_indices = @transform_13, window_bounds = array<i64: 2, 64, 32>}, {pipeline_mode = #tpu.pipeline_mode<synchronous>, transform_indices = @transform_14, window_bounds = array<i64: 2, 1, 32>}, {pipeline_mode = #tpu.pipeline_mode<synchronous>, transform_indices = @transform_15, window_bounds = array<i64: 1, 32>}, {pipeline_mode = #tpu.pipeline_mode<synchronous>, transform_indices = @transform_16, window_bounds = array<i64: 1, 32>}, {pipeline_mode = #tpu.pipeline_mode<synchronous>, transform_indices = @transform_17, window_bounds = array<i64: 32, 128>}, {pipeline_mode = #tpu.pipeline_mode<synchronous>, transform_indices = @transform_18, window_bounds = array<i64: 1, 128>}, {transform_indices = @transform_19, window_bounds = array<i64: 8, 128>}]} {
    %c0 = arith.constant 0 : index
    %c0_0 = arith.constant 0 : index
    %0 = vector.load %arg1[%c0, %c0_0] : memref<8x1xi32, #tpu.memory_space<vmem>>, vector<8x1xi32>
    %1 = tpu.iota {dimensions = array<i32: 1>} : vector<8x64xi32>
    %2 = vector.broadcast %0 : vector<8x1xi32> to vector<8x64xi32>
    %3 = arith.cmpi eq, %2, %1 : vector<8x64xi32>
    %4 = arith.extui %3 : vector<8x64xi1> to vector<8x64xi32>
    %5 = arith.sitofp %4 : vector<8x64xi32> to vector<8x64xf32>
    %c0_1 = arith.constant 0 : index
    %c0_2 = arith.constant 0 : index
    %6 = vector.load %arg3[%c0_1, %c0_2] : memref<64x32xf32, #tpu.memory_space<vmem>>, vector<64x32xf32>
    %cst = arith.constant dense<0.000000e+00> : vector<8x32xf32>
    %7 = tpu.matmul %5, %6, %cst {dimension_numbers = #tpu.dot_dimension_numbers<[1], [0], [0], [1], [0, 0, 1, 1], [], []>} : vector<8x64xf32>, vector<64x32xf32>, vector<8x32xf32> -> vector<8x32xf32>
    %c0_3 = arith.constant 0 : index
    %c0_4 = arith.constant 0 : index
    %8 = vector.load %arg2[%c0_3, %c0_4] : memref<8x32xf32, #tpu.memory_space<vmem>>, vector<8x32xf32>
    %9 = arith.addf %7, %8 : vector<8x32xf32>
    %10 = tpu.iota {dimensions = array<i32: 0>} : vector<8x8xi32>
    %11 = tpu.iota {dimensions = array<i32: 1>} : vector<8x8xi32>
    %12 = arith.cmpi sle, %11, %10 : vector<8x8xi32>
    %c0_5 = arith.constant 0 : index
    %c0_6 = arith.constant 0 : index
    %c0_7 = arith.constant 0 : index
    %13 = vector.load %arg4[%c0_5, %c0_6, %c0_7] : memref<2x1x32xf32, #tpu.memory_space<vmem>>, vector<1x1x32xf32>
    %14 = vector.shape_cast %13 : vector<1x1x32xf32> to vector<1x32xf32>
    %c0_8 = arith.constant 0 : index
    %c0_9 = arith.constant 0 : index
    %c0_10 = arith.constant 0 : index
    %15 = vector.load %arg5[%c0_8, %c0_9, %c0_10] : memref<2x1x32xf32, #tpu.memory_space<vmem>>, vector<1x1x32xf32>
    %16 = vector.shape_cast %15 : vector<1x1x32xf32> to vector<1x32xf32>
    %cst_11 = arith.constant dense<0.000000e+00> : vector<8xf32>
    %17 = vector.multi_reduction <add>, %9, %cst_11 [1] : vector<8x32xf32> to vector<8xf32>
    %18 = vector.shape_cast %17 : vector<8xf32> to vector<8x1xf32>
    %cst_12 = arith.constant 3.200000e+01 : f32
    %19 = vector.broadcast %cst_12 : f32 to vector<8x1xf32>
    %20 = arith.divf %18, %19 : vector<8x1xf32>
    %21 = vector.broadcast %20 : vector<8x1xf32> to vector<8x32xf32>
    %22 = arith.subf %9, %21 : vector<8x32xf32>
    %23 = arith.mulf %22, %22 : vector<8x32xf32>
    %cst_13 = arith.constant dense<0.000000e+00> : vector<8xf32>
    %24 = vector.multi_reduction <add>, %23, %cst_13 [1] : vector<8x32xf32> to vector<8xf32>
    %25 = vector.shape_cast %24 : vector<8xf32> to vector<8x1xf32>
    %cst_14 = arith.constant 3.200000e+01 : f32
    %26 = vector.broadcast %cst_14 : f32 to vector<8x1xf32>
    %27 = arith.divf %25, %26 : vector<8x1xf32>
    %28 = vector.broadcast %20 : vector<8x1xf32> to vector<8x32xf32>
    %29 = arith.subf %9, %28 : vector<8x32xf32>
    %cst_15 = arith.constant 9.99999974E-6 : f32
    %30 = vector.broadcast %cst_15 : f32 to vector<8x1xf32>
    %31 = arith.addf %27, %30 : vector<8x1xf32>
    %32 = math.rsqrt %31 : vector<8x1xf32>
    %33 = vector.broadcast %32 : vector<8x1xf32> to vector<8x32xf32>
    %34 = arith.mulf %29, %33 : vector<8x32xf32>
    %35 = vector.broadcast %14 : vector<1x32xf32> to vector<8x32xf32>
    %36 = arith.mulf %34, %35 : vector<8x32xf32>
    %37 = vector.broadcast %16 : vector<1x32xf32> to vector<8x32xf32>
    %38 = arith.addf %36, %37 : vector<8x32xf32>
    %c0_16 = arith.constant 0 : index
    %c0_17 = arith.constant 0 : index
    %c0_18 = arith.constant 0 : index
    %39 = vector.load %arg6[%c0_16, %c0_17, %c0_18] : memref<2x32x96xf32, #tpu.memory_space<vmem>>, vector<1x32x96xf32>
    %40 = vector.shape_cast %39 : vector<1x32x96xf32> to vector<32x96xf32>
    %cst_19 = arith.constant dense<0.000000e+00> : vector<8x96xf32>
    %41 = tpu.matmul %38, %40, %cst_19 {dimension_numbers = #tpu.dot_dimension_numbers<[1], [0], [0], [1], [0, 0, 1, 1], [], []>} : vector<8x32xf32>, vector<32x96xf32>, vector<8x96xf32> -> vector<8x96xf32>
    %c0_20 = arith.constant 0 : index
    %c0_21 = arith.constant 0 : index
    %c0_22 = arith.constant 0 : index
    %42 = vector.load %arg7[%c0_20, %c0_21, %c0_22] : memref<2x1x96xf32, #tpu.memory_space<vmem>>, vector<1x1x96xf32>
    %43 = vector.shape_cast %42 : vector<1x1x96xf32> to vector<1x96xf32>
    %44 = vector.broadcast %43 : vector<1x96xf32> to vector<8x96xf32>
    %45 = arith.addf %41, %44 : vector<8x96xf32>
    %46 = vector.extract_strided_slice %45 {offsets = [0, 0], sizes = [8, 8], strides = [1, 1]} : vector<8x96xf32> to vector<8x8xf32>
    %47 = vector.extract_strided_slice %45 {offsets = [0, 32], sizes = [8, 8], strides = [1, 1]} : vector<8x96xf32> to vector<8x8xf32>
    %48 = vector.extract_strided_slice %45 {offsets = [0, 64], sizes = [8, 8], strides = [1, 1]} : vector<8x96xf32> to vector<8x8xf32>
    %49 = tpu.transpose %47, [1, 0] : vector<8x8xf32> -> vector<8x8xf32>
    %cst_23 = arith.constant dense<0.000000e+00> : vector<8x8xf32>
    %50 = tpu.matmul %46, %49, %cst_23 {dimension_numbers = #tpu.dot_dimension_numbers<[1], [0], [0], [1], [0, 0, 1, 1], [], []>} : vector<8x8xf32>, vector<8x8xf32>, vector<8x8xf32> -> vector<8x8xf32>
    %cst_24 = arith.constant 0.353553385 : f32
    %51 = vector.broadcast %cst_24 : f32 to vector<8x8xf32>
    %52 = arith.mulf %50, %51 : vector<8x8xf32>
    %cst_25 = arith.constant -1.000000e+30 : f32
    %53 = vector.broadcast %cst_25 : f32 to vector<8x8xf32>
    %54 = arith.select %12, %52, %53 : vector<8x8xi1>, vector<8x8xf32>
    %cst_26 = arith.constant dense<0xFF800000> : vector<8xf32>
    %55 = vector.multi_reduction <maximumf>, %54, %cst_26 [1] : vector<8x8xf32> to vector<8xf32>
    %56 = vector.shape_cast %55 : vector<8xf32> to vector<8x1xf32>
    %57 = vector.broadcast %56 : vector<8x1xf32> to vector<8x8xf32>
    %58 = arith.subf %54, %57 : vector<8x8xf32>
    %59 = math.exp %58 : vector<8x8xf32>
    %cst_27 = arith.constant dense<0.000000e+00> : vector<8xf32>
    %60 = vector.multi_reduction <add>, %59, %cst_27 [1] : vector<8x8xf32> to vector<8xf32>
    %61 = vector.shape_cast %60 : vector<8xf32> to vector<8x1xf32>
    %62 = vector.broadcast %61 : vector<8x1xf32> to vector<8x8xf32>
    %63 = arith.divf %59, %62 : vector<8x8xf32>
    %cst_28 = arith.constant dense<0.000000e+00> : vector<8x8xf32>
    %64 = tpu.matmul %63, %48, %cst_28 {dimension_numbers = #tpu.dot_dimension_numbers<[1], [0], [0], [1], [0, 0, 1, 1], [], []>} : vector<8x8xf32>, vector<8x8xf32>, vector<8x8xf32> -> vector<8x8xf32>
    %65 = vector.extract_strided_slice %45 {offsets = [0, 8], sizes = [8, 8], strides = [1, 1]} : vector<8x96xf32> to vector<8x8xf32>
    %66 = vector.extract_strided_slice %45 {offsets = [0, 40], sizes = [8, 8], strides = [1, 1]} : vector<8x96xf32> to vector<8x8xf32>
    %67 = vector.extract_strided_slice %45 {offsets = [0, 72], sizes = [8, 8], strides = [1, 1]} : vector<8x96xf32> to vector<8x8xf32>
    %68 = tpu.transpose %66, [1, 0] : vector<8x8xf32> -> vector<8x8xf32>
    %cst_29 = arith.constant dense<0.000000e+00> : vector<8x8xf32>
    %69 = tpu.matmul %65, %68, %cst_29 {dimension_numbers = #tpu.dot_dimension_numbers<[1], [0], [0], [1], [0, 0, 1, 1], [], []>} : vector<8x8xf32>, vector<8x8xf32>, vector<8x8xf32> -> vector<8x8xf32>
    %cst_30 = arith.constant 0.353553385 : f32
    %70 = vector.broadcast %cst_30 : f32 to vector<8x8xf32>
    %71 = arith.mulf %69, %70 : vector<8x8xf32>
    %cst_31 = arith.constant -1.000000e+30 : f32
    %72 = vector.broadcast %cst_31 : f32 to vector<8x8xf32>
    %73 = arith.select %12, %71, %72 : vector<8x8xi1>, vector<8x8xf32>
    %cst_32 = arith.constant dense<0xFF800000> : vector<8xf32>
    %74 = vector.multi_reduction <maximumf>, %73, %cst_32 [1] : vector<8x8xf32> to vector<8xf32>
    %75 = vector.shape_cast %74 : vector<8xf32> to vector<8x1xf32>
    %76 = vector.broadcast %75 : vector<8x1xf32> to vector<8x8xf32>
    %77 = arith.subf %73, %76 : vector<8x8xf32>
    %78 = math.exp %77 : vector<8x8xf32>
    %cst_33 = arith.constant dense<0.000000e+00> : vector<8xf32>
    %79 = vector.multi_reduction <add>, %78, %cst_33 [1] : vector<8x8xf32> to vector<8xf32>
    %80 = vector.shape_cast %79 : vector<8xf32> to vector<8x1xf32>
    %81 = vector.broadcast %80 : vector<8x1xf32> to vector<8x8xf32>
    %82 = arith.divf %78, %81 : vector<8x8xf32>
    %cst_34 = arith.constant dense<0.000000e+00> : vector<8x8xf32>
    %83 = tpu.matmul %82, %67, %cst_34 {dimension_numbers = #tpu.dot_dimension_numbers<[1], [0], [0], [1], [0, 0, 1, 1], [], []>} : vector<8x8xf32>, vector<8x8xf32>, vector<8x8xf32> -> vector<8x8xf32>
    %84 = vector.extract_strided_slice %45 {offsets = [0, 16], sizes = [8, 8], strides = [1, 1]} : vector<8x96xf32> to vector<8x8xf32>
    %85 = vector.extract_strided_slice %45 {offsets = [0, 48], sizes = [8, 8], strides = [1, 1]} : vector<8x96xf32> to vector<8x8xf32>
    %86 = vector.extract_strided_slice %45 {offsets = [0, 80], sizes = [8, 8], strides = [1, 1]} : vector<8x96xf32> to vector<8x8xf32>
    %87 = tpu.transpose %85, [1, 0] : vector<8x8xf32> -> vector<8x8xf32>
    %cst_35 = arith.constant dense<0.000000e+00> : vector<8x8xf32>
    %88 = tpu.matmul %84, %87, %cst_35 {dimension_numbers = #tpu.dot_dimension_numbers<[1], [0], [0], [1], [0, 0, 1, 1], [], []>} : vector<8x8xf32>, vector<8x8xf32>, vector<8x8xf32> -> vector<8x8xf32>
    %cst_36 = arith.constant 0.353553385 : f32
    %89 = vector.broadcast %cst_36 : f32 to vector<8x8xf32>
    %90 = arith.mulf %88, %89 : vector<8x8xf32>
    %cst_37 = arith.constant -1.000000e+30 : f32
    %91 = vector.broadcast %cst_37 : f32 to vector<8x8xf32>
    %92 = arith.select %12, %90, %91 : vector<8x8xi1>, vector<8x8xf32>
    %cst_38 = arith.constant dense<0xFF800000> : vector<8xf32>
    %93 = vector.multi_reduction <maximumf>, %92, %cst_38 [1] : vector<8x8xf32> to vector<8xf32>
    %94 = vector.shape_cast %93 : vector<8xf32> to vector<8x1xf32>
    %95 = vector.broadcast %94 : vector<8x1xf32> to vector<8x8xf32>
    %96 = arith.subf %92, %95 : vector<8x8xf32>
    %97 = math.exp %96 : vector<8x8xf32>
    %cst_39 = arith.constant dense<0.000000e+00> : vector<8xf32>
    %98 = vector.multi_reduction <add>, %97, %cst_39 [1] : vector<8x8xf32> to vector<8xf32>
    %99 = vector.shape_cast %98 : vector<8xf32> to vector<8x1xf32>
    %100 = vector.broadcast %99 : vector<8x1xf32> to vector<8x8xf32>
    %101 = arith.divf %97, %100 : vector<8x8xf32>
    %cst_40 = arith.constant dense<0.000000e+00> : vector<8x8xf32>
    %102 = tpu.matmul %101, %86, %cst_40 {dimension_numbers = #tpu.dot_dimension_numbers<[1], [0], [0], [1], [0, 0, 1, 1], [], []>} : vector<8x8xf32>, vector<8x8xf32>, vector<8x8xf32> -> vector<8x8xf32>
    %103 = vector.extract_strided_slice %45 {offsets = [0, 24], sizes = [8, 8], strides = [1, 1]} : vector<8x96xf32> to vector<8x8xf32>
    %104 = vector.extract_strided_slice %45 {offsets = [0, 56], sizes = [8, 8], strides = [1, 1]} : vector<8x96xf32> to vector<8x8xf32>
    %105 = vector.extract_strided_slice %45 {offsets = [0, 88], sizes = [8, 8], strides = [1, 1]} : vector<8x96xf32> to vector<8x8xf32>
    %106 = tpu.transpose %104, [1, 0] : vector<8x8xf32> -> vector<8x8xf32>
    %cst_41 = arith.constant dense<0.000000e+00> : vector<8x8xf32>
    %107 = tpu.matmul %103, %106, %cst_41 {dimension_numbers = #tpu.dot_dimension_numbers<[1], [0], [0], [1], [0, 0, 1, 1], [], []>} : vector<8x8xf32>, vector<8x8xf32>, vector<8x8xf32> -> vector<8x8xf32>
    %cst_42 = arith.constant 0.353553385 : f32
    %108 = vector.broadcast %cst_42 : f32 to vector<8x8xf32>
    %109 = arith.mulf %107, %108 : vector<8x8xf32>
    %cst_43 = arith.constant -1.000000e+30 : f32
    %110 = vector.broadcast %cst_43 : f32 to vector<8x8xf32>
    %111 = arith.select %12, %109, %110 : vector<8x8xi1>, vector<8x8xf32>
    %cst_44 = arith.constant dense<0xFF800000> : vector<8xf32>
    %112 = vector.multi_reduction <maximumf>, %111, %cst_44 [1] : vector<8x8xf32> to vector<8xf32>
    %113 = vector.shape_cast %112 : vector<8xf32> to vector<8x1xf32>
    %114 = vector.broadcast %113 : vector<8x1xf32> to vector<8x8xf32>
    %115 = arith.subf %111, %114 : vector<8x8xf32>
    %116 = math.exp %115 : vector<8x8xf32>
    %cst_45 = arith.constant dense<0.000000e+00> : vector<8xf32>
    %117 = vector.multi_reduction <add>, %116, %cst_45 [1] : vector<8x8xf32> to vector<8xf32>
    %118 = vector.shape_cast %117 : vector<8xf32> to vector<8x1xf32>
    %119 = vector.broadcast %118 : vector<8x1xf32> to vector<8x8xf32>
    %120 = arith.divf %116, %119 : vector<8x8xf32>
    %cst_46 = arith.constant dense<0.000000e+00> : vector<8x8xf32>
    %121 = tpu.matmul %120, %105, %cst_46 {dimension_numbers = #tpu.dot_dimension_numbers<[1], [0], [0], [1], [0, 0, 1, 1], [], []>} : vector<8x8xf32>, vector<8x8xf32>, vector<8x8xf32> -> vector<8x8xf32>
    %122 = tpu.concatenate %64, %83, %102, %121 in 1 : vector<8x8xf32>, vector<8x8xf32>, vector<8x8xf32>, vector<8x8xf32> -> vector<8x32xf32>
    %c0_47 = arith.constant 0 : index
    %c0_48 = arith.constant 0 : index
    %c0_49 = arith.constant 0 : index
    %123 = vector.load %arg8[%c0_47, %c0_48, %c0_49] : memref<2x32x32xf32, #tpu.memory_space<vmem>>, vector<1x32x32xf32>
    %124 = vector.shape_cast %123 : vector<1x32x32xf32> to vector<32x32xf32>
    %cst_50 = arith.constant dense<0.000000e+00> : vector<8x32xf32>
    %125 = tpu.matmul %122, %124, %cst_50 {dimension_numbers = #tpu.dot_dimension_numbers<[1], [0], [0], [1], [0, 0, 1, 1], [], []>} : vector<8x32xf32>, vector<32x32xf32>, vector<8x32xf32> -> vector<8x32xf32>
    %126 = arith.addf %9, %125 : vector<8x32xf32>
    %c0_51 = arith.constant 0 : index
    %c0_52 = arith.constant 0 : index
    %c0_53 = arith.constant 0 : index
    %127 = vector.load %arg9[%c0_51, %c0_52, %c0_53] : memref<2x1x32xf32, #tpu.memory_space<vmem>>, vector<1x1x32xf32>
    %128 = vector.shape_cast %127 : vector<1x1x32xf32> to vector<1x32xf32>
    %129 = vector.broadcast %128 : vector<1x32xf32> to vector<8x32xf32>
    %130 = arith.addf %126, %129 : vector<8x32xf32>
    %c0_54 = arith.constant 0 : index
    %c0_55 = arith.constant 0 : index
    %c0_56 = arith.constant 0 : index
    %131 = vector.load %arg10[%c0_54, %c0_55, %c0_56] : memref<2x1x32xf32, #tpu.memory_space<vmem>>, vector<1x1x32xf32>
    %132 = vector.shape_cast %131 : vector<1x1x32xf32> to vector<1x32xf32>
    %c0_57 = arith.constant 0 : index
    %c0_58 = arith.constant 0 : index
    %c0_59 = arith.constant 0 : index
    %133 = vector.load %arg11[%c0_57, %c0_58, %c0_59] : memref<2x1x32xf32, #tpu.memory_space<vmem>>, vector<1x1x32xf32>
    %134 = vector.shape_cast %133 : vector<1x1x32xf32> to vector<1x32xf32>
    %cst_60 = arith.constant dense<0.000000e+00> : vector<8xf32>
    %135 = vector.multi_reduction <add>, %130, %cst_60 [1] : vector<8x32xf32> to vector<8xf32>
    %136 = vector.shape_cast %135 : vector<8xf32> to vector<8x1xf32>
    %cst_61 = arith.constant 3.200000e+01 : f32
    %137 = vector.broadcast %cst_61 : f32 to vector<8x1xf32>
    %138 = arith.divf %136, %137 : vector<8x1xf32>
    %139 = vector.broadcast %138 : vector<8x1xf32> to vector<8x32xf32>
    %140 = arith.subf %130, %139 : vector<8x32xf32>
    %141 = arith.mulf %140, %140 : vector<8x32xf32>
    %cst_62 = arith.constant dense<0.000000e+00> : vector<8xf32>
    %142 = vector.multi_reduction <add>, %141, %cst_62 [1] : vector<8x32xf32> to vector<8xf32>
    %143 = vector.shape_cast %142 : vector<8xf32> to vector<8x1xf32>
    %cst_63 = arith.constant 3.200000e+01 : f32
    %144 = vector.broadcast %cst_63 : f32 to vector<8x1xf32>
    %145 = arith.divf %143, %144 : vector<8x1xf32>
    %146 = vector.broadcast %138 : vector<8x1xf32> to vector<8x32xf32>
    %147 = arith.subf %130, %146 : vector<8x32xf32>
    %cst_64 = arith.constant 9.99999974E-6 : f32
    %148 = vector.broadcast %cst_64 : f32 to vector<8x1xf32>
    %149 = arith.addf %145, %148 : vector<8x1xf32>
    %150 = math.rsqrt %149 : vector<8x1xf32>
    %151 = vector.broadcast %150 : vector<8x1xf32> to vector<8x32xf32>
    %152 = arith.mulf %147, %151 : vector<8x32xf32>
    %153 = vector.broadcast %132 : vector<1x32xf32> to vector<8x32xf32>
    %154 = arith.mulf %152, %153 : vector<8x32xf32>
    %155 = vector.broadcast %134 : vector<1x32xf32> to vector<8x32xf32>
    %156 = arith.addf %154, %155 : vector<8x32xf32>
    %c0_65 = arith.constant 0 : index
    %c0_66 = arith.constant 0 : index
    %c0_67 = arith.constant 0 : index
    %157 = vector.load %arg12[%c0_65, %c0_66, %c0_67] : memref<2x32x64xf32, #tpu.memory_space<vmem>>, vector<1x32x64xf32>
    %158 = vector.shape_cast %157 : vector<1x32x64xf32> to vector<32x64xf32>
    %cst_68 = arith.constant dense<0.000000e+00> : vector<8x64xf32>
    %159 = tpu.matmul %156, %158, %cst_68 {dimension_numbers = #tpu.dot_dimension_numbers<[1], [0], [0], [1], [0, 0, 1, 1], [], []>} : vector<8x32xf32>, vector<32x64xf32>, vector<8x64xf32> -> vector<8x64xf32>
    %c0_69 = arith.constant 0 : index
    %c0_70 = arith.constant 0 : index
    %c0_71 = arith.constant 0 : index
    %160 = vector.load %arg13[%c0_69, %c0_70, %c0_71] : memref<2x1x64xf32, #tpu.memory_space<vmem>>, vector<1x1x64xf32>
    %161 = vector.shape_cast %160 : vector<1x1x64xf32> to vector<1x64xf32>
    %162 = vector.broadcast %161 : vector<1x64xf32> to vector<8x64xf32>
    %163 = arith.addf %159, %162 : vector<8x64xf32>
    %164 = arith.mulf %163, %163 : vector<8x64xf32>
    %165 = arith.mulf %163, %164 : vector<8x64xf32>
    %cst_72 = arith.constant 4.471500e-02 : f32
    %166 = vector.broadcast %cst_72 : f32 to vector<8x64xf32>
    %167 = arith.mulf %166, %165 : vector<8x64xf32>
    %168 = arith.addf %163, %167 : vector<8x64xf32>
    %cst_73 = arith.constant 0.797884583 : f32
    %169 = vector.broadcast %cst_73 : f32 to vector<8x64xf32>
    %170 = arith.mulf %169, %168 : vector<8x64xf32>
    %171 = math.tanh %170 : vector<8x64xf32>
    %cst_74 = arith.constant 1.000000e+00 : f32
    %172 = vector.broadcast %cst_74 : f32 to vector<8x64xf32>
    %173 = arith.addf %172, %171 : vector<8x64xf32>
    %cst_75 = arith.constant 5.000000e-01 : f32
    %174 = vector.broadcast %cst_75 : f32 to vector<8x64xf32>
    %175 = arith.mulf %174, %173 : vector<8x64xf32>
    %176 = arith.mulf %163, %175 : vector<8x64xf32>
    %c0_76 = arith.constant 0 : index
    %c0_77 = arith.constant 0 : index
    %c0_78 = arith.constant 0 : index
    %177 = vector.load %arg14[%c0_76, %c0_77, %c0_78] : memref<2x64x32xf32, #tpu.memory_space<vmem>>, vector<1x64x32xf32>
    %178 = vector.shape_cast %177 : vector<1x64x32xf32> to vector<64x32xf32>
    %cst_79 = arith.constant dense<0.000000e+00> : vector<8x32xf32>
    %179 = tpu.matmul %176, %178, %cst_79 {dimension_numbers = #tpu.dot_dimension_numbers<[1], [0], [0], [1], [0, 0, 1, 1], [], []>} : vector<8x64xf32>, vector<64x32xf32>, vector<8x32xf32> -> vector<8x32xf32>
    %180 = arith.addf %130, %179 : vector<8x32xf32>
    %c0_80 = arith.constant 0 : index
    %c0_81 = arith.constant 0 : index
    %c0_82 = arith.constant 0 : index
    %181 = vector.load %arg15[%c0_80, %c0_81, %c0_82] : memref<2x1x32xf32, #tpu.memory_space<vmem>>, vector<1x1x32xf32>
    %182 = vector.shape_cast %181 : vector<1x1x32xf32> to vector<1x32xf32>
    %183 = vector.broadcast %182 : vector<1x32xf32> to vector<8x32xf32>
    %184 = arith.addf %180, %183 : vector<8x32xf32>
    %c1 = arith.constant 1 : index
    %c0_83 = arith.constant 0 : index
    %c0_84 = arith.constant 0 : index
    %185 = vector.load %arg4[%c1, %c0_83, %c0_84] : memref<2x1x32xf32, #tpu.memory_space<vmem>>, vector<1x1x32xf32>
    %186 = vector.shape_cast %185 : vector<1x1x32xf32> to vector<1x32xf32>
    %c1_85 = arith.constant 1 : index
    %c0_86 = arith.constant 0 : index
    %c0_87 = arith.constant 0 : index
    %187 = vector.load %arg5[%c1_85, %c0_86, %c0_87] : memref<2x1x32xf32, #tpu.memory_space<vmem>>, vector<1x1x32xf32>
    %188 = vector.shape_cast %187 : vector<1x1x32xf32> to vector<1x32xf32>
    %cst_88 = arith.constant dense<0.000000e+00> : vector<8xf32>
    %189 = vector.multi_reduction <add>, %184, %cst_88 [1] : vector<8x32xf32> to vector<8xf32>
    %190 = vector.shape_cast %189 : vector<8xf32> to vector<8x1xf32>
    %cst_89 = arith.constant 3.200000e+01 : f32
    %191 = vector.broadcast %cst_89 : f32 to vector<8x1xf32>
    %192 = arith.divf %190, %191 : vector<8x1xf32>
    %193 = vector.broadcast %192 : vector<8x1xf32> to vector<8x32xf32>
    %194 = arith.subf %184, %193 : vector<8x32xf32>
    %195 = arith.mulf %194, %194 : vector<8x32xf32>
    %cst_90 = arith.constant dense<0.000000e+00> : vector<8xf32>
    %196 = vector.multi_reduction <add>, %195, %cst_90 [1] : vector<8x32xf32> to vector<8xf32>
    %197 = vector.shape_cast %196 : vector<8xf32> to vector<8x1xf32>
    %cst_91 = arith.constant 3.200000e+01 : f32
    %198 = vector.broadcast %cst_91 : f32 to vector<8x1xf32>
    %199 = arith.divf %197, %198 : vector<8x1xf32>
    %200 = vector.broadcast %192 : vector<8x1xf32> to vector<8x32xf32>
    %201 = arith.subf %184, %200 : vector<8x32xf32>
    %cst_92 = arith.constant 9.99999974E-6 : f32
    %202 = vector.broadcast %cst_92 : f32 to vector<8x1xf32>
    %203 = arith.addf %199, %202 : vector<8x1xf32>
    %204 = math.rsqrt %203 : vector<8x1xf32>
    %205 = vector.broadcast %204 : vector<8x1xf32> to vector<8x32xf32>
    %206 = arith.mulf %201, %205 : vector<8x32xf32>
    %207 = vector.broadcast %186 : vector<1x32xf32> to vector<8x32xf32>
    %208 = arith.mulf %206, %207 : vector<8x32xf32>
    %209 = vector.broadcast %188 : vector<1x32xf32> to vector<8x32xf32>
    %210 = arith.addf %208, %209 : vector<8x32xf32>
    %c1_93 = arith.constant 1 : index
    %c0_94 = arith.constant 0 : index
    %c0_95 = arith.constant 0 : index
    %211 = vector.load %arg6[%c1_93, %c0_94, %c0_95] : memref<2x32x96xf32, #tpu.memory_space<vmem>>, vector<1x32x96xf32>
    %212 = vector.shape_cast %211 : vector<1x32x96xf32> to vector<32x96xf32>
    %cst_96 = arith.constant dense<0.000000e+00> : vector<8x96xf32>
    %213 = tpu.matmul %210, %212, %cst_96 {dimension_numbers = #tpu.dot_dimension_numbers<[1], [0], [0], [1], [0, 0, 1, 1], [], []>} : vector<8x32xf32>, vector<32x96xf32>, vector<8x96xf32> -> vector<8x96xf32>
    %c1_97 = arith.constant 1 : index
    %c0_98 = arith.constant 0 : index
    %c0_99 = arith.constant 0 : index
    %214 = vector.load %arg7[%c1_97, %c0_98, %c0_99] : memref<2x1x96xf32, #tpu.memory_space<vmem>>, vector<1x1x96xf32>
    %215 = vector.shape_cast %214 : vector<1x1x96xf32> to vector<1x96xf32>
    %216 = vector.broadcast %215 : vector<1x96xf32> to vector<8x96xf32>
    %217 = arith.addf %213, %216 : vector<8x96xf32>
    %218 = vector.extract_strided_slice %217 {offsets = [0, 0], sizes = [8, 8], strides = [1, 1]} : vector<8x96xf32> to vector<8x8xf32>
    %219 = vector.extract_strided_slice %217 {offsets = [0, 32], sizes = [8, 8], strides = [1, 1]} : vector<8x96xf32> to vector<8x8xf32>
    %220 = vector.extract_strided_slice %217 {offsets = [0, 64], sizes = [8, 8], strides = [1, 1]} : vector<8x96xf32> to vector<8x8xf32>
    %221 = tpu.transpose %219, [1, 0] : vector<8x8xf32> -> vector<8x8xf32>
    %cst_100 = arith.constant dense<0.000000e+00> : vector<8x8xf32>
    %222 = tpu.matmul %218, %221, %cst_100 {dimension_numbers = #tpu.dot_dimension_numbers<[1], [0], [0], [1], [0, 0, 1, 1], [], []>} : vector<8x8xf32>, vector<8x8xf32>, vector<8x8xf32> -> vector<8x8xf32>
    %cst_101 = arith.constant 0.353553385 : f32
    %223 = vector.broadcast %cst_101 : f32 to vector<8x8xf32>
    %224 = arith.mulf %222, %223 : vector<8x8xf32>
    %cst_102 = arith.constant -1.000000e+30 : f32
    %225 = vector.broadcast %cst_102 : f32 to vector<8x8xf32>
    %226 = arith.select %12, %224, %225 : vector<8x8xi1>, vector<8x8xf32>
    %cst_103 = arith.constant dense<0xFF800000> : vector<8xf32>
    %227 = vector.multi_reduction <maximumf>, %226, %cst_103 [1] : vector<8x8xf32> to vector<8xf32>
    %228 = vector.shape_cast %227 : vector<8xf32> to vector<8x1xf32>
    %229 = vector.broadcast %228 : vector<8x1xf32> to vector<8x8xf32>
    %230 = arith.subf %226, %229 : vector<8x8xf32>
    %231 = math.exp %230 : vector<8x8xf32>
    %cst_104 = arith.constant dense<0.000000e+00> : vector<8xf32>
    %232 = vector.multi_reduction <add>, %231, %cst_104 [1] : vector<8x8xf32> to vector<8xf32>
    %233 = vector.shape_cast %232 : vector<8xf32> to vector<8x1xf32>
    %234 = vector.broadcast %233 : vector<8x1xf32> to vector<8x8xf32>
    %235 = arith.divf %231, %234 : vector<8x8xf32>
    %cst_105 = arith.constant dense<0.000000e+00> : vector<8x8xf32>
    %236 = tpu.matmul %235, %220, %cst_105 {dimension_numbers = #tpu.dot_dimension_numbers<[1], [0], [0], [1], [0, 0, 1, 1], [], []>} : vector<8x8xf32>, vector<8x8xf32>, vector<8x8xf32> -> vector<8x8xf32>
    %237 = vector.extract_strided_slice %217 {offsets = [0, 8], sizes = [8, 8], strides = [1, 1]} : vector<8x96xf32> to vector<8x8xf32>
    %238 = vector.extract_strided_slice %217 {offsets = [0, 40], sizes = [8, 8], strides = [1, 1]} : vector<8x96xf32> to vector<8x8xf32>
    %239 = vector.extract_strided_slice %217 {offsets = [0, 72], sizes = [8, 8], strides = [1, 1]} : vector<8x96xf32> to vector<8x8xf32>
    %240 = tpu.transpose %238, [1, 0] : vector<8x8xf32> -> vector<8x8xf32>
    %cst_106 = arith.constant dense<0.000000e+00> : vector<8x8xf32>
    %241 = tpu.matmul %237, %240, %cst_106 {dimension_numbers = #tpu.dot_dimension_numbers<[1], [0], [0], [1], [0, 0, 1, 1], [], []>} : vector<8x8xf32>, vector<8x8xf32>, vector<8x8xf32> -> vector<8x8xf32>
    %cst_107 = arith.constant 0.353553385 : f32
    %242 = vector.broadcast %cst_107 : f32 to vector<8x8xf32>
    %243 = arith.mulf %241, %242 : vector<8x8xf32>
    %cst_108 = arith.constant -1.000000e+30 : f32
    %244 = vector.broadcast %cst_108 : f32 to vector<8x8xf32>
    %245 = arith.select %12, %243, %244 : vector<8x8xi1>, vector<8x8xf32>
    %cst_109 = arith.constant dense<0xFF800000> : vector<8xf32>
    %246 = vector.multi_reduction <maximumf>, %245, %cst_109 [1] : vector<8x8xf32> to vector<8xf32>
    %247 = vector.shape_cast %246 : vector<8xf32> to vector<8x1xf32>
    %248 = vector.broadcast %247 : vector<8x1xf32> to vector<8x8xf32>
    %249 = arith.subf %245, %248 : vector<8x8xf32>
    %250 = math.exp %249 : vector<8x8xf32>
    %cst_110 = arith.constant dense<0.000000e+00> : vector<8xf32>
    %251 = vector.multi_reduction <add>, %250, %cst_110 [1] : vector<8x8xf32> to vector<8xf32>
    %252 = vector.shape_cast %251 : vector<8xf32> to vector<8x1xf32>
    %253 = vector.broadcast %252 : vector<8x1xf32> to vector<8x8xf32>
    %254 = arith.divf %250, %253 : vector<8x8xf32>
    %cst_111 = arith.constant dense<0.000000e+00> : vector<8x8xf32>
    %255 = tpu.matmul %254, %239, %cst_111 {dimension_numbers = #tpu.dot_dimension_numbers<[1], [0], [0], [1], [0, 0, 1, 1], [], []>} : vector<8x8xf32>, vector<8x8xf32>, vector<8x8xf32> -> vector<8x8xf32>
    %256 = vector.extract_strided_slice %217 {offsets = [0, 16], sizes = [8, 8], strides = [1, 1]} : vector<8x96xf32> to vector<8x8xf32>
    %257 = vector.extract_strided_slice %217 {offsets = [0, 48], sizes = [8, 8], strides = [1, 1]} : vector<8x96xf32> to vector<8x8xf32>
    %258 = vector.extract_strided_slice %217 {offsets = [0, 80], sizes = [8, 8], strides = [1, 1]} : vector<8x96xf32> to vector<8x8xf32>
    %259 = tpu.transpose %257, [1, 0] : vector<8x8xf32> -> vector<8x8xf32>
    %cst_112 = arith.constant dense<0.000000e+00> : vector<8x8xf32>
    %260 = tpu.matmul %256, %259, %cst_112 {dimension_numbers = #tpu.dot_dimension_numbers<[1], [0], [0], [1], [0, 0, 1, 1], [], []>} : vector<8x8xf32>, vector<8x8xf32>, vector<8x8xf32> -> vector<8x8xf32>
    %cst_113 = arith.constant 0.353553385 : f32
    %261 = vector.broadcast %cst_113 : f32 to vector<8x8xf32>
    %262 = arith.mulf %260, %261 : vector<8x8xf32>
    %cst_114 = arith.constant -1.000000e+30 : f32
    %263 = vector.broadcast %cst_114 : f32 to vector<8x8xf32>
    %264 = arith.select %12, %262, %263 : vector<8x8xi1>, vector<8x8xf32>
    %cst_115 = arith.constant dense<0xFF800000> : vector<8xf32>
    %265 = vector.multi_reduction <maximumf>, %264, %cst_115 [1] : vector<8x8xf32> to vector<8xf32>
    %266 = vector.shape_cast %265 : vector<8xf32> to vector<8x1xf32>
    %267 = vector.broadcast %266 : vector<8x1xf32> to vector<8x8xf32>
    %268 = arith.subf %264, %267 : vector<8x8xf32>
    %269 = math.exp %268 : vector<8x8xf32>
    %cst_116 = arith.constant dense<0.000000e+00> : vector<8xf32>
    %270 = vector.multi_reduction <add>, %269, %cst_116 [1] : vector<8x8xf32> to vector<8xf32>
    %271 = vector.shape_cast %270 : vector<8xf32> to vector<8x1xf32>
    %272 = vector.broadcast %271 : vector<8x1xf32> to vector<8x8xf32>
    %273 = arith.divf %269, %272 : vector<8x8xf32>
    %cst_117 = arith.constant dense<0.000000e+00> : vector<8x8xf32>
    %274 = tpu.matmul %273, %258, %cst_117 {dimension_numbers = #tpu.dot_dimension_numbers<[1], [0], [0], [1], [0, 0, 1, 1], [], []>} : vector<8x8xf32>, vector<8x8xf32>, vector<8x8xf32> -> vector<8x8xf32>
    %275 = vector.extract_strided_slice %217 {offsets = [0, 24], sizes = [8, 8], strides = [1, 1]} : vector<8x96xf32> to vector<8x8xf32>
    %276 = vector.extract_strided_slice %217 {offsets = [0, 56], sizes = [8, 8], strides = [1, 1]} : vector<8x96xf32> to vector<8x8xf32>
    %277 = vector.extract_strided_slice %217 {offsets = [0, 88], sizes = [8, 8], strides = [1, 1]} : vector<8x96xf32> to vector<8x8xf32>
    %278 = tpu.transpose %276, [1, 0] : vector<8x8xf32> -> vector<8x8xf32>
    %cst_118 = arith.constant dense<0.000000e+00> : vector<8x8xf32>
    %279 = tpu.matmul %275, %278, %cst_118 {dimension_numbers = #tpu.dot_dimension_numbers<[1], [0], [0], [1], [0, 0, 1, 1], [], []>} : vector<8x8xf32>, vector<8x8xf32>, vector<8x8xf32> -> vector<8x8xf32>
    %cst_119 = arith.constant 0.353553385 : f32
    %280 = vector.broadcast %cst_119 : f32 to vector<8x8xf32>
    %281 = arith.mulf %279, %280 : vector<8x8xf32>
    %cst_120 = arith.constant -1.000000e+30 : f32
    %282 = vector.broadcast %cst_120 : f32 to vector<8x8xf32>
    %283 = arith.select %12, %281, %282 : vector<8x8xi1>, vector<8x8xf32>
    %cst_121 = arith.constant dense<0xFF800000> : vector<8xf32>
    %284 = vector.multi_reduction <maximumf>, %283, %cst_121 [1] : vector<8x8xf32> to vector<8xf32>
    %285 = vector.shape_cast %284 : vector<8xf32> to vector<8x1xf32>
    %286 = vector.broadcast %285 : vector<8x1xf32> to vector<8x8xf32>
    %287 = arith.subf %283, %286 : vector<8x8xf32>
    %288 = math.exp %287 : vector<8x8xf32>
    %cst_122 = arith.constant dense<0.000000e+00> : vector<8xf32>
    %289 = vector.multi_reduction <add>, %288, %cst_122 [1] : vector<8x8xf32> to vector<8xf32>
    %290 = vector.shape_cast %289 : vector<8xf32> to vector<8x1xf32>
    %291 = vector.broadcast %290 : vector<8x1xf32> to vector<8x8xf32>
    %292 = arith.divf %288, %291 : vector<8x8xf32>
    %cst_123 = arith.constant dense<0.000000e+00> : vector<8x8xf32>
    %293 = tpu.matmul %292, %277, %cst_123 {dimension_numbers = #tpu.dot_dimension_numbers<[1], [0], [0], [1], [0, 0, 1, 1], [], []>} : vector<8x8xf32>, vector<8x8xf32>, vector<8x8xf32> -> vector<8x8xf32>
    %294 = tpu.concatenate %236, %255, %274, %293 in 1 : vector<8x8xf32>, vector<8x8xf32>, vector<8x8xf32>, vector<8x8xf32> -> vector<8x32xf32>
    %c1_124 = arith.constant 1 : index
    %c0_125 = arith.constant 0 : index
    %c0_126 = arith.constant 0 : index
    %295 = vector.load %arg8[%c1_124, %c0_125, %c0_126] : memref<2x32x32xf32, #tpu.memory_space<vmem>>, vector<1x32x32xf32>
    %296 = vector.shape_cast %295 : vector<1x32x32xf32> to vector<32x32xf32>
    %cst_127 = arith.constant dense<0.000000e+00> : vector<8x32xf32>
    %297 = tpu.matmul %294, %296, %cst_127 {dimension_numbers = #tpu.dot_dimension_numbers<[1], [0], [0], [1], [0, 0, 1, 1], [], []>} : vector<8x32xf32>, vector<32x32xf32>, vector<8x32xf32> -> vector<8x32xf32>
    %298 = arith.addf %184, %297 : vector<8x32xf32>
    %c1_128 = arith.constant 1 : index
    %c0_129 = arith.constant 0 : index
    %c0_130 = arith.constant 0 : index
    %299 = vector.load %arg9[%c1_128, %c0_129, %c0_130] : memref<2x1x32xf32, #tpu.memory_space<vmem>>, vector<1x1x32xf32>
    %300 = vector.shape_cast %299 : vector<1x1x32xf32> to vector<1x32xf32>
    %301 = vector.broadcast %300 : vector<1x32xf32> to vector<8x32xf32>
    %302 = arith.addf %298, %301 : vector<8x32xf32>
    %c1_131 = arith.constant 1 : index
    %c0_132 = arith.constant 0 : index
    %c0_133 = arith.constant 0 : index
    %303 = vector.load %arg10[%c1_131, %c0_132, %c0_133] : memref<2x1x32xf32, #tpu.memory_space<vmem>>, vector<1x1x32xf32>
    %304 = vector.shape_cast %303 : vector<1x1x32xf32> to vector<1x32xf32>
    %c1_134 = arith.constant 1 : index
    %c0_135 = arith.constant 0 : index
    %c0_136 = arith.constant 0 : index
    %305 = vector.load %arg11[%c1_134, %c0_135, %c0_136] : memref<2x1x32xf32, #tpu.memory_space<vmem>>, vector<1x1x32xf32>
    %306 = vector.shape_cast %305 : vector<1x1x32xf32> to vector<1x32xf32>
    %cst_137 = arith.constant dense<0.000000e+00> : vector<8xf32>
    %307 = vector.multi_reduction <add>, %302, %cst_137 [1] : vector<8x32xf32> to vector<8xf32>
    %308 = vector.shape_cast %307 : vector<8xf32> to vector<8x1xf32>
    %cst_138 = arith.constant 3.200000e+01 : f32
    %309 = vector.broadcast %cst_138 : f32 to vector<8x1xf32>
    %310 = arith.divf %308, %309 : vector<8x1xf32>
    %311 = vector.broadcast %310 : vector<8x1xf32> to vector<8x32xf32>
    %312 = arith.subf %302, %311 : vector<8x32xf32>
    %313 = arith.mulf %312, %312 : vector<8x32xf32>
    %cst_139 = arith.constant dense<0.000000e+00> : vector<8xf32>
    %314 = vector.multi_reduction <add>, %313, %cst_139 [1] : vector<8x32xf32> to vector<8xf32>
    %315 = vector.shape_cast %314 : vector<8xf32> to vector<8x1xf32>
    %cst_140 = arith.constant 3.200000e+01 : f32
    %316 = vector.broadcast %cst_140 : f32 to vector<8x1xf32>
    %317 = arith.divf %315, %316 : vector<8x1xf32>
    %318 = vector.broadcast %310 : vector<8x1xf32> to vector<8x32xf32>
    %319 = arith.subf %302, %318 : vector<8x32xf32>
    %cst_141 = arith.constant 9.99999974E-6 : f32
    %320 = vector.broadcast %cst_141 : f32 to vector<8x1xf32>
    %321 = arith.addf %317, %320 : vector<8x1xf32>
    %322 = math.rsqrt %321 : vector<8x1xf32>
    %323 = vector.broadcast %322 : vector<8x1xf32> to vector<8x32xf32>
    %324 = arith.mulf %319, %323 : vector<8x32xf32>
    %325 = vector.broadcast %304 : vector<1x32xf32> to vector<8x32xf32>
    %326 = arith.mulf %324, %325 : vector<8x32xf32>
    %327 = vector.broadcast %306 : vector<1x32xf32> to vector<8x32xf32>
    %328 = arith.addf %326, %327 : vector<8x32xf32>
    %c1_142 = arith.constant 1 : index
    %c0_143 = arith.constant 0 : index
    %c0_144 = arith.constant 0 : index
    %329 = vector.load %arg12[%c1_142, %c0_143, %c0_144] : memref<2x32x64xf32, #tpu.memory_space<vmem>>, vector<1x32x64xf32>
    %330 = vector.shape_cast %329 : vector<1x32x64xf32> to vector<32x64xf32>
    %cst_145 = arith.constant dense<0.000000e+00> : vector<8x64xf32>
    %331 = tpu.matmul %328, %330, %cst_145 {dimension_numbers = #tpu.dot_dimension_numbers<[1], [0], [0], [1], [0, 0, 1, 1], [], []>} : vector<8x32xf32>, vector<32x64xf32>, vector<8x64xf32> -> vector<8x64xf32>
    %c1_146 = arith.constant 1 : index
    %c0_147 = arith.constant 0 : index
    %c0_148 = arith.constant 0 : index
    %332 = vector.load %arg13[%c1_146, %c0_147, %c0_148] : memref<2x1x64xf32, #tpu.memory_space<vmem>>, vector<1x1x64xf32>
    %333 = vector.shape_cast %332 : vector<1x1x64xf32> to vector<1x64xf32>
    %334 = vector.broadcast %333 : vector<1x64xf32> to vector<8x64xf32>
    %335 = arith.addf %331, %334 : vector<8x64xf32>
    %336 = arith.mulf %335, %335 : vector<8x64xf32>
    %337 = arith.mulf %335, %336 : vector<8x64xf32>
    %cst_149 = arith.constant 4.471500e-02 : f32
    %338 = vector.broadcast %cst_149 : f32 to vector<8x64xf32>
    %339 = arith.mulf %338, %337 : vector<8x64xf32>
    %340 = arith.addf %335, %339 : vector<8x64xf32>
    %cst_150 = arith.constant 0.797884583 : f32
    %341 = vector.broadcast %cst_150 : f32 to vector<8x64xf32>
    %342 = arith.mulf %341, %340 : vector<8x64xf32>
    %343 = math.tanh %342 : vector<8x64xf32>
    %cst_151 = arith.constant 1.000000e+00 : f32
    %344 = vector.broadcast %cst_151 : f32 to vector<8x64xf32>
    %345 = arith.addf %344, %343 : vector<8x64xf32>
    %cst_152 = arith.constant 5.000000e-01 : f32
    %346 = vector.broadcast %cst_152 : f32 to vector<8x64xf32>
    %347 = arith.mulf %346, %345 : vector<8x64xf32>
    %348 = arith.mulf %335, %347 : vector<8x64xf32>
    %c1_153 = arith.constant 1 : index
    %c0_154 = arith.constant 0 : index
    %c0_155 = arith.constant 0 : index
    %349 = vector.load %arg14[%c1_153, %c0_154, %c0_155] : memref<2x64x32xf32, #tpu.memory_space<vmem>>, vector<1x64x32xf32>
    %350 = vector.shape_cast %349 : vector<1x64x32xf32> to vector<64x32xf32>
    %cst_156 = arith.constant dense<0.000000e+00> : vector<8x32xf32>
    %351 = tpu.matmul %348, %350, %cst_156 {dimension_numbers = #tpu.dot_dimension_numbers<[1], [0], [0], [1], [0, 0, 1, 1], [], []>} : vector<8x64xf32>, vector<64x32xf32>, vector<8x32xf32> -> vector<8x32xf32>
    %352 = arith.addf %302, %351 : vector<8x32xf32>
    %c1_157 = arith.constant 1 : index
    %c0_158 = arith.constant 0 : index
    %c0_159 = arith.constant 0 : index
    %353 = vector.load %arg15[%c1_157, %c0_158, %c0_159] : memref<2x1x32xf32, #tpu.memory_space<vmem>>, vector<1x1x32xf32>
    %354 = vector.shape_cast %353 : vector<1x1x32xf32> to vector<1x32xf32>
    %355 = vector.broadcast %354 : vector<1x32xf32> to vector<8x32xf32>
    %356 = arith.addf %352, %355 : vector<8x32xf32>
    %c0_160 = arith.constant 0 : index
    %c0_161 = arith.constant 0 : index
    %357 = vector.load %arg16[%c0_160, %c0_161] : memref<1x32xf32, #tpu.memory_space<vmem>>, vector<1x32xf32>
    %c0_162 = arith.constant 0 : index
    %c0_163 = arith.constant 0 : index
    %358 = vector.load %arg17[%c0_162, %c0_163] : memref<1x32xf32, #tpu.memory_space<vmem>>, vector<1x32xf32>
    %cst_164 = arith.constant dense<0.000000e+00> : vector<8xf32>
    %359 = vector.multi_reduction <add>, %356, %cst_164 [1] : vector<8x32xf32> to vector<8xf32>
    %360 = vector.shape_cast %359 : vector<8xf32> to vector<8x1xf32>
    %cst_165 = arith.constant 3.200000e+01 : f32
    %361 = vector.broadcast %cst_165 : f32 to vector<8x1xf32>
    %362 = arith.divf %360, %361 : vector<8x1xf32>
    %363 = vector.broadcast %362 : vector<8x1xf32> to vector<8x32xf32>
    %364 = arith.subf %356, %363 : vector<8x32xf32>
    %365 = arith.mulf %364, %364 : vector<8x32xf32>
    %cst_166 = arith.constant dense<0.000000e+00> : vector<8xf32>
    %366 = vector.multi_reduction <add>, %365, %cst_166 [1] : vector<8x32xf32> to vector<8xf32>
    %367 = vector.shape_cast %366 : vector<8xf32> to vector<8x1xf32>
    %cst_167 = arith.constant 3.200000e+01 : f32
    %368 = vector.broadcast %cst_167 : f32 to vector<8x1xf32>
    %369 = arith.divf %367, %368 : vector<8x1xf32>
    %370 = vector.broadcast %362 : vector<8x1xf32> to vector<8x32xf32>
    %371 = arith.subf %356, %370 : vector<8x32xf32>
    %cst_168 = arith.constant 9.99999974E-6 : f32
    %372 = vector.broadcast %cst_168 : f32 to vector<8x1xf32>
    %373 = arith.addf %369, %372 : vector<8x1xf32>
    %374 = math.rsqrt %373 : vector<8x1xf32>
    %375 = vector.broadcast %374 : vector<8x1xf32> to vector<8x32xf32>
    %376 = arith.mulf %371, %375 : vector<8x32xf32>
    %377 = vector.broadcast %357 : vector<1x32xf32> to vector<8x32xf32>
    %378 = arith.mulf %376, %377 : vector<8x32xf32>
    %379 = vector.broadcast %358 : vector<1x32xf32> to vector<8x32xf32>
    %380 = arith.addf %378, %379 : vector<8x32xf32>
    %c0_169 = arith.constant 0 : index
    %c0_170 = arith.constant 0 : index
    %381 = vector.load %arg18[%c0_169, %c0_170] : memref<32x128xf32, #tpu.memory_space<vmem>>, vector<32x128xf32>
    %cst_171 = arith.constant dense<0.000000e+00> : vector<8x128xf32>
    %382 = tpu.matmul %380, %381, %cst_171 {dimension_numbers = #tpu.dot_dimension_numbers<[1], [0], [0], [1], [0, 0, 1, 1], [], []>} : vector<8x32xf32>, vector<32x128xf32>, vector<8x128xf32> -> vector<8x128xf32>
    %c0_172 = arith.constant 0 : index
    %c0_173 = arith.constant 0 : index
    %383 = vector.load %arg19[%c0_172, %c0_173] : memref<1x128xf32, #tpu.memory_space<vmem>>, vector<1x128xf32>
    %384 = vector.broadcast %383 : vector<1x128xf32> to vector<8x128xf32>
    %385 = arith.addf %382, %384 : vector<8x128xf32>
    %c0_174 = arith.constant 0 : index
    %c0_175 = arith.constant 0 : index
    %386 = vector.load %arg20[%c0_174, %c0_175] : memref<8x128xf32, #tpu.memory_space<vmem>>, vector<8x128xf32>
    tpu.vector_store %arg20[%c0_174, %c0_175], %385 {strides = array<i32>} : memref<8x128xf32, #tpu.memory_space<vmem>>, vector<8x128xf32>,
    return
  }
  func.func @transform_0(%arg0: i32) -> (i32, i32) {
    %c0_i32 = arith.constant 0 : i32
    %c0_i32_0 = arith.constant 0 : i32
    return %arg0, %c0_i32 : i32, i32
  }
  func.func @transform_1(%arg0: i32) -> (i32, i32) {
    %c0_i32 = arith.constant 0 : i32
    %c0_i32_0 = arith.constant 0 : i32
    %c0_i32_1 = arith.constant 0 : i32
    return %c0_i32, %c0_i32_0 : i32, i32
  }
  func.func @transform_2(%arg0: i32) -> (i32, i32) {
    %c0_i32 = arith.constant 0 : i32
    %c0_i32_0 = arith.constant 0 : i32
    %c0_i32_1 = arith.constant 0 : i32
    return %c0_i32, %c0_i32_0 : i32, i32
  }
  func.func @transform_3(%arg0: i32) -> (i32, i32, i32) {
    %c0_i32 = arith.constant 0 : i32
    %c0_i32_0 = arith.constant 0 : i32
    %c0_i32_1 = arith.constant 0 : i32
    %c0_i32_2 = arith.constant 0 : i32
    return %c0_i32, %c0_i32_0, %c0_i32_1 : i32, i32, i32
  }
  func.func @transform_4(%arg0: i32) -> (i32, i32, i32) {
    %c0_i32 = arith.constant 0 : i32
    %c0_i32_0 = arith.constant 0 : i32
    %c0_i32_1 = arith.constant 0 : i32
    %c0_i32_2 = arith.constant 0 : i32
    return %c0_i32, %c0_i32_0, %c0_i32_1 : i32, i32, i32
  }
  func.func @transform_5(%arg0: i32) -> (i32, i32, i32) {
    %c0_i32 = arith.constant 0 : i32
    %c0_i32_0 = arith.constant 0 : i32
    %c0_i32_1 = arith.constant 0 : i32
    %c0_i32_2 = arith.constant 0 : i32
    return %c0_i32, %c0_i32_0, %c0_i32_1 : i32, i32, i32
  }
  func.func @transform_6(%arg0: i32) -> (i32, i32, i32) {
    %c0_i32 = arith.constant 0 : i32
    %c0_i32_0 = arith.constant 0 : i32
    %c0_i32_1 = arith.constant 0 : i32
    %c0_i32_2 = arith.constant 0 : i32
    return %c0_i32, %c0_i32_0, %c0_i32_1 : i32, i32, i32
  }
  func.func @transform_7(%arg0: i32) -> (i32, i32, i32) {
    %c0_i32 = arith.constant 0 : i32
    %c0_i32_0 = arith.constant 0 : i32
    %c0_i32_1 = arith.constant 0 : i32
    %c0_i32_2 = arith.constant 0 : i32
    return %c0_i32, %c0_i32_0, %c0_i32_1 : i32, i32, i32
  }
  func.func @transform_8(%arg0: i32) -> (i32, i32, i32) {
    %c0_i32 = arith.constant 0 : i32
    %c0_i32_0 = arith.constant 0 : i32
    %c0_i32_1 = arith.constant 0 : i32
    %c0_i32_2 = arith.constant 0 : i32
    return %c0_i32, %c0_i32_0, %c0_i32_1 : i32, i32, i32
  }
  func.func @transform_9(%arg0: i32) -> (i32, i32, i32) {
    %c0_i32 = arith.constant 0 : i32
    %c0_i32_0 = arith.constant 0 : i32
    %c0_i32_1 = arith.constant 0 : i32
    %c0_i32_2 = arith.constant 0 : i32
    return %c0_i32, %c0_i32_0, %c0_i32_1 : i32, i32, i32
  }
  func.func @transform_10(%arg0: i32) -> (i32, i32, i32) {
    %c0_i32 = arith.constant 0 : i32
    %c0_i32_0 = arith.constant 0 : i32
    %c0_i32_1 = arith.constant 0 : i32
    %c0_i32_2 = arith.constant 0 : i32
    return %c0_i32, %c0_i32_0, %c0_i32_1 : i32, i32, i32
  }
  func.func @transform_11(%arg0: i32) -> (i32, i32, i32) {
    %c0_i32 = arith.constant 0 : i32
    %c0_i32_0 = arith.constant 0 : i32
    %c0_i32_1 = arith.constant 0 : i32
    %c0_i32_2 = arith.constant 0 : i32
    return %c0_i32, %c0_i32_0, %c0_i32_1 : i32, i32, i32
  }
  func.func @transform_12(%arg0: i32) -> (i32, i32, i32) {
    %c0_i32 = arith.constant 0 : i32
    %c0_i32_0 = arith.constant 0 : i32
    %c0_i32_1 = arith.constant 0 : i32
    %c0_i32_2 = arith.constant 0 : i32
    return %c0_i32, %c0_i32_0, %c0_i32_1 : i32, i32, i32
  }
  func.func @transform_13(%arg0: i32) -> (i32, i32, i32) {
    %c0_i32 = arith.constant 0 : i32
    %c0_i32_0 = arith.constant 0 : i32
    %c0_i32_1 = arith.constant 0 : i32
    %c0_i32_2 = arith.constant 0 : i32
    return %c0_i32, %c0_i32_0, %c0_i32_1 : i32, i32, i32
  }
  func.func @transform_14(%arg0: i32) -> (i32, i32, i32) {
    %c0_i32 = arith.constant 0 : i32
    %c0_i32_0 = arith.constant 0 : i32
    %c0_i32_1 = arith.constant 0 : i32
    %c0_i32_2 = arith.constant 0 : i32
    return %c0_i32, %c0_i32_0, %c0_i32_1 : i32, i32, i32
  }
  func.func @transform_15(%arg0: i32) -> (i32, i32) {
    %c0_i32 = arith.constant 0 : i32
    %c0_i32_0 = arith.constant 0 : i32
    %c0_i32_1 = arith.constant 0 : i32
    return %c0_i32, %c0_i32_0 : i32, i32
  }
  func.func @transform_16(%arg0: i32) -> (i32, i32) {
    %c0_i32 = arith.constant 0 : i32
    %c0_i32_0 = arith.constant 0 : i32
    %c0_i32_1 = arith.constant 0 : i32
    return %c0_i32, %c0_i32_0 : i32, i32
  }
  func.func @transform_17(%arg0: i32) -> (i32, i32) {
    %c0_i32 = arith.constant 0 : i32
    %c0_i32_0 = arith.constant 0 : i32
    %c0_i32_1 = arith.constant 0 : i32
    return %c0_i32, %c0_i32_0 : i32, i32
  }
  func.func @transform_18(%arg0: i32) -> (i32, i32) {
    %c0_i32 = arith.constant 0 : i32
    %c0_i32_0 = arith.constant 0 : i32
    %c0_i32_1 = arith.constant 0 : i32
    return %c0_i32, %c0_i32_0 : i32, i32
  }
  func.func @transform_19(%arg0: i32) -> (i32, i32) {
    %c0_i32 = arith.constant 0 : i32
    %c0_i32_0 = arith.constant 0 : i32
    return %arg0, %c0_i32 : i32, i32
  }
}

</mosaic_0001>

<llo_original>
// kernel: tpu_custom_call.1
$region0: #{tpu_custom_call.1}
  #allocation0 [shape = 'u32[]', space=smem, size = 0x4, offset = 0x4, fixed_abs, tag = 'smem constant byte address 0x4 - core index']
  #allocation1 [shape = 'u32[144,128]{1,0:T(1,128)}', space=vmem, size = 0x12000, scoped, tag = 'internal scratch']
  %s0 = inlined_call_operand.vmem [shape: s32[16,1], index: 0, kind: input, shape index: {}]
  %s1 = inlined_call_operand.vmem [shape: f32[8,32], index: 1, kind: input, shape index: {}]
  %s2 = inlined_call_operand.vmem [shape: f32[64,32], index: 2, kind: input, shape index: {}]
  %s3 = inlined_call_operand.vmem [shape: f32[2,1,32], index: 3, kind: input, shape index: {}]
  %s4 = inlined_call_operand.vmem [shape: f32[2,1,32], index: 4, kind: input, shape index: {}]
  %s5 = inlined_call_operand.vmem [shape: f32[2,32,96], index: 5, kind: input, shape index: {}]
  %s6 = inlined_call_operand.vmem [shape: f32[2,1,96], index: 6, kind: input, shape index: {}]
  %s7 = inlined_call_operand.vmem [shape: f32[2,32,32], index: 7, kind: input, shape index: {}]
  %s8 = inlined_call_operand.vmem [shape: f32[2,1,32], index: 8, kind: input, shape index: {}]
  %s9 = inlined_call_operand.vmem [shape: f32[2,1,32], index: 9, kind: input, shape index: {}]
  %s10 = inlined_call_operand.vmem [shape: f32[2,1,32], index: 10, kind: input, shape index: {}]
  %s11 = inlined_call_operand.vmem [shape: f32[2,32,64], index: 11, kind: input, shape index: {}]
  %s12 = inlined_call_operand.vmem [shape: f32[2,1,64], index: 12, kind: input, shape index: {}]
  %s13 = inlined_call_operand.vmem [shape: f32[2,64,32], index: 13, kind: input, shape index: {}]
  %s14 = inlined_call_operand.vmem [shape: f32[2,1,32], index: 14, kind: input, shape index: {}]
  %s15 = inlined_call_operand.vmem [shape: f32[1,32], index: 15, kind: input, shape index: {}]
  %s16 = inlined_call_operand.vmem [shape: f32[1,32], index: 16, kind: input, shape index: {}]
  %s17 = inlined_call_operand.vmem [shape: f32[32,128], index: 17, kind: input, shape index: {}]
  %s18 = inlined_call_operand.vmem [shape: f32[1,128], index: 18, kind: input, shape index: {}]
  %s19 = inlined_call_operand.hbm [shape: f32[16,128], index: 19, kind: output, shape index: {}]
  %s20 = sld [smem:[#allocation0]]
  $region109: #{tpu_custom_call.1} parent=0
    _
  %s22 = ssub.s32 1, %s20
  %s23 = scalar_select 0, %s22, %s20
  $region1: #{tpu_custom_call.1} parent=0
    #allocation2 [shape = 'u8[8192]{0}', space=vmem, size = 0x2000, scoped, tag = 'output window, operand 0']
    #allocation3 [shape = 's32[2]{0}', space=sflag, size = 0x8, scoped, tag = 'scoped memory for tpu_custom_call.1']
    %24 = vsyncpa [#allocation3], 0
    %s25 = scalar_lea.sflag [#allocation3], 1
    %26 = vsyncpa %s25, 0
    loop: start=0, step=1, limit=4
    $region2: #{tpu_custom_call.1} parent=1 // loop_pre_header
      _
    $region3: #{tpu_custom_call.1} parent=1 // loop_header
      %s28 = sphi 0, %s32
      %p29 = scmp.ge.s32.totalorder %s28, 4
      %s38 = sphi 0, %s40
      %s41 = sphi 0, %s38
      %s42 = sphi 0, %s41
      %s58 = sphi 0, %s42
      %s62 = sphi 0, %s62
      %s64 = sphi 0, %s62
      %s65 = sphi 0, %s64
      %s79 = sphi 0, %s65
      %s83 = sphi 0, %s83
      %s85 = sphi 0, %s83
      %s86 = sphi 0, %s85
      %s100 = sphi 0, %s86
      %s104 = sphi 0, %s104
      %s106 = sphi 0, %s104
      %s107 = sphi 0, %s106
      %s121 = sphi 0, %s107
      %s125 = sphi 0, %s125
      %s127 = sphi 0, %s125
      %s128 = sphi 0, %s127
      %s142 = sphi 0, %s128
      %s146 = sphi 0, %s146
      %s148 = sphi 0, %s146
      %s149 = sphi 0, %s148
      %s163 = sphi 0, %s149
      %s167 = sphi 0, %s167
      %s169 = sphi 0, %s167
      %s170 = sphi 0, %s169
      %s184 = sphi 0, %s170
      %s188 = sphi 0, %s188
      %s190 = sphi 0, %s188
      %s191 = sphi 0, %s190
      %s205 = sphi 0, %s191
      %s209 = sphi 0, %s209
      %s211 = sphi 0, %s209
      %s212 = sphi 0, %s211
      %s226 = sphi 0, %s212
      %s230 = sphi 0, %s230
      %s232 = sphi 0, %s230
      %s233 = sphi 0, %s232
      %s247 = sphi 0, %s233
      %s251 = sphi 0, %s251
      %s253 = sphi 0, %s251
      %s254 = sphi 0, %s253
      %s268 = sphi 0, %s254
      %s272 = sphi 0, %s272
      %s274 = sphi 0, %s272
      %s275 = sphi 0, %s274
      %s289 = sphi 0, %s275
      %s293 = sphi 0, %s293
      %s295 = sphi 0, %s293
      %s296 = sphi 0, %s295
      %s310 = sphi 0, %s296
      %s314 = sphi 0, %s314
      %s316 = sphi 0, %s314
      %s317 = sphi 0, %s316
      %s331 = sphi 0, %s317
      %s335 = sphi 0, %s335
      %s337 = sphi 0, %s335
      %s338 = sphi 0, %s337
      %s352 = sphi 0, %s338
      %s356 = sphi 0, %s356
      %s358 = sphi 0, %s356
      %s359 = sphi 0, %s358
      %s373 = sphi 0, %s359
      %s377 = sphi 0, %s377
      %s379 = sphi 0, %s377
      %s380 = sphi 0, %s379
      %s394 = sphi 0, %s380
      %s398 = sphi 0, %s398
      %s400 = sphi 0, %s398
      %s401 = sphi 0, %s400
      %s415 = sphi 0, %s401
      %s419 = sphi 0, %s419
      %s421 = sphi 0, %s419
      %s422 = sphi 0, %s421
      %s436 = sphi 0, %s422
      %s442 = sphi 0, %s444
      %s445 = sphi 0, %s442
      %s446 = sphi 0, %s445
      %s462 = sphi 0, %s446
    $region4: #{tpu_custom_call.1} parent=1 // loop_header_branch
      %31 = sbr.rel (%p29) target = $region8
    $region5: #{tpu_custom_call.1} parent=1 // loop_body
      %s33 = ssub.s32 %s28, 1
      %s34 = ssub.s32 %s28, 2
      %s35 = sadd.s32 %s28, 1
      %s36 = ssub.s32 %s28, %s35
      %p37 = scmp.eq.s32.totalorder %s36, 0
      %s39 = sadd.s32 %s38, 1
      %s40 = scalar_select %p37, %s38, %s39
      %p43 = pneg %p37
      %p44 = scmp.eq.s32.totalorder %s28, 1
      %p45 = por %p43, %p44
      %p46 = scmp.ne.s32.totalorder %s38, %s41
      %p47 = scmp.eq.s32.totalorder %s28, 0
      %p48 = por %p46, %p47
      %p49 = scmp.ne.s32.totalorder %s38, %s41
      %p50 = scmp.eq.s32.totalorder %s33, 1
      %p51 = por %p49, %p50
      %p52 = scmp.ne.s32.totalorder %s41, %s42
      %p53 = scmp.eq.s32.totalorder %s33, 0
      %p54 = por %p52, %p53
      %p55 = scmp.ne.s32.totalorder %s41, %s42
      %p56 = scmp.eq.s32.totalorder %s34, 1
      %p57 = por %p55, %p56
      %p59 = scmp.ne.s32.totalorder %s42, %s58
      %p60 = scmp.eq.s32.totalorder %s34, 0
      %p61 = por %p59, %p60
      %s63 = sadd.s32 %s62, 1
      %p66 = scmp.eq.s32.totalorder %s28, 1
      %p67 = scmp.ne.s32.totalorder %s62, %s64
      %p68 = scmp.eq.s32.totalorder %s28, 0
      %p69 = por %p67, %p68
      %p70 = scmp.ne.s32.totalorder %s62, %s64
      %p71 = scmp.eq.s32.totalorder %s33, 1
      %p72 = por %p70, %p71
      %p73 = scmp.ne.s32.totalorder %s64, %s65
      %p74 = scmp.eq.s32.totalorder %s33, 0
      %p75 = por %p73, %p74
      %p76 = scmp.ne.s32.totalorder %s64, %s65
      %p77 = scmp.eq.s32.totalorder %s34, 1
      %p78 = por %p76, %p77
      %p80 = scmp.ne.s32.totalorder %s65, %s79
      %p81 = scmp.eq.s32.totalorder %s34, 0
      %p82 = por %p80, %p81
      %s84 = sadd.s32 %s83, 1
      %p87 = scmp.eq.s32.totalorder %s28, 1
      %p88 = scmp.ne.s32.totalorder %s83, %s85
      %p89 = scmp.eq.s32.totalorder %s28, 0
      %p90 = por %p88, %p89
      %p91 = scmp.ne.s32.totalorder %s83, %s85
      %p92 = scmp.eq.s32.totalorder %s33, 1
      %p93 = por %p91, %p92
      %p94 = scmp.ne.s32.totalorder %s85, %s86
      %p95 = scmp.eq.s32.totalorder %s33, 0
      %p96 = por %p94, %p95
      %p97 = scmp.ne.s32.totalorder %s85, %s86
      %p98 = scmp.eq.s32.totalorder %s34, 1
      %p99 = por %p97, %p98
      %p101 = scmp.ne.s32.totalorder %s86, %s100
      %p102 = scmp.eq.s32.totalorder %s34, 0
      %p103 = por %p101, %p102
      %s105 = sadd.s32 %s104, 1
      %p108 = scmp.eq.s32.totalorder %s28, 1
      %p109 = scmp.ne.s32.totalorder %s104, %s106
      %p110 = scmp.eq.s32.totalorder %s28, 0
      %p111 = por %p109, %p110
      %p112 = scmp.ne.s32.totalorder %s104, %s106
      %p113 = scmp.eq.s32.totalorder %s33, 1
      %p114 = por %p112, %p113
      %p115 = scmp.ne.s32.totalorder %s106, %s107
      %p116 = scmp.eq.s32.totalorder %s33, 0
      %p117 = por %p115, %p116
      %p118 = scmp.ne.s32.totalorder %s106, %s107
      %p119 = scmp.eq.s32.totalorder %s34, 1
      %p120 = por %p118, %p119
      %p122 = scmp.ne.s32.totalorder %s107, %s121
      %p123 = scmp.eq.s32.totalorder %s34, 0
      %p124 = por %p122, %p123
      %s126 = sadd.s32 %s125, 1
      %p129 = scmp.eq.s32.totalorder %s28, 1
      %p130 = scmp.ne.s32.totalorder %s125, %s127
      %p131 = scmp.eq.s32.totalorder %s28, 0
      %p132 = por %p130, %p131
      %p133 = scmp.ne.s32.totalorder %s125, %s127
      %p134 = scmp.eq.s32.totalorder %s33, 1
      %p135 = por %p133, %p134
      %p136 = scmp.ne.s32.totalorder %s127, %s128
      %p137 = scmp.eq.s32.totalorder %s33, 0
      %p138 = por %p136, %p137
      %p139 = scmp.ne.s32.totalorder %s127, %s128
      %p140 = scmp.eq.s32.totalorder %s34, 1
      %p141 = por %p139, %p140
      %p143 = scmp.ne.s32.totalorder %s128, %s142
      %p144 = scmp.eq.s32.totalorder %s34, 0
      %p145 = por %p143, %p144
      %s147 = sadd.s32 %s146, 1
      %p150 = scmp.eq.s32.totalorder %s28, 1
      %p151 = scmp.ne.s32.totalorder %s146, %s148
      %p152 = scmp.eq.s32.totalorder %s28, 0
      %p153 = por %p151, %p152
      %p154 = scmp.ne.s32.totalorder %s146, %s148
      %p155 = scmp.eq.s32.totalorder %s33, 1
      %p156 = por %p154, %p155
      %p157 = scmp.ne.s32.totalorder %s148, %s149
      %p158 = scmp.eq.s32.totalorder %s33, 0
      %p159 = por %p157, %p158
      %p160 = scmp.ne.s32.totalorder %s148, %s149
      %p161 = scmp.eq.s32.totalorder %s34, 1
      %p162 = por %p160, %p161
      %p164 = scmp.ne.s32.totalorder %s149, %s163
      %p165 = scmp.eq.s32.totalorder %s34, 0
      %p166 = por %p164, %p165
      %s168 = sadd.s32 %s167, 1
      %p171 = scmp.eq.s32.totalorder %s28, 1
      %p172 = scmp.ne.s32.totalorder %s167, %s169
      %p173 = scmp.eq.s32.totalorder %s28, 0
      %p174 = por %p172, %p173
      %p175 = scmp.ne.s32.totalorder %s167, %s169
      %p176 = scmp.eq.s32.totalorder %s33, 1
      %p177 = por %p175, %p176
      %p178 = scmp.ne.s32.totalorder %s169, %s170
      %p179 = scmp.eq.s32.totalorder %s33, 0
      %p180 = por %p178, %p179
      %p181 = scmp.ne.s32.totalorder %s169, %s170
      %p182 = scmp.eq.s32.totalorder %s34, 1
      %p183 = por %p181, %p182
      %p185 = scmp.ne.s32.totalorder %s170, %s184
      %p186 = scmp.eq.s32.totalorder %s34, 0
      %p187 = por %p185, %p186
      %s189 = sadd.s32 %s188, 1
      %p192 = scmp.eq.s32.totalorder %s28, 1
      %p193 = scmp.ne.s32.totalorder %s188, %s190
      %p194 = scmp.eq.s32.totalorder %s28, 0
      %p195 = por %p193, %p194
      %p196 = scmp.ne.s32.totalorder %s188, %s190
      %p197 = scmp.eq.s32.totalorder %s33, 1
      %p198 = por %p196, %p197
      %p199 = scmp.ne.s32.totalorder %s190, %s191
      %p200 = scmp.eq.s32.totalorder %s33, 0
      %p201 = por %p199, %p200
      %p202 = scmp.ne.s32.totalorder %s190, %s191
      %p203 = scmp.eq.s32.totalorder %s34, 1
      %p204 = por %p202, %p203
      %p206 = scmp.ne.s32.totalorder %s191, %s205
      %p207 = scmp.eq.s32.totalorder %s34, 0
      %p208 = por %p206, %p207
      %s210 = sadd.s32 %s209, 1
      %p213 = scmp.eq.s32.totalorder %s28, 1
      %p214 = scmp.ne.s32.totalorder %s209, %s211
      %p215 = scmp.eq.s32.totalorder %s28, 0
      %p216 = por %p214, %p215
      %p217 = scmp.ne.s32.totalorder %s209, %s211
      %p218 = scmp.eq.s32.totalorder %s33, 1
      %p219 = por %p217, %p218
      %p220 = scmp.ne.s32.totalorder %s211, %s212
      %p221 = scmp.eq.s32.totalorder %s33, 0
      %p222 = por %p220, %p221
      %p223 = scmp.ne.s32.totalorder %s211, %s212
      %p224 = scmp.eq.s32.totalorder %s34, 1
      %p225 = por %p223, %p224
      %p227 = scmp.ne.s32.totalorder %s212, %s226
      %p228 = scmp.eq.s32.totalorder %s34, 0
      %p229 = por %p227, %p228
      %s231 = sadd.s32 %s230, 1
      %p234 = scmp.eq.s32.totalorder %s28, 1
      %p235 = scmp.ne.s32.totalorder %s230, %s232
      %p236 = scmp.eq.s32.totalorder %s28, 0
      %p237 = por %p235, %p236
      %p238 = scmp.ne.s32.totalorder %s230, %s232
      %p239 = scmp.eq.s32.totalorder %s33, 1
      %p240 = por %p238, %p239
      %p241 = scmp.ne.s32.totalorder %s232, %s233
      %p242 = scmp.eq.s32.totalorder %s33, 0
      %p243 = por %p241, %p242
      %p244 = scmp.ne.s32.totalorder %s232, %s233
      %p245 = scmp.eq.s32.totalorder %s34, 1
      %p246 = por %p244, %p245
      %p248 = scmp.ne.s32.totalorder %s233, %s247
      %p249 = scmp.eq.s32.totalorder %s34, 0
      %p250 = por %p248, %p249
      %s252 = sadd.s32 %s251, 1
      %p255 = scmp.eq.s32.totalorder %s28, 1
      %p256 = scmp.ne.s32.totalorder %s251, %s253
      %p257 = scmp.eq.s32.totalorder %s28, 0
      %p258 = por %p256, %p257
      %p259 = scmp.ne.s32.totalorder %s251, %s253
      %p260 = scmp.eq.s32.totalorder %s33, 1
      %p261 = por %p259, %p260
      %p262 = scmp.ne.s32.totalorder %s253, %s254
      %p263 = scmp.eq.s32.totalorder %s33, 0
      %p264 = por %p262, %p263
      %p265 = scmp.ne.s32.totalorder %s253, %s254
      %p266 = scmp.eq.s32.totalorder %s34, 1
      %p267 = por %p265, %p266
      %p269 = scmp.ne.s32.totalorder %s254, %s268
      %p270 = scmp.eq.s32.totalorder %s34, 0
      %p271 = por %p269, %p270
      %s273 = sadd.s32 %s272, 1
      %p276 = scmp.eq.s32.totalorder %s28, 1
      %p277 = scmp.ne.s32.totalorder %s272, %s274
      %p278 = scmp.eq.s32.totalorder %s28, 0
      %p279 = por %p277, %p278
      %p280 = scmp.ne.s32.totalorder %s272, %s274
      %p281 = scmp.eq.s32.totalorder %s33, 1
      %p282 = por %p280, %p281
      %p283 = scmp.ne.s32.totalorder %s274, %s275
      %p284 = scmp.eq.s32.totalorder %s33, 0
      %p285 = por %p283, %p284
      %p286 = scmp.ne.s32.totalorder %s274, %s275
      %p287 = scmp.eq.s32.totalorder %s34, 1
      %p288 = por %p286, %p287
      %p290 = scmp.ne.s32.totalorder %s275, %s289
      %p291 = scmp.eq.s32.totalorder %s34, 0
      %p292 = por %p290, %p291
      %s294 = sadd.s32 %s293, 1
      %p297 = scmp.eq.s32.totalorder %s28, 1
      %p298 = scmp.ne.s32.totalorder %s293, %s295
      %p299 = scmp.eq.s32.totalorder %s28, 0
      %p300 = por %p298, %p299
      %p301 = scmp.ne.s32.totalorder %s293, %s295
      %p302 = scmp.eq.s32.totalorder %s33, 1
      %p303 = por %p301, %p302
      %p304 = scmp.ne.s32.totalorder %s295, %s296
      %p305 = scmp.eq.s32.totalorder %s33, 0
      %p306 = por %p304, %p305
      %p307 = scmp.ne.s32.totalorder %s295, %s296
      %p308 = scmp.eq.s32.totalorder %s34, 1
      %p309 = por %p307, %p308
      %p311 = scmp.ne.s32.totalorder %s296, %s310
      %p312 = scmp.eq.s32.totalorder %s34, 0
      %p313 = por %p311, %p312
      %s315 = sadd.s32 %s314, 1
      %p318 = scmp.eq.s32.totalorder %s28, 1
      %p319 = scmp.ne.s32.totalorder %s314, %s316
      %p320 = scmp.eq.s32.totalorder %s28, 0
      %p321 = por %p319, %p320
      %p322 = scmp.ne.s32.totalorder %s314, %s316
      %p323 = scmp.eq.s32.totalorder %s33, 1
      %p324 = por %p322, %p323
      %p325 = scmp.ne.s32.totalorder %s316, %s317
      %p326 = scmp.eq.s32.totalorder %s33, 0
      %p327 = por %p325, %p326
      %p328 = scmp.ne.s32.totalorder %s316, %s317
      %p329 = scmp.eq.s32.totalorder %s34, 1
      %p330 = por %p328, %p329
      %p332 = scmp.ne.s32.totalorder %s317, %s331
      %p333 = scmp.eq.s32.totalorder %s34, 0
      %p334 = por %p332, %p333
      %s336 = sadd.s32 %s335, 1
      %p339 = scmp.eq.s32.totalorder %s28, 1
      %p340 = scmp.ne.s32.totalorder %s335, %s337
      %p341 = scmp.eq.s32.totalorder %s28, 0
      %p342 = por %p340, %p341
      %p343 = scmp.ne.s32.totalorder %s335, %s337
      %p344 = scmp.eq.s32.totalorder %s33, 1
      %p345 = por %p343, %p344
      %p346 = scmp.ne.s32.totalorder %s337, %s338
      %p347 = scmp.eq.s32.totalorder %s33, 0
      %p348 = por %p346, %p347
      %p349 = scmp.ne.s32.totalorder %s337, %s338
      %p350 = scmp.eq.s32.totalorder %s34, 1
      %p351 = por %p349, %p350
      %p353 = scmp.ne.s32.totalorder %s338, %s352
      %p354 = scmp.eq.s32.totalorder %s34, 0
      %p355 = por %p353, %p354
      %s357 = sadd.s32 %s356, 1
      %p360 = scmp.eq.s32.totalorder %s28, 1
      %p361 = scmp.ne.s32.totalorder %s356, %s358
      %p362 = scmp.eq.s32.totalorder %s28, 0
      %p363 = por %p361, %p362
      %p364 = scmp.ne.s32.totalorder %s356, %s358
      %p365 = scmp.eq.s32.totalorder %s33, 1
      %p366 = por %p364, %p365
      %p367 = scmp.ne.s32.totalorder %s358, %s359
      %p368 = scmp.eq.s32.totalorder %s33, 0
      %p369 = por %p367, %p368
      %p370 = scmp.ne.s32.totalorder %s358, %s359
      %p371 = scmp.eq.s32.totalorder %s34, 1
      %p372 = por %p370, %p371
      %p374 = scmp.ne.s32.totalorder %s359, %s373
      %p375 = scmp.eq.s32.totalorder %s34, 0
      %p376 = por %p374, %p375
      %s378 = sadd.s32 %s377, 1
      %p381 = scmp.eq.s32.totalorder %s28, 1
      %p382 = scmp.ne.s32.totalorder %s377, %s379
      %p383 = scmp.eq.s32.totalorder %s28, 0
      %p384 = por %p382, %p383
      %p385 = scmp.ne.s32.totalorder %s377, %s379
      %p386 = scmp.eq.s32.totalorder %s33, 1
      %p387 = por %p385, %p386
      %p388 = scmp.ne.s32.totalorder %s379, %s380
      %p389 = scmp.eq.s32.totalorder %s33, 0
      %p390 = por %p388, %p389
      %p391 = scmp.ne.s32.totalorder %s379, %s380
      %p392 = scmp.eq.s32.totalorder %s34, 1
      %p393 = por %p391, %p392
      %p395 = scmp.ne.s32.totalorder %s380, %s394
      %p396 = scmp.eq.s32.totalorder %s34, 0
      %p397 = por %p395, %p396
      %s399 = sadd.s32 %s398, 1
      %p402 = scmp.eq.s32.totalorder %s28, 1
      %p403 = scmp.ne.s32.totalorder %s398, %s400
      %p404 = scmp.eq.s32.totalorder %s28, 0
      %p405 = por %p403, %p404
      %p406 = scmp.ne.s32.totalorder %s398, %s400
      %p407 = scmp.eq.s32.totalorder %s33, 1
      %p408 = por %p406, %p407
      %p409 = scmp.ne.s32.totalorder %s400, %s401
      %p410 = scmp.eq.s32.totalorder %s33, 0
      %p411 = por %p409, %p410
      %p412 = scmp.ne.s32.totalorder %s400, %s401
      %p413 = scmp.eq.s32.totalorder %s34, 1
      %p414 = por %p412, %p413
      %p416 = scmp.ne.s32.totalorder %s401, %s415
      %p417 = scmp.eq.s32.totalorder %s34, 0
      %p418 = por %p416, %p417
      %s420 = sadd.s32 %s419, 1
      %p423 = scmp.eq.s32.totalorder %s28, 1
      %p424 = scmp.ne.s32.totalorder %s419, %s421
      %p425 = scmp.eq.s32.totalorder %s28, 0
      %p426 = por %p424, %p425
      %p427 = scmp.ne.s32.totalorder %s419, %s421
      %p428 = scmp.eq.s32.totalorder %s33, 1
      %p429 = por %p427, %p428
      %p430 = scmp.ne.s32.totalorder %s421, %s422
      %p431 = scmp.eq.s32.totalorder %s33, 0
      %p432 = por %p430, %p431
      %p433 = scmp.ne.s32.totalorder %s421, %s422
      %p434 = scmp.eq.s32.totalorder %s34, 1
      %p435 = por %p433, %p434
      %p437 = scmp.ne.s32.totalorder %s422, %s436
      %p438 = scmp.eq.s32.totalorder %s34, 0
      %p439 = por %p437, %p438
      %s440 = ssub.s32 %s28, %s35
      %p441 = scmp.eq.s32.totalorder %s440, 0
      %s443 = sadd.s32 %s442, 1
      %s444 = scalar_select %p441, %s442, %s443
      %p447 = pneg %p441
      %p448 = scmp.eq.s32.totalorder %s28, 1
      %p449 = por %p447, %p448
      %p450 = scmp.ne.s32.totalorder %s442, %s445
      %p451 = scmp.eq.s32.totalorder %s28, 0
      %p452 = por %p450, %p451
      %p453 = scmp.ne.s32.totalorder %s442, %s445
      %p454 = scmp.eq.s32.totalorder %s33, 1
      %p455 = por %p453, %p454
      %p456 = scmp.ne.s32.totalorder %s445, %s446
      %p457 = scmp.eq.s32.totalorder %s33, 0
      %p458 = por %p456, %p457
      %p459 = scmp.ne.s32.totalorder %s445, %s446
      %p460 = scmp.eq.s32.totalorder %s34, 1
      %p461 = por %p459, %p460
      %p463 = scmp.ne.s32.totalorder %s446, %s462
      %p464 = scmp.eq.s32.totalorder %s34, 0
      %p465 = por %p463, %p464
      %p466 = scmp.le.s32.totalorder 1, %s28
      %p467 = scmp.lt.s32.totalorder %s28, 3
      %p468 = pnand %p466, %p467
      %p469 = pneg %p468
      // Predicated region
      $region9: #{tpu_custom_call.1} parent=5 // pred_check
        _
      $region10: #{tpu_custom_call.1} parent=5 // pred_check_branch
        %471 = sbr.rel (%p468) target = $region12
      $region11: #{tpu_custom_call.1} parent=5 // pred_region
        %s472 = ssub.s32 %s28, 1
        // Predicated region
        $region13: #{tpu_custom_call.1} parent=11 // pred_check
          %p473 = pneg %p75
        $region14: #{tpu_custom_call.1} parent=11 // pred_check_branch
          %475 = sbr.rel (%p473) target = $region16
        $region15: #{tpu_custom_call.1} parent=11 // pred_region
          _
        $region16: #{tpu_custom_call.1} parent=11 // pred_fallthru
          _
        // Predicated region
        $region17: #{tpu_custom_call.1} parent=11 // pred_check
          %p476 = pneg %p96
        $region18: #{tpu_custom_call.1} parent=11 // pred_check_branch
          %478 = sbr.rel (%p476) target = $region20
        $region19: #{tpu_custom_call.1} parent=11 // pred_region
          _
        $region20: #{tpu_custom_call.1} parent=11 // pred_fallthru
          _
        // Predicated region
        $region21: #{tpu_custom_call.1} parent=11 // pred_check
          %p479 = pneg %p117
        $region22: #{tpu_custom_call.1} parent=11 // pred_check_branch
          %481 = sbr.rel (%p479) target = $region24
        $region23: #{tpu_custom_call.1} parent=11 // pred_region
          _
        $region24: #{tpu_custom_call.1} parent=11 // pred_fallthru
          _
        // Predicated region
        $region25: #{tpu_custom_call.1} parent=11 // pred_check
          %p482 = pneg %p138
        $region26: #{tpu_custom_call.1} parent=11 // pred_check_branch
          %484 = sbr.rel (%p482) target = $region28
        $region27: #{tpu_custom_call.1} parent=11 // pred_region
          _
        $region28: #{tpu_custom_call.1} parent=11 // pred_fallthru
          _
        // Predicated region
        $region29: #{tpu_custom_call.1} parent=11 // pred_check
          %p485 = pneg %p159
        $region30: #{tpu_custom_call.1} parent=11 // pred_check_branch
          %487 = sbr.rel (%p485) target = $region32
        $region31: #{tpu_custom_call.1} parent=11 // pred_region
          _
        $region32: #{tpu_custom_call.1} parent=11 // pred_fallthru
          _
        // Predicated region
        $region33: #{tpu_custom_call.1} parent=11 // pred_check
          %p488 = pneg %p180
        $region34: #{tpu_custom_call.1} parent=11 // pred_check_branch
          %490 = sbr.rel (%p488) target = $region36
        $region35: #{tpu_custom_call.1} parent=11 // pred_region
          _
        $region36: #{tpu_custom_call.1} parent=11 // pred_fallthru
          _
        // Predicated region
        $region37: #{tpu_custom_call.1} parent=11 // pred_check
          %p491 = pneg %p201
        $region38: #{tpu_custom_call.1} parent=11 // pred_check_branch
          %493 = sbr.rel (%p491) target = $region40
        $region39: #{tpu_custom_call.1} parent=11 // pred_region
          _
        $region40: #{tpu_custom_call.1} parent=11 // pred_fallthru
          _
        // Predicated region
        $region41: #{tpu_custom_call.1} parent=11 // pred_check
          %p494 = pneg %p222
        $region42: #{tpu_custom_call.1} parent=11 // pred_check_branch
          %496 = sbr.rel (%p494) target = $region44
        $region43: #{tpu_custom_call.1} parent=11 // pred_region
          _
        $region44: #{tpu_custom_call.1} parent=11 // pred_fallthru
          _
        // Predicated region
        $region45: #{tpu_custom_call.1} parent=11 // pred_check
          %p497 = pneg %p243
        $region46: #{tpu_custom_call.1} parent=11 // pred_check_branch
          %499 = sbr.rel (%p497) target = $region48
        $region47: #{tpu_custom_call.1} parent=11 // pred_region
          _
        $region48: #{tpu_custom_call.1} parent=11 // pred_fallthru
          _
        // Predicated region
        $region49: #{tpu_custom_call.1} parent=11 // pred_check
          %p500 = pneg %p264
        $region50: #{tpu_custom_call.1} parent=11 // pred_check_branch
          %502 = sbr.rel (%p500) target = $region52
        $region51: #{tpu_custom_call.1} parent=11 // pred_region
          _
        $region52: #{tpu_custom_call.1} parent=11 // pred_fallthru
          _
        // Predicated region
        $region53: #{tpu_custom_call.1} parent=11 // pred_check
          %p503 = pneg %p285
        $region54: #{tpu_custom_call.1} parent=11 // pred_check_branch
          %505 = sbr.rel (%p503) target = $region56
        $region55: #{tpu_custom_call.1} parent=11 // pred_region
          _
        $region56: #{tpu_custom_call.1} parent=11 // pred_fallthru
          _
        // Predicated region
        $region57: #{tpu_custom_call.1} parent=11 // pred_check
          %p506 = pneg %p306
        $region58: #{tpu_custom_call.1} parent=11 // pred_check_branch
          %508 = sbr.rel (%p506) target = $region60
        $region59: #{tpu_custom_call.1} parent=11 // pred_region
          _
        $region60: #{tpu_custom_call.1} parent=11 // pred_fallthru
          _
        // Predicated region
        $region61: #{tpu_custom_call.1} parent=11 // pred_check
          %p509 = pneg %p327
        $region62: #{tpu_custom_call.1} parent=11 // pred_check_branch
          %511 = sbr.rel (%p509) target = $region64
        $region63: #{tpu_custom_call.1} parent=11 // pred_region
          _
        $region64: #{tpu_custom_call.1} parent=11 // pred_fallthru
          _
        // Predicated region
        $region65: #{tpu_custom_call.1} parent=11 // pred_check
          %p512 = pneg %p348
        $region66: #{tpu_custom_call.1} parent=11 // pred_check_branch
          %514 = sbr.rel (%p512) target = $region68
        $region67: #{tpu_custom_call.1} parent=11 // pred_region
          _
        $region68: #{tpu_custom_call.1} parent=11 // pred_fallthru
          _
        // Predicated region
        $region69: #{tpu_custom_call.1} parent=11 // pred_check
          %p515 = pneg %p369
        $region70: #{tpu_custom_call.1} parent=11 // pred_check_branch
          %517 = sbr.rel (%p515) target = $region72
        $region71: #{tpu_custom_call.1} parent=11 // pred_region
          _
        $region72: #{tpu_custom_call.1} parent=11 // pred_fallthru
          _
        // Predicated region
        $region73: #{tpu_custom_call.1} parent=11 // pred_check
          %p518 = pneg %p390
        $region74: #{tpu_custom_call.1} parent=11 // pred_check_branch
          %520 = sbr.rel (%p518) target = $region76
        $region75: #{tpu_custom_call.1} parent=11 // pred_region
          _
        $region76: #{tpu_custom_call.1} parent=11 // pred_fallthru
          _
        // Predicated region
        $region77: #{tpu_custom_call.1} parent=11 // pred_check
          %p521 = pneg %p411
        $region78: #{tpu_custom_call.1} parent=11 // pred_check_branch
          %523 = sbr.rel (%p521) target = $region80
        $region79: #{tpu_custom_call.1} parent=11 // pred_region
          _
        $region80: #{tpu_custom_call.1} parent=11 // pred_fallthru
          _
        // Predicated region
        $region81: #{tpu_custom_call.1} parent=11 // pred_check
          %p524 = pneg %p432
        $region82: #{tpu_custom_call.1} parent=11 // pred_check_branch
          %526 = sbr.rel (%p524) target = $region84
        $region83: #{tpu_custom_call.1} parent=11 // pred_region
          _
        $region84: #{tpu_custom_call.1} parent=11 // pred_fallthru
          _
      $region12: #{tpu_custom_call.1} parent=5 // pred_fallthru
        _
      %p527 = scmp.lt.s32.totalorder %s28, 2
      // Predicated region
      $region85: #{tpu_custom_call.1} parent=5 // pred_check
        %p528 = pneg %p527
      $region86: #{tpu_custom_call.1} parent=5 // pred_check_branch
        %530 = sbr.rel (%p528) target = $region88
      $region87: #{tpu_custom_call.1} parent=5 // pred_region
        // Predicated region
        $region89: #{tpu_custom_call.1} parent=87 // pred_check
          %p531 = pneg %p48
        $region90: #{tpu_custom_call.1} parent=87 // pred_check_branch
          %533 = sbr.rel (%p531) target = $region92
        $region91: #{tpu_custom_call.1} parent=87 // pred_region
          %p534 = scmp.lt.s32.totalorder %s28, 1
          %s535 = scalar_select %p534, %s28, 1
          %s536 = smul.addr %s535, 8
          %s537 = scalar_lea.vmem %s0, %s536
        $region92: #{tpu_custom_call.1} parent=87 // pred_fallthru
          _
      $region88: #{tpu_custom_call.1} parent=5 // pred_fallthru
        _
      %p538 = scmp.le.s32.totalorder 1, %s28
      %p539 = scmp.lt.s32.totalorder %s28, 3
      %p540 = pnand %p538, %p539
      %p541 = pneg %p540
      // Predicated region
      $region93: #{tpu_custom_call.1} parent=5 // pred_check
        _
      $region94: #{tpu_custom_call.1} parent=5 // pred_check_branch
        %543 = sbr.rel (%p540) target = $region96
      $region95: #{tpu_custom_call.1} parent=5 // pred_region
        %s544 = ssub.s32 %s28, 1
        %p545 = scmp.lt.s32.totalorder %s33, 1
        %s546 = scalar_select %p545, %s33, 1
        %s547 = smul.addr %s546, 8
        %s548 = scalar_lea.vmem %s0, %s547
        %p549 = pneg %p54
        %p550 = pneg %p51
        %p551 = pneg %p75
        %p552 = pneg %p72
        %p553 = pneg %p96
        %p554 = pneg %p93
        %p555 = pneg %p117
        %p556 = pneg %p114
        %p557 = pneg %p138
        %p558 = pneg %p135
        %p559 = pneg %p159
        %p560 = pneg %p156
        %p561 = pneg %p180
        %p562 = pneg %p177
        %p563 = pneg %p201
        %p564 = pneg %p198
        %p565 = pneg %p222
        %p566 = pneg %p219
        %p567 = pneg %p243
        %p568 = pneg %p240
        %p569 = pneg %p264
        %p570 = pneg %p261
        %p571 = pneg %p285
        %p572 = pneg %p282
        %p573 = pneg %p306
        %p574 = pneg %p303
        %p575 = pneg %p327
        %p576 = pneg %p324
        %p577 = pneg %p348
        %p578 = pneg %p345
        %p579 = pneg %p369
        %p580 = pneg %p366
        %p581 = pneg %p390
        %p582 = pneg %p387
        %p583 = pneg %p411
        %p584 = pneg %p408
        %p585 = pneg %p432
        %p586 = pneg %p429
        %p587 = pneg %p458
        %p588 = pneg %p455
        %s589 = sand.u32 %s445, 1
        %s590 = scalar_lea.sflag [#allocation3], %s589
        %s591 = sand.u32 %s445, 1
        %s592 = smul.addr %s591, 8
        %s593 = scalar_lea.vmem [#allocation2], %s592
        %p594 = scmp.lt.s32.totalorder %s33, 1
        %s595 = scalar_select %p594, %s33, 1
        %s596 = smul.addr %s595, 8
        %s597 = scalar_lea.vmem %s0, %s596
        %v598 = vld [vmem:[%s597] sm:$0xff]
        %v599 = vlaneseq
        %v600 = vand.u32 %v599, 127
        %601 = vset.pattern.permute.xlu0 0
        %602 = vperm.xlu0 %601, %v598
        %v603 = vpop.permute.xlu0 %602
        %vm604 = vcmp.eq.s32.totalorder %v603, %v600
        %v605 = vsel %vm604, 1, 0
        %v606 = vcvt.s32.f32 %v605
        %v607 = vld [vmem:[%s2] sm:$0xff]
        %v608 = vld [vmem:[%s2 + $0x8] sm:$0xff]
        %v609 = vld [vmem:[%s2 + $0x10] sm:$0xff]
        %v610 = vld [vmem:[%s2 + $0x18] sm:$0xff]
        %v611 = vld [vmem:[%s2 + $0x20] sm:$0xff]
        %v612 = vld [vmem:[%s2 + $0x28] sm:$0xff]
        %v613 = vld [vmem:[%s2 + $0x30] sm:$0xff]
        %v614 = vld [vmem:[%s2 + $0x38] sm:$0xff]
        %v615 = vld [vmem:[%s1] sm:$0xff]
        %vm616 = vcmask 523264
        %v618 = vsel %vm616, %v606, 0
        %620 = vmatprep.subr.mxu0 0.0
        %621 = vmatpush1.msra.mxu0 %v607
        %622 = vmatprep.subr.mxu0 0.0
        %623 = vmatpush1.msra.mxu0 %v608
        %624 = vmatprep.subr.mxu0 0.0
        %625 = vmatpush1.msra.mxu0 %v609
        %626 = vmatprep.subr.mxu0 0.0
        %627 = vmatpush1.msra.mxu0 %v610
        %628 = vmatprep.subr.mxu0 0.0
        %629 = vmatpush1.msra.mxu0 %v611
        %630 = vmatprep.subr.mxu0 0.0
        %631 = vmatpush1.msra.mxu0 %v612
        %632 = vmatprep.subr.mxu0 0.0
        %633 = vmatpush1.msra.mxu0 %v613
        %634 = vmatprep.subr.mxu0 0.0
        %635 = vmatpush1.msra.mxu0 %v614
        %636 = vmatprep.subr.mxu0 0.0
        %637 = vmatpush1.msra.mxu0 0.0
        %638 = vmatprep.subr.mxu0 0.0
        %639 = vmatpush1.msra.mxu0 0.0
        %640 = vmatprep.subr.mxu0 0.0
        %641 = vmatpush1.msra.mxu0 0.0
        %642 = vmatprep.subr.mxu0 0.0
        %643 = vmatpush1.msra.mxu0 0.0
        %644 = vmatprep.subr.mxu0 0.0
        %645 = vmatpush1.msra.mxu0 0.0
        %646 = vmatprep.subr.mxu0 0.0
        %647 = vmatpush1.msra.mxu0 0.0
        %648 = vmatprep.subr.mxu0 0.0
        %649 = vmatpush1.msra.mxu0 0.0
        %650 = vmatprep.subr.mxu0 0.0
        %651 = vmatpush1.msra.mxu0 0.0
        %652 = vmatprep.subr.mxu0 0.0
        %653 = vmatpush1.msra.mxu0 0.0
        %654 = vmatprep.subr.mxu0 0.0
        %655 = vmatpush1.msra.mxu0 0.0
        %656 = vmatprep.subr.mxu0 0.0
        %657 = vmatpush1.msra.mxu0 0.0
        %658 = vmatprep.subr.mxu0 0.0
        %659 = vmatpush1.msra.mxu0 0.0
        %660 = vmatprep.subr.mxu0 0.0
        %661 = vmatpush1.msra.mxu0 0.0
        %662 = vmatprep.subr.mxu0 0.0
        %663 = vmatpush1.msra.mxu0 0.0
        %664 = vmatprep.subr.mxu0 0.0
        %665 = vmatpush1.msra.mxu0 0.0
        %666 = vmatprep.subr.mxu0 0.0
        %667 = vmatpush1.msra.mxu0 0.0
        %668 = vmatprep.subr.mxu0 0.0
        %669 = vmatpush1.msra.mxu0 0.0
        %670 = vmatprep.subr.mxu0 0.0
        %671 = vmatpush1.msra.mxu0 0.0
        %672 = vmatprep.subr.mxu0 0.0
        %673 = vmatpush1.msra.mxu0 0.0
        %674 = vmatprep.subr.mxu0 0.0
        %675 = vmatpush1.msra.mxu0 0.0
        %676 = vmatprep.subr.mxu0 0.0
        %677 = vmatpush1.msra.mxu0 0.0
        %678 = vmatprep.subr.mxu0 0.0
        %679 = vmatpush1.msra.mxu0 0.0
        %680 = vmatprep.subr.mxu0 0.0
        %681 = vmatpush1.msra.mxu0 0.0
        %682 = vmatprep.subr.mxu0 0.0
        %683 = vmatpush1.msra.mxu0 0.0
        %684 = vmatprep.mubr.f32.mxu0 0.0
        %685 = vmatmul.mubr.f32.gmra.mrb[0].mxu0 %v618
        %v686 = vpop.f32.mrb[0].mxu0
        %v687 = vadd.f32 %v615, %v686
        %v688 = vpop.f32.mrb[0].mxu0
        %689 = vdwg.mxu0
        %v690 = vlaneseq
        %v691 = vshrl.u32 %v690, 7
        %vm692 = vcmp.le.s32.totalorder %v600, %v691
        %v693 = vld [vmem:[%s3] sm:$0x1]
        %v694 = vld [vmem:[%s4] sm:$0x1]
        %vm695 = vcmask 261120
        %v696 = vsel %vm695, %v687, 0.0
        %697 = vadd.xlane.f32.xlu0 %v696
        %v698 = vpop.xlane.xlu0 %697
        %v699 = vrcp.pop 32.0
        %v700 = vmul.f32 %v698, %v699
        %v701 = vsub.f32 %v687, %v700
        %v702 = vmul.f32 %v701, %v701
        %v703 = vsel %vm695, %v702, 0.0
        %704 = vadd.xlane.f32.xlu0 %v703
        %v705 = vpop.xlane.xlu0 %704
        %v706 = vmul.f32 %v705, %v699
        %v707 = vadd.f32 %v706, 1e-05
        %v708 = vrsqrt.pop %v707
        %v709 = vmul.f32 %v701, %v708
        %v711 = vlaneseq
        %v712 = vshrl.u32 %v711, 7
        %v713 = vsub.s32 0, %v712
        %v714 = vrot.slane %v693, %v713
        %v716 = vmul.f32 %v709, %v714
        %v718 = vlaneseq
        %v719 = vshrl.u32 %v718, 7
        %v720 = vsub.s32 0, %v719
        %v721 = vrot.slane %v694, %v720
        %v723 = vadd.f32 %v716, %v721
        %v724 = vld [vmem:[%s5] sm:$0xff]
        %v725 = vld [vmem:[%s5 + $0x8] sm:$0xff]
        %v726 = vld [vmem:[%s5 + $0x10] sm:$0xff]
        %v727 = vld [vmem:[%s5 + $0x18] sm:$0xff]
        %v728 = vld [vmem:[%s6] sm:$0x1]
        %v730 = vlaneseq
        %v731 = vshrl.u32 %v730, 7
        %v732 = vsub.s32 0, %v731
        %v733 = vrot.slane %v728, %v732
        %v736 = vsel %vm695, %v723, 0
        %738 = vmatprep.subr.mxu0 0.0
        %739 = vmatpush1.msra.mxu0 %v724
        %740 = vmatprep.subr.mxu0 0.0
        %741 = vmatpush1.msra.mxu0 %v725
        %742 = vmatprep.subr.mxu0 0.0
        %743 = vmatpush1.msra.mxu0 %v726
        %744 = vmatprep.subr.mxu0 0.0
        %745 = vmatpush1.msra.mxu0 %v727
        %746 = vmatprep.subr.mxu0 0.0
        %747 = vmatpush1.msra.mxu0 0.0
        %748 = vmatprep.subr.mxu0 0.0
        %749 = vmatpush1.msra.mxu0 0.0
        %750 = vmatprep.subr.mxu0 0.0
        %751 = vmatpush1.msra.mxu0 0.0
        %752 = vmatprep.subr.mxu0 0.0
        %753 = vmatpush1.msra.mxu0 0.0
        %754 = vmatprep.subr.mxu0 0.0
        %755 = vmatpush1.msra.mxu0 0.0
        %756 = vmatprep.subr.mxu0 0.0
        %757 = vmatpush1.msra.mxu0 0.0
        %758 = vmatprep.subr.mxu0 0.0
        %759 = vmatpush1.msra.mxu0 0.0
        %760 = vmatprep.subr.mxu0 0.0
        %761 = vmatpush1.msra.mxu0 0.0
        %762 = vmatprep.subr.mxu0 0.0
        %763 = vmatpush1.msra.mxu0 0.0
        %764 = vmatprep.subr.mxu0 0.0
        %765 = vmatpush1.msra.mxu0 0.0
        %766 = vmatprep.subr.mxu0 0.0
        %767 = vmatpush1.msra.mxu0 0.0
        %768 = vmatprep.subr.mxu0 0.0
        %769 = vmatpush1.msra.mxu0 0.0
        %770 = vmatprep.subr.mxu0 0.0
        %771 = vmatpush1.msra.mxu0 0.0
        %772 = vmatprep.subr.mxu0 0.0
        %773 = vmatpush1.msra.mxu0 0.0
        %774 = vmatprep.subr.mxu0 0.0
        %775 = vmatpush1.msra.mxu0 0.0
        %776 = vmatprep.subr.mxu0 0.0
        %777 = vmatpush1.msra.mxu0 0.0
        %778 = vmatprep.subr.mxu0 0.0
        %779 = vmatpush1.msra.mxu0 0.0
        %780 = vmatprep.subr.mxu0 0.0
        %781 = vmatpush1.msra.mxu0 0.0
        %782 = vmatprep.subr.mxu0 0.0
        %783 = vmatpush1.msra.mxu0 0.0
        %784 = vmatprep.subr.mxu0 0.0
        %785 = vmatpush1.msra.mxu0 0.0
        %786 = vmatprep.subr.mxu0 0.0
        %787 = vmatpush1.msra.mxu0 0.0
        %788 = vmatprep.subr.mxu0 0.0
        %789 = vmatpush1.msra.mxu0 0.0
        %790 = vmatprep.subr.mxu0 0.0
        %791 = vmatpush1.msra.mxu0 0.0
        %792 = vmatprep.subr.mxu0 0.0
        %793 = vmatpush1.msra.mxu0 0.0
        %794 = vmatprep.subr.mxu0 0.0
        %795 = vmatpush1.msra.mxu0 0.0
        %796 = vmatprep.subr.mxu0 0.0
        %797 = vmatpush1.msra.mxu0 0.0
        %798 = vmatprep.subr.mxu0 0.0
        %799 = vmatpush1.msra.mxu0 0.0
        %800 = vmatprep.subr.mxu0 0.0
        %801 = vmatpush1.msra.mxu0 0.0
        %802 = vmatprep.mubr.f32.mxu0 0.0
        %803 = vmatmul.mubr.f32.gmra.mrb[0].mxu0 %v736
        %v804 = vpop.f32.mrb[0].mxu0
        %v805 = vadd.f32 %v733, %v804
        %v806 = vpop.f32.mrb[0].mxu0
        %807 = vdwg.mxu0
        %809 = vrot.lane.b32.xlu0 %v805, 96
        %v810 = vpop.permute.xlu0 %809
        %vm811 = vcmask 64512
        %v812 = vsel %vm811, %v805, 0
        %v814 = vsel %vm811, %v810, 0
        %816 = vmatprep.subr.mxu0 0.0
        %817 = vmatpush1.xpose.msra.mxu0 %v814
        %818 = vmatprep.subr.mxu0 0.0
        %819 = vmatpush1.xpose.msra.mxu0 0.0
        %820 = vmatprep.subr.mxu0 0.0
        %821 = vmatpush1.xpose.msra.mxu0 0.0
        %822 = vmatprep.subr.mxu0 0.0
        %823 = vmatpush1.xpose.msra.mxu0 0.0
        %824 = vmatprep.subr.mxu0 0.0
        %825 = vmatpush1.xpose.msra.mxu0 0.0
        %826 = vmatprep.subr.mxu0 0.0
        %827 = vmatpush1.xpose.msra.mxu0 0.0
        %828 = vmatprep.subr.mxu0 0.0
        %829 = vmatpush1.xpose.msra.mxu0 0.0
        %830 = vmatprep.subr.mxu0 0.0
        %831 = vmatpush1.xpose.msra.mxu0 0.0
        %832 = vmatprep.subr.mxu0 0.0
        %833 = vmatpush1.xpose.msra.mxu0 0.0
        %834 = vmatprep.subr.mxu0 0.0
        %835 = vmatpush1.xpose.msra.mxu0 0.0
        %836 = vmatprep.subr.mxu0 0.0
        %837 = vmatpush1.xpose.msra.mxu0 0.0
        %838 = vmatprep.subr.mxu0 0.0
        %839 = vmatpush1.xpose.msra.mxu0 0.0
        %840 = vmatprep.subr.mxu0 0.0
        %841 = vmatpush1.xpose.msra.mxu0 0.0
        %842 = vmatprep.subr.mxu0 0.0
        %843 = vmatpush1.xpose.msra.mxu0 0.0
        %844 = vmatprep.subr.mxu0 0.0
        %845 = vmatpush1.xpose.msra.mxu0 0.0
        %846 = vmatprep.subr.mxu0 0.0
        %847 = vmatpush1.xpose.msra.mxu0 0.0
        %848 = vmatprep.subr.mxu0 0.0
        %849 = vmatpush1.xpose.msra.mxu0 0.0
        %850 = vmatprep.subr.mxu0 0.0
        %851 = vmatpush1.xpose.msra.mxu0 0.0
        %852 = vmatprep.subr.mxu0 0.0
        %853 = vmatpush1.xpose.msra.mxu0 0.0
        %854 = vmatprep.subr.mxu0 0.0
        %855 = vmatpush1.xpose.msra.mxu0 0.0
        %856 = vmatprep.subr.mxu0 0.0
        %857 = vmatpush1.xpose.msra.mxu0 0.0
        %858 = vmatprep.subr.mxu0 0.0
        %859 = vmatpush1.xpose.msra.mxu0 0.0
        %860 = vmatprep.subr.mxu0 0.0
        %861 = vmatpush1.xpose.msra.mxu0 0.0
        %862 = vmatprep.subr.mxu0 0.0
        %863 = vmatpush1.xpose.msra.mxu0 0.0
        %864 = vmatprep.subr.mxu0 0.0
        %865 = vmatpush1.xpose.msra.mxu0 0.0
        %866 = vmatprep.subr.mxu0 0.0
        %867 = vmatpush1.xpose.msra.mxu0 0.0
        %868 = vmatprep.subr.mxu0 0.0
        %869 = vmatpush1.xpose.msra.mxu0 0.0
        %870 = vmatprep.subr.mxu0 0.0
        %871 = vmatpush1.xpose.msra.mxu0 0.0
        %872 = vmatprep.subr.mxu0 0.0
        %873 = vmatpush1.xpose.msra.mxu0 0.0
        %874 = vmatprep.subr.mxu0 0.0
        %875 = vmatpush1.xpose.msra.mxu0 0.0
        %876 = vmatprep.subr.mxu0 0.0
        %877 = vmatpush1.xpose.msra.mxu0 0.0
        %878 = vmatprep.subr.mxu0 0.0
        %879 = vmatpush1.xpose.msra.mxu0 0.0
        %880 = vmatprep.mubr.f32.mxu0 0.0
        %881 = vmatmul.mubr.f32.gmra.mrb[0].mxu0 %v812
        %v882 = vpop.f32.mrb[0].mxu0
        %v883 = vadd.f32 0.0, %v882
        %v884 = vpop.f32.mrb[0].mxu0
        %885 = vdwg.mxu0
        %v886 = vmul.f32 %v883, 0.35355338
        %v887 = vsel %vm692, %v886, -1e+30
        %v888 = vsel %vm811, %v887, -inf
        %889 = vmax.xlane.f32.xlu0 %v888
        %v890 = vpop.xlane.xlu0 %889
        %v891 = vsub.f32 %v887, %v890
        %v892 = vmul.f32 %v891, 1.442695
        %v893 = vpow.pop %v892
        %v894 = vsel %vm811, %v893, 0.0
        %895 = vadd.xlane.f32.xlu0 %v894
        %v896 = vpop.xlane.xlu0 %895
        %v897 = vrcp.pop %v896
        %v898 = vmul.f32 %v893, %v897
        %899 = vrot.lane.b32.xlu0 %v805, 64
        %v900 = vpop.permute.xlu0 %899
        %v903 = vsel %vm811, %v898, 0
        %905 = vmatprep.subr.mxu0 0.0
        %906 = vmatpush1.msra.mxu0 %v900
        %907 = vmatprep.subr.mxu0 0.0
        %908 = vmatpush1.msra.mxu0 0.0
        %909 = vmatprep.subr.mxu0 0.0
        %910 = vmatpush1.msra.mxu0 0.0
        %911 = vmatprep.subr.mxu0 0.0
        %912 = vmatpush1.msra.mxu0 0.0
        %913 = vmatprep.subr.mxu0 0.0
        %914 = vmatpush1.msra.mxu0 0.0
        %915 = vmatprep.subr.mxu0 0.0
        %916 = vmatpush1.msra.mxu0 0.0
        %917 = vmatprep.subr.mxu0 0.0
        %918 = vmatpush1.msra.mxu0 0.0
        %919 = vmatprep.subr.mxu0 0.0
        %920 = vmatpush1.msra.mxu0 0.0
        %921 = vmatprep.subr.mxu0 0.0
        %922 = vmatpush1.msra.mxu0 0.0
        %923 = vmatprep.subr.mxu0 0.0
        %924 = vmatpush1.msra.mxu0 0.0
        %925 = vmatprep.subr.mxu0 0.0
        %926 = vmatpush1.msra.mxu0 0.0
        %927 = vmatprep.subr.mxu0 0.0
        %928 = vmatpush1.msra.mxu0 0.0
        %929 = vmatprep.subr.mxu0 0.0
        %930 = vmatpush1.msra.mxu0 0.0
        %931 = vmatprep.subr.mxu0 0.0
        %932 = vmatpush1.msra.mxu0 0.0
        %933 = vmatprep.subr.mxu0 0.0
        %934 = vmatpush1.msra.mxu0 0.0
        %935 = vmatprep.subr.mxu0 0.0
        %936 = vmatpush1.msra.mxu0 0.0
        %937 = vmatprep.subr.mxu0 0.0
        %938 = vmatpush1.msra.mxu0 0.0
        %939 = vmatprep.subr.mxu0 0.0
        %940 = vmatpush1.msra.mxu0 0.0
        %941 = vmatprep.subr.mxu0 0.0
        %942 = vmatpush1.msra.mxu0 0.0
        %943 = vmatprep.subr.mxu0 0.0
        %944 = vmatpush1.msra.mxu0 0.0
        %945 = vmatprep.subr.mxu0 0.0
        %946 = vmatpush1.msra.mxu0 0.0
        %947 = vmatprep.subr.mxu0 0.0
        %948 = vmatpush1.msra.mxu0 0.0
        %949 = vmatprep.subr.mxu0 0.0
        %950 = vmatpush1.msra.mxu0 0.0
        %951 = vmatprep.subr.mxu0 0.0
        %952 = vmatpush1.msra.mxu0 0.0
        %953 = vmatprep.subr.mxu0 0.0
        %954 = vmatpush1.msra.mxu0 0.0
        %955 = vmatprep.subr.mxu0 0.0
        %956 = vmatpush1.msra.mxu0 0.0
        %957 = vmatprep.subr.mxu0 0.0
        %958 = vmatpush1.msra.mxu0 0.0
        %959 = vmatprep.subr.mxu0 0.0
        %960 = vmatpush1.msra.mxu0 0.0
        %961 = vmatprep.subr.mxu0 0.0
        %962 = vmatpush1.msra.mxu0 0.0
        %963 = vmatprep.subr.mxu0 0.0
        %964 = vmatpush1.msra.mxu0 0.0
        %965 = vmatprep.subr.mxu0 0.0
        %966 = vmatpush1.msra.mxu0 0.0
        %967 = vmatprep.subr.mxu0 0.0
        %968 = vmatpush1.msra.mxu0 0.0
        %969 = vmatprep.mubr.f32.mxu0 0.0
        %970 = vmatmul.mubr.f32.gmra.mrb[0].mxu0 %v903
        %v971 = vpop.f32.mrb[0].mxu0
        %v972 = vadd.f32 0.0, %v971
        %v973 = vpop.f32.mrb[0].mxu0
        %974 = vdwg.mxu0
        %975 = vrot.lane.b32.xlu0 %v805, 120
        %v976 = vpop.permute.xlu0 %975
        %977 = vrot.lane.b32.xlu0 %v805, 88
        %v978 = vpop.permute.xlu0 %977
        %v979 = vsel %vm811, %v976, 0
        %v981 = vsel %vm811, %v978, 0
        %983 = vmatprep.subr.mxu0 0.0
        %984 = vmatpush1.xpose.msra.mxu0 %v981
        %985 = vmatprep.subr.mxu0 0.0
        %986 = vmatpush1.xpose.msra.mxu0 0.0
        %987 = vmatprep.subr.mxu0 0.0
        %988 = vmatpush1.xpose.msra.mxu0 0.0
        %989 = vmatprep.subr.mxu0 0.0
        %990 = vmatpush1.xpose.msra.mxu0 0.0
        %991 = vmatprep.subr.mxu0 0.0
        %992 = vmatpush1.xpose.msra.mxu0 0.0
        %993 = vmatprep.subr.mxu0 0.0
        %994 = vmatpush1.xpose.msra.mxu0 0.0
        %995 = vmatprep.subr.mxu0 0.0
        %996 = vmatpush1.xpose.msra.mxu0 0.0
        %997 = vmatprep.subr.mxu0 0.0
        %998 = vmatpush1.xpose.msra.mxu0 0.0
        %999 = vmatprep.subr.mxu0 0.0
        %1000 = vmatpush1.xpose.msra.mxu0 0.0
        %1001 = vmatprep.subr.mxu0 0.0
        %1002 = vmatpush1.xpose.msra.mxu0 0.0
        %1003 = vmatprep.subr.mxu0 0.0
        %1004 = vmatpush1.xpose.msra.mxu0 0.0
        %1005 = vmatprep.subr.mxu0 0.0
        %1006 = vmatpush1.xpose.msra.mxu0 0.0
        %1007 = vmatprep.subr.mxu0 0.0
        %1008 = vmatpush1.xpose.msra.mxu0 0.0
        %1009 = vmatprep.subr.mxu0 0.0
        %1010 = vmatpush1.xpose.msra.mxu0 0.0
        %1011 = vmatprep.subr.mxu0 0.0
        %1012 = vmatpush1.xpose.msra.mxu0 0.0
        %1013 = vmatprep.subr.mxu0 0.0
        %1014 = vmatpush1.xpose.msra.mxu0 0.0
        %1015 = vmatprep.subr.mxu0 0.0
        %1016 = vmatpush1.xpose.msra.mxu0 0.0
        %1017 = vmatprep.subr.mxu0 0.0
        %1018 = vmatpush1.xpose.msra.mxu0 0.0
        %1019 = vmatprep.subr.mxu0 0.0
        %1020 = vmatpush1.xpose.msra.mxu0 0.0
        %1021 = vmatprep.subr.mxu0 0.0
        %1022 = vmatpush1.xpose.msra.mxu0 0.0
        %1023 = vmatprep.subr.mxu0 0.0
        %1024 = vmatpush1.xpose.msra.mxu0 0.0
        %1025 = vmatprep.subr.mxu0 0.0
        %1026 = vmatpush1.xpose.msra.mxu0 0.0
        %1027 = vmatprep.subr.mxu0 0.0
        %1028 = vmatpush1.xpose.msra.mxu0 0.0
        %1029 = vmatprep.subr.mxu0 0.0
        %1030 = vmatpush1.xpose.msra.mxu0 0.0
        %1031 = vmatprep.subr.mxu0 0.0
        %1032 = vmatpush1.xpose.msra.mxu0 0.0
        %1033 = vmatprep.subr.mxu0 0.0
        %1034 = vmatpush1.xpose.msra.mxu0 0.0
        %1035 = vmatprep.subr.mxu0 0.0
        %1036 = vmatpush1.xpose.msra.mxu0 0.0
        %1037 = vmatprep.subr.mxu0 0.0
        %1038 = vmatpush1.xpose.msra.mxu0 0.0
        %1039 = vmatprep.subr.mxu0 0.0
        %1040 = vmatpush1.xpose.msra.mxu0 0.0
        %1041 = vmatprep.subr.mxu0 0.0
        %1042 = vmatpush1.xpose.msra.mxu0 0.0
        %1043 = vmatprep.subr.mxu0 0.0
        %1044 = vmatpush1.xpose.msra.mxu0 0.0
        %1045 = vmatprep.subr.mxu0 0.0
        %1046 = vmatpush1.xpose.msra.mxu0 0.0
        %1047 = vmatprep.mubr.f32.mxu0 0.0
        %1048 = vmatmul.mubr.f32.gmra.mrb[0].mxu0 %v979
        %v1049 = vpop.f32.mrb[0].mxu0
        %v1050 = vadd.f32 0.0, %v1049
        %v1051 = vpop.f32.mrb[0].mxu0
        %1052 = vdwg.mxu0
        %v1053 = vmul.f32 %v1050, 0.35355338
        %v1054 = vsel %vm692, %v1053, -1e+30
        %v1055 = vsel %vm811, %v1054, -inf
        %1056 = vmax.xlane.f32.xlu0 %v1055
        %v1057 = vpop.xlane.xlu0 %1056
        %v1058 = vsub.f32 %v1054, %v1057
        %v1059 = vmul.f32 %v1058, 1.442695
        %v1060 = vpow.pop %v1059
        %v1061 = vsel %vm811, %v1060, 0.0
        %1062 = vadd.xlane.f32.xlu0 %v1061
        %v1063 = vpop.xlane.xlu0 %1062
        %v1064 = vrcp.pop %v1063
        %v1065 = vmul.f32 %v1060, %v1064
        %1066 = vrot.lane.b32.xlu0 %v805, 56
        %v1067 = vpop.permute.xlu0 %1066
        %v1070 = vsel %vm811, %v1065, 0
        %1072 = vmatprep.subr.mxu0 0.0
        %1073 = vmatpush1.msra.mxu0 %v1067
        %1074 = vmatprep.subr.mxu0 0.0
        %1075 = vmatpush1.msra.mxu0 0.0
        %1076 = vmatprep.subr.mxu0 0.0
        %1077 = vmatpush1.msra.mxu0 0.0
        %1078 = vmatprep.subr.mxu0 0.0
        %1079 = vmatpush1.msra.mxu0 0.0
        %1080 = vmatprep.subr.mxu0 0.0
        %1081 = vmatpush1.msra.mxu0 0.0
        %1082 = vmatprep.subr.mxu0 0.0
        %1083 = vmatpush1.msra.mxu0 0.0
        %1084 = vmatprep.subr.mxu0 0.0
        %1085 = vmatpush1.msra.mxu0 0.0
        %1086 = vmatprep.subr.mxu0 0.0
        %1087 = vmatpush1.msra.mxu0 0.0
        %1088 = vmatprep.subr.mxu0 0.0
        %1089 = vmatpush1.msra.mxu0 0.0
        %1090 = vmatprep.subr.mxu0 0.0
        %1091 = vmatpush1.msra.mxu0 0.0
        %1092 = vmatprep.subr.mxu0 0.0
        %1093 = vmatpush1.msra.mxu0 0.0
        %1094 = vmatprep.subr.mxu0 0.0
        %1095 = vmatpush1.msra.mxu0 0.0
        %1096 = vmatprep.subr.mxu0 0.0
        %1097 = vmatpush1.msra.mxu0 0.0
        %1098 = vmatprep.subr.mxu0 0.0
        %1099 = vmatpush1.msra.mxu0 0.0
        %1100 = vmatprep.subr.mxu0 0.0
        %1101 = vmatpush1.msra.mxu0 0.0
        %1102 = vmatprep.subr.mxu0 0.0
        %1103 = vmatpush1.msra.mxu0 0.0
        %1104 = vmatprep.subr.mxu0 0.0
        %1105 = vmatpush1.msra.mxu0 0.0
        %1106 = vmatprep.subr.mxu0 0.0
        %1107 = vmatpush1.msra.mxu0 0.0
        %1108 = vmatprep.subr.mxu0 0.0
        %1109 = vmatpush1.msra.mxu0 0.0
        %1110 = vmatprep.subr.mxu0 0.0
        %1111 = vmatpush1.msra.mxu0 0.0
        %1112 = vmatprep.subr.mxu0 0.0
        %1113 = vmatpush1.msra.mxu0 0.0
        %1114 = vmatprep.subr.mxu0 0.0
        %1115 = vmatpush1.msra.mxu0 0.0
        %1116 = vmatprep.subr.mxu0 0.0
        %1117 = vmatpush1.msra.mxu0 0.0
        %1118 = vmatprep.subr.mxu0 0.0
        %1119 = vmatpush1.msra.mxu0 0.0
        %1120 = vmatprep.subr.mxu0 0.0
        %1121 = vmatpush1.msra.mxu0 0.0
        %1122 = vmatprep.subr.mxu0 0.0
        %1123 = vmatpush1.msra.mxu0 0.0
        %1124 = vmatprep.subr.mxu0 0.0
        %1125 = vmatpush1.msra.mxu0 0.0
        %1126 = vmatprep.subr.mxu0 0.0
        %1127 = vmatpush1.msra.mxu0 0.0
        %1128 = vmatprep.subr.mxu0 0.0
        %1129 = vmatpush1.msra.mxu0 0.0
        %1130 = vmatprep.subr.mxu0 0.0
        %1131 = vmatpush1.msra.mxu0 0.0
        %1132 = vmatprep.subr.mxu0 0.0
        %1133 = vmatpush1.msra.mxu0 0.0
        %1134 = vmatprep.subr.mxu0 0.0
        %1135 = vmatpush1.msra.mxu0 0.0
        %1136 = vmatprep.mubr.f32.mxu0 0.0
        %1137 = vmatmul.mubr.f32.gmra.mrb[0].mxu0 %v1070
        %v1138 = vpop.f32.mrb[0].mxu0
        %v1139 = vadd.f32 0.0, %v1138
        %v1140 = vpop.f32.mrb[0].mxu0
        %1141 = vdwg.mxu0
        %1142 = vrot.lane.b32.xlu0 %v805, 112
        %v1143 = vpop.permute.xlu0 %1142
        %1144 = vrot.lane.b32.xlu0 %v805, 80
        %v1145 = vpop.permute.xlu0 %1144
        %v1146 = vsel %vm811, %v1143, 0
        %v1148 = vsel %vm811, %v1145, 0
        %1150 = vmatprep.subr.mxu0 0.0
        %1151 = vmatpush1.xpose.msra.mxu0 %v1148
        %1152 = vmatprep.subr.mxu0 0.0
        %1153 = vmatpush1.xpose.msra.mxu0 0.0
        %1154 = vmatprep.subr.mxu0 0.0
        %1155 = vmatpush1.xpose.msra.mxu0 0.0
        %1156 = vmatprep.subr.mxu0 0.0
        %1157 = vmatpush1.xpose.msra.mxu0 0.0
        %1158 = vmatprep.subr.mxu0 0.0
        %1159 = vmatpush1.xpose.msra.mxu0 0.0
        %1160 = vmatprep.subr.mxu0 0.0
        %1161 = vmatpush1.xpose.msra.mxu0 0.0
        %1162 = vmatprep.subr.mxu0 0.0
        %1163 = vmatpush1.xpose.msra.mxu0 0.0
        %1164 = vmatprep.subr.mxu0 0.0
        %1165 = vmatpush1.xpose.msra.mxu0 0.0
        %1166 = vmatprep.subr.mxu0 0.0
        %1167 = vmatpush1.xpose.msra.mxu0 0.0
        %1168 = vmatprep.subr.mxu0 0.0
        %1169 = vmatpush1.xpose.msra.mxu0 0.0
        %1170 = vmatprep.subr.mxu0 0.0
        %1171 = vmatpush1.xpose.msra.mxu0 0.0
        %1172 = vmatprep.subr.mxu0 0.0
        %1173 = vmatpush1.xpose.msra.mxu0 0.0
        %1174 = vmatprep.subr.mxu0 0.0
        %1175 = vmatpush1.xpose.msra.mxu0 0.0
        %1176 = vmatprep.subr.mxu0 0.0
        %1177 = vmatpush1.xpose.msra.mxu0 0.0
        %1178 = vmatprep.subr.mxu0 0.0
        %1179 = vmatpush1.xpose.msra.mxu0 0.0
        %1180 = vmatprep.subr.mxu0 0.0
        %1181 = vmatpush1.xpose.msra.mxu0 0.0
        %1182 = vmatprep.subr.mxu0 0.0
        %1183 = vmatpush1.xpose.msra.mxu0 0.0
        %1184 = vmatprep.subr.mxu0 0.0
        %1185 = vmatpush1.xpose.msra.mxu0 0.0
        %1186 = vmatprep.subr.mxu0 0.0
        %1187 = vmatpush1.xpose.msra.mxu0 0.0
        %1188 = vmatprep.subr.mxu0 0.0
        %1189 = vmatpush1.xpose.msra.mxu0 0.0
        %1190 = vmatprep.subr.mxu0 0.0
        %1191 = vmatpush1.xpose.msra.mxu0 0.0
        %1192 = vmatprep.subr.mxu0 0.0
        %1193 = vmatpush1.xpose.msra.mxu0 0.0
        %1194 = vmatprep.subr.mxu0 0.0
        %1195 = vmatpush1.xpose.msra.mxu0 0.0
        %1196 = vmatprep.subr.mxu0 0.0
        %1197 = vmatpush1.xpose.msra.mxu0 0.0
        %1198 = vmatprep.subr.mxu0 0.0
        %1199 = vmatpush1.xpose.msra.mxu0 0.0
        %1200 = vmatprep.subr.mxu0 0.0
        %1201 = vmatpush1.xpose.msra.mxu0 0.0
        %1202 = vmatprep.subr.mxu0 0.0
        %1203 = vmatpush1.xpose.msra.mxu0 0.0
        %1204 = vmatprep.subr.mxu0 0.0
        %1205 = vmatpush1.xpose.msra.mxu0 0.0
        %1206 = vmatprep.subr.mxu0 0.0
        %1207 = vmatpush1.xpose.msra.mxu0 0.0
        %1208 = vmatprep.subr.mxu0 0.0
        %1209 = vmatpush1.xpose.msra.mxu0 0.0
        %1210 = vmatprep.subr.mxu0 0.0
        %1211 = vmatpush1.xpose.msra.mxu0 0.0
        %1212 = vmatprep.subr.mxu0 0.0
        %1213 = vmatpush1.xpose.msra.mxu0 0.0
        %1214 = vmatprep.mubr.f32.mxu0 0.0
        %1215 = vmatmul.mubr.f32.gmra.mrb[0].mxu0 %v1146
        %v1216 = vpop.f32.mrb[0].mxu0
        %v1217 = vadd.f32 0.0, %v1216
        %v1218 = vpop.f32.mrb[0].mxu0
        %1219 = vdwg.mxu0
        %v1220 = vmul.f32 %v1217, 0.35355338
        %v1221 = vsel %vm692, %v1220, -1e+30
        %v1222 = vsel %vm811, %v1221, -inf
        %1223 = vmax.xlane.f32.xlu0 %v1222
        %v1224 = vpop.xlane.xlu0 %1223
        %v1225 = vsub.f32 %v1221, %v1224
        %v1226 = vmul.f32 %v1225, 1.442695
        %v1227 = vpow.pop %v1226
        %v1228 = vsel %vm811, %v1227, 0.0
        %1229 = vadd.xlane.f32.xlu0 %v1228
        %v1230 = vpop.xlane.xlu0 %1229
        %v1231 = vrcp.pop %v1230
        %v1232 = vmul.f32 %v1227, %v1231
        %1233 = vrot.lane.b32.xlu0 %v805, 48
        %v1234 = vpop.permute.xlu0 %1233
        %v1237 = vsel %vm811, %v1232, 0
        %1239 = vmatprep.subr.mxu0 0.0
        %1240 = vmatpush1.msra.mxu0 %v1234
        %1241 = vmatprep.subr.mxu0 0.0
        %1242 = vmatpush1.msra.mxu0 0.0
        %1243 = vmatprep.subr.mxu0 0.0
        %1244 = vmatpush1.msra.mxu0 0.0
        %1245 = vmatprep.subr.mxu0 0.0
        %1246 = vmatpush1.msra.mxu0 0.0
        %1247 = vmatprep.subr.mxu0 0.0
        %1248 = vmatpush1.msra.mxu0 0.0
        %1249 = vmatprep.subr.mxu0 0.0
        %1250 = vmatpush1.msra.mxu0 0.0
        %1251 = vmatprep.subr.mxu0 0.0
        %1252 = vmatpush1.msra.mxu0 0.0
        %1253 = vmatprep.subr.mxu0 0.0
        %1254 = vmatpush1.msra.mxu0 0.0
        %1255 = vmatprep.subr.mxu0 0.0
        %1256 = vmatpush1.msra.mxu0 0.0
        %1257 = vmatprep.subr.mxu0 0.0
        %1258 = vmatpush1.msra.mxu0 0.0
        %1259 = vmatprep.subr.mxu0 0.0
        %1260 = vmatpush1.msra.mxu0 0.0
        %1261 = vmatprep.subr.mxu0 0.0
        %1262 = vmatpush1.msra.mxu0 0.0
        %1263 = vmatprep.subr.mxu0 0.0
        %1264 = vmatpush1.msra.mxu0 0.0
        %1265 = vmatprep.subr.mxu0 0.0
        %1266 = vmatpush1.msra.mxu0 0.0
        %1267 = vmatprep.subr.mxu0 0.0
        %1268 = vmatpush1.msra.mxu0 0.0
        %1269 = vmatprep.subr.mxu0 0.0
        %1270 = vmatpush1.msra.mxu0 0.0
        %1271 = vmatprep.subr.mxu0 0.0
        %1272 = vmatpush1.msra.mxu0 0.0
        %1273 = vmatprep.subr.mxu0 0.0
        %1274 = vmatpush1.msra.mxu0 0.0
        %1275 = vmatprep.subr.mxu0 0.0
        %1276 = vmatpush1.msra.mxu0 0.0
        %1277 = vmatprep.subr.mxu0 0.0
        %1278 = vmatpush1.msra.mxu0 0.0
        %1279 = vmatprep.subr.mxu0 0.0
        %1280 = vmatpush1.msra.mxu0 0.0
        %1281 = vmatprep.subr.mxu0 0.0
        %1282 = vmatpush1.msra.mxu0 0.0
        %1283 = vmatprep.subr.mxu0 0.0
        %1284 = vmatpush1.msra.mxu0 0.0
        %1285 = vmatprep.subr.mxu0 0.0
        %1286 = vmatpush1.msra.mxu0 0.0
        %1287 = vmatprep.subr.mxu0 0.0
        %1288 = vmatpush1.msra.mxu0 0.0
        %1289 = vmatprep.subr.mxu0 0.0
        %1290 = vmatpush1.msra.mxu0 0.0
        %1291 = vmatprep.subr.mxu0 0.0
        %1292 = vmatpush1.msra.mxu0 0.0
        %1293 = vmatprep.subr.mxu0 0.0
        %1294 = vmatpush1.msra.mxu0 0.0
        %1295 = vmatprep.subr.mxu0 0.0
        %1296 = vmatpush1.msra.mxu0 0.0
        %1297 = vmatprep.subr.mxu0 0.0
        %1298 = vmatpush1.msra.mxu0 0.0
        %1299 = vmatprep.subr.mxu0 0.0
        %1300 = vmatpush1.msra.mxu0 0.0
        %1301 = vmatprep.subr.mxu0 0.0
        %1302 = vmatpush1.msra.mxu0 0.0
        %1303 = vmatprep.mubr.f32.mxu0 0.0
        %1304 = vmatmul.mubr.f32.gmra.mrb[0].mxu0 %v1237
        %v1305 = vpop.f32.mrb[0].mxu0
        %v1306 = vadd.f32 0.0, %v1305
        %v1307 = vpop.f32.mrb[0].mxu0
        %1308 = vdwg.mxu0
        %1309 = vrot.lane.b32.xlu0 %v805, 104
        %v1310 = vpop.permute.xlu0 %1309
        %1311 = vrot.lane.b32.xlu0 %v805, 72
        %v1312 = vpop.permute.xlu0 %1311
        %v1313 = vsel %vm811, %v1310, 0
        %v1315 = vsel %vm811, %v1312, 0
        %1317 = vmatprep.subr.mxu0 0.0
        %1318 = vmatpush1.xpose.msra.mxu0 %v1315
        %1319 = vmatprep.subr.mxu0 0.0
        %1320 = vmatpush1.xpose.msra.mxu0 0.0
        %1321 = vmatprep.subr.mxu0 0.0
        %1322 = vmatpush1.xpose.msra.mxu0 0.0
        %1323 = vmatprep.subr.mxu0 0.0
        %1324 = vmatpush1.xpose.msra.mxu0 0.0
        %1325 = vmatprep.subr.mxu0 0.0
        %1326 = vmatpush1.xpose.msra.mxu0 0.0
        %1327 = vmatprep.subr.mxu0 0.0
        %1328 = vmatpush1.xpose.msra.mxu0 0.0
        %1329 = vmatprep.subr.mxu0 0.0
        %1330 = vmatpush1.xpose.msra.mxu0 0.0
        %1331 = vmatprep.subr.mxu0 0.0
        %1332 = vmatpush1.xpose.msra.mxu0 0.0
        %1333 = vmatprep.subr.mxu0 0.0
        %1334 = vmatpush1.xpose.msra.mxu0 0.0
        %1335 = vmatprep.subr.mxu0 0.0
        %1336 = vmatpush1.xpose.msra.mxu0 0.0
        %1337 = vmatprep.subr.mxu0 0.0
        %1338 = vmatpush1.xpose.msra.mxu0 0.0
        %1339 = vmatprep.subr.mxu0 0.0
        %1340 = vmatpush1.xpose.msra.mxu0 0.0
        %1341 = vmatprep.subr.mxu0 0.0
        %1342 = vmatpush1.xpose.msra.mxu0 0.0
        %1343 = vmatprep.subr.mxu0 0.0
        %1344 = vmatpush1.xpose.msra.mxu0 0.0
        %1345 = vmatprep.subr.mxu0 0.0
        %1346 = vmatpush1.xpose.msra.mxu0 0.0
        %1347 = vmatprep.subr.mxu0 0.0
        %1348 = vmatpush1.xpose.msra.mxu0 0.0
        %1349 = vmatprep.subr.mxu0 0.0
        %1350 = vmatpush1.xpose.msra.mxu0 0.0
        %1351 = vmatprep.subr.mxu0 0.0
        %1352 = vmatpush1.xpose.msra.mxu0 0.0
        %1353 = vmatprep.subr.mxu0 0.0
        %1354 = vmatpush1.xpose.msra.mxu0 0.0
        %1355 = vmatprep.subr.mxu0 0.0
        %1356 = vmatpush1.xpose.msra.mxu0 0.0
        %1357 = vmatprep.subr.mxu0 0.0
        %1358 = vmatpush1.xpose.msra.mxu0 0.0
        %1359 = vmatprep.subr.mxu0 0.0
        %1360 = vmatpush1.xpose.msra.mxu0 0.0
        %1361 = vmatprep.subr.mxu0 0.0
        %1362 = vmatpush1.xpose.msra.mxu0 0.0
        %1363 = vmatprep.subr.mxu0 0.0
        %1364 = vmatpush1.xpose.msra.mxu0 0.0
        %1365 = vmatprep.subr.mxu0 0.0
        %1366 = vmatpush1.xpose.msra.mxu0 0.0
        %1367 = vmatprep.subr.mxu0 0.0
        %1368 = vmatpush1.xpose.msra.mxu0 0.0
        %1369 = vmatprep.subr.mxu0 0.0
        %1370 = vmatpush1.xpose.msra.mxu0 0.0
        %1371 = vmatprep.subr.mxu0 0.0
        %1372 = vmatpush1.xpose.msra.mxu0 0.0
        %1373 = vmatprep.subr.mxu0 0.0
        %1374 = vmatpush1.xpose.msra.mxu0 0.0
        %1375 = vmatprep.subr.mxu0 0.0
        %1376 = vmatpush1.xpose.msra.mxu0 0.0
        %1377 = vmatprep.subr.mxu0 0.0
        %1378 = vmatpush1.xpose.msra.mxu0 0.0
        %1379 = vmatprep.subr.mxu0 0.0
        %1380 = vmatpush1.xpose.msra.mxu0 0.0
        %1381 = vmatprep.mubr.f32.mxu0 0.0
        %1382 = vmatmul.mubr.f32.gmra.mrb[0].mxu0 %v1313
        %v1383 = vpop.f32.mrb[0].mxu0
        %v1384 = vadd.f32 0.0, %v1383
        %v1385 = vpop.f32.mrb[0].mxu0
        %1386 = vdwg.mxu0
        %v1387 = vmul.f32 %v1384, 0.35355338
        %v1388 = vsel %vm692, %v1387, -1e+30
        %v1389 = vsel %vm811, %v1388, -inf
        %1390 = vmax.xlane.f32.xlu0 %v1389
        %v1391 = vpop.xlane.xlu0 %1390
        %v1392 = vsub.f32 %v1388, %v1391
        %v1393 = vmul.f32 %v1392, 1.442695
        %v1394 = vpow.pop %v1393
        %v1395 = vsel %vm811, %v1394, 0.0
        %1396 = vadd.xlane.f32.xlu0 %v1395
        %v1397 = vpop.xlane.xlu0 %1396
        %v1398 = vrcp.pop %v1397
        %v1399 = vmul.f32 %v1394, %v1398
        %1400 = vrot.lane.b32.xlu0 %v805, 40
        %v1401 = vpop.permute.xlu0 %1400
        %v1404 = vsel %vm811, %v1399, 0
        %1406 = vmatprep.subr.mxu0 0.0
        %1407 = vmatpush1.msra.mxu0 %v1401
        %1408 = vmatprep.subr.mxu0 0.0
        %1409 = vmatpush1.msra.mxu0 0.0
        %1410 = vmatprep.subr.mxu0 0.0
        %1411 = vmatpush1.msra.mxu0 0.0
        %1412 = vmatprep.subr.mxu0 0.0
        %1413 = vmatpush1.msra.mxu0 0.0
        %1414 = vmatprep.subr.mxu0 0.0
        %1415 = vmatpush1.msra.mxu0 0.0
        %1416 = vmatprep.subr.mxu0 0.0
        %1417 = vmatpush1.msra.mxu0 0.0
        %1418 = vmatprep.subr.mxu0 0.0
        %1419 = vmatpush1.msra.mxu0 0.0
        %1420 = vmatprep.subr.mxu0 0.0
        %1421 = vmatpush1.msra.mxu0 0.0
        %1422 = vmatprep.subr.mxu0 0.0
        %1423 = vmatpush1.msra.mxu0 0.0
        %1424 = vmatprep.subr.mxu0 0.0
        %1425 = vmatpush1.msra.mxu0 0.0
        %1426 = vmatprep.subr.mxu0 0.0
        %1427 = vmatpush1.msra.mxu0 0.0
        %1428 = vmatprep.subr.mxu0 0.0
        %1429 = vmatpush1.msra.mxu0 0.0
        %1430 = vmatprep.subr.mxu0 0.0
        %1431 = vmatpush1.msra.mxu0 0.0
        %1432 = vmatprep.subr.mxu0 0.0
        %1433 = vmatpush1.msra.mxu0 0.0
        %1434 = vmatprep.subr.mxu0 0.0
        %1435 = vmatpush1.msra.mxu0 0.0
        %1436 = vmatprep.subr.mxu0 0.0
        %1437 = vmatpush1.msra.mxu0 0.0
        %1438 = vmatprep.subr.mxu0 0.0
        %1439 = vmatpush1.msra.mxu0 0.0
        %1440 = vmatprep.subr.mxu0 0.0
        %1441 = vmatpush1.msra.mxu0 0.0
        %1442 = vmatprep.subr.mxu0 0.0
        %1443 = vmatpush1.msra.mxu0 0.0
        %1444 = vmatprep.subr.mxu0 0.0
        %1445 = vmatpush1.msra.mxu0 0.0
        %1446 = vmatprep.subr.mxu0 0.0
        %1447 = vmatpush1.msra.mxu0 0.0
        %1448 = vmatprep.subr.mxu0 0.0
        %1449 = vmatpush1.msra.mxu0 0.0
        %1450 = vmatprep.subr.mxu0 0.0
        %1451 = vmatpush1.msra.mxu0 0.0
        %1452 = vmatprep.subr.mxu0 0.0
        %1453 = vmatpush1.msra.mxu0 0.0
        %1454 = vmatprep.subr.mxu0 0.0
        %1455 = vmatpush1.msra.mxu0 0.0
        %1456 = vmatprep.subr.mxu0 0.0
        %1457 = vmatpush1.msra.mxu0 0.0
        %1458 = vmatprep.subr.mxu0 0.0
        %1459 = vmatpush1.msra.mxu0 0.0
        %1460 = vmatprep.subr.mxu0 0.0
        %1461 = vmatpush1.msra.mxu0 0.0
        %1462 = vmatprep.subr.mxu0 0.0
        %1463 = vmatpush1.msra.mxu0 0.0
        %1464 = vmatprep.subr.mxu0 0.0
        %1465 = vmatpush1.msra.mxu0 0.0
        %1466 = vmatprep.subr.mxu0 0.0
        %1467 = vmatpush1.msra.mxu0 0.0
        %1468 = vmatprep.subr.mxu0 0.0
        %1469 = vmatpush1.msra.mxu0 0.0
        %1470 = vmatprep.mubr.f32.mxu0 0.0
        %1471 = vmatmul.mubr.f32.gmra.mrb[0].mxu0 %v1404
        %v1472 = vpop.f32.mrb[0].mxu0
        %v1473 = vadd.f32 0.0, %v1472
        %v1474 = vpop.f32.mrb[0].mxu0
        %1475 = vdwg.mxu0
        %1477 = vrot.lane.b32.xlu0 %v1139, 8
        %v1478 = vpop.permute.xlu0 %1477
        %1481 = vrot.lane.b32.xlu0 %v1306, 16
        %v1482 = vpop.permute.xlu0 %1481
        %1485 = vrot.lane.b32.xlu0 %v1473, 24
        %v1486 = vpop.permute.xlu0 %1485
        %v1488 = vsel %vm811, %v972, %v1478
        %vm1489 = vcmask 130048
        %v1490 = vsel %vm1489, %v1488, %v1482
        %vm1491 = vcmask 195584
        %v1492 = vsel %vm1491, %v1490, %v1486
        %v1493 = vld [vmem:[%s7] sm:$0xff]
        %v1494 = vld [vmem:[%s7 + $0x8] sm:$0xff]
        %v1495 = vld [vmem:[%s7 + $0x10] sm:$0xff]
        %v1496 = vld [vmem:[%s7 + $0x18] sm:$0xff]
        %v1498 = vsel %vm695, %v1492, 0
        %1500 = vmatprep.subr.mxu0 0.0
        %1501 = vmatpush1.msra.mxu0 %v1493
        %1502 = vmatprep.subr.mxu0 0.0
        %1503 = vmatpush1.msra.mxu0 %v1494
        %1504 = vmatprep.subr.mxu0 0.0
        %1505 = vmatpush1.msra.mxu0 %v1495
        %1506 = vmatprep.subr.mxu0 0.0
        %1507 = vmatpush1.msra.mxu0 %v1496
        %1508 = vmatprep.subr.mxu0 0.0
        %1509 = vmatpush1.msra.mxu0 0.0
        %1510 = vmatprep.subr.mxu0 0.0
        %1511 = vmatpush1.msra.mxu0 0.0
        %1512 = vmatprep.subr.mxu0 0.0
        %1513 = vmatpush1.msra.mxu0 0.0
        %1514 = vmatprep.subr.mxu0 0.0
        %1515 = vmatpush1.msra.mxu0 0.0
        %1516 = vmatprep.subr.mxu0 0.0
        %1517 = vmatpush1.msra.mxu0 0.0
        %1518 = vmatprep.subr.mxu0 0.0
        %1519 = vmatpush1.msra.mxu0 0.0
        %1520 = vmatprep.subr.mxu0 0.0
        %1521 = vmatpush1.msra.mxu0 0.0
        %1522 = vmatprep.subr.mxu0 0.0
        %1523 = vmatpush1.msra.mxu0 0.0
        %1524 = vmatprep.subr.mxu0 0.0
        %1525 = vmatpush1.msra.mxu0 0.0
        %1526 = vmatprep.subr.mxu0 0.0
        %1527 = vmatpush1.msra.mxu0 0.0
        %1528 = vmatprep.subr.mxu0 0.0
        %1529 = vmatpush1.msra.mxu0 0.0
        %1530 = vmatprep.subr.mxu0 0.0
        %1531 = vmatpush1.msra.mxu0 0.0
        %1532 = vmatprep.subr.mxu0 0.0
        %1533 = vmatpush1.msra.mxu0 0.0
        %1534 = vmatprep.subr.mxu0 0.0
        %1535 = vmatpush1.msra.mxu0 0.0
        %1536 = vmatprep.subr.mxu0 0.0
        %1537 = vmatpush1.msra.mxu0 0.0
        %1538 = vmatprep.subr.mxu0 0.0
        %1539 = vmatpush1.msra.mxu0 0.0
        %1540 = vmatprep.subr.mxu0 0.0
        %1541 = vmatpush1.msra.mxu0 0.0
        %1542 = vmatprep.subr.mxu0 0.0
        %1543 = vmatpush1.msra.mxu0 0.0
        %1544 = vmatprep.subr.mxu0 0.0
        %1545 = vmatpush1.msra.mxu0 0.0
        %1546 = vmatprep.subr.mxu0 0.0
        %1547 = vmatpush1.msra.mxu0 0.0
        %1548 = vmatprep.subr.mxu0 0.0
        %1549 = vmatpush1.msra.mxu0 0.0
        %1550 = vmatprep.subr.mxu0 0.0
        %1551 = vmatpush1.msra.mxu0 0.0
        %1552 = vmatprep.subr.mxu0 0.0
        %1553 = vmatpush1.msra.mxu0 0.0
        %1554 = vmatprep.subr.mxu0 0.0
        %1555 = vmatpush1.msra.mxu0 0.0
        %1556 = vmatprep.subr.mxu0 0.0
        %1557 = vmatpush1.msra.mxu0 0.0
        %1558 = vmatprep.subr.mxu0 0.0
        %1559 = vmatpush1.msra.mxu0 0.0
        %1560 = vmatprep.subr.mxu0 0.0
        %1561 = vmatpush1.msra.mxu0 0.0
        %1562 = vmatprep.subr.mxu0 0.0
        %1563 = vmatpush1.msra.mxu0 0.0
        %1564 = vmatprep.mubr.f32.mxu0 0.0
        %1565 = vmatmul.mubr.f32.gmra.mrb[0].mxu0 %v1498
        %v1566 = vpop.f32.mrb[0].mxu0
        %v1567 = vadd.f32 0.0, %v1566
        %v1568 = vpop.f32.mrb[0].mxu0
        %1569 = vdwg.mxu0
        %v1570 = vadd.f32 %v687, %v1567
        %v1571 = vld [vmem:[%s8] sm:$0x1]
        %v1573 = vlaneseq
        %v1574 = vshrl.u32 %v1573, 7
        %v1575 = vsub.s32 0, %v1574
        %v1576 = vrot.slane %v1571, %v1575
        %v1578 = vadd.f32 %v1570, %v1576
        %v1579 = vld [vmem:[%s9] sm:$0x1]
        %v1580 = vld [vmem:[%s10] sm:$0x1]
        %v1581 = vsel %vm695, %v1578, 0.0
        %1582 = vadd.xlane.f32.xlu0 %v1581
        %v1583 = vpop.xlane.xlu0 %1582
        %v1584 = vmul.f32 %v1583, %v699
        %v1585 = vsub.f32 %v1578, %v1584
        %v1586 = vmul.f32 %v1585, %v1585
        %v1587 = vsel %vm695, %v1586, 0.0
        %1588 = vadd.xlane.f32.xlu0 %v1587
        %v1589 = vpop.xlane.xlu0 %1588
        %v1590 = vmul.f32 %v1589, %v699
        %v1591 = vadd.f32 %v1590, 1e-05
        %v1592 = vrsqrt.pop %v1591
        %v1593 = vmul.f32 %v1585, %v1592
        %v1595 = vlaneseq
        %v1596 = vshrl.u32 %v1595, 7
        %v1597 = vsub.s32 0, %v1596
        %v1598 = vrot.slane %v1579, %v1597
        %v1600 = vmul.f32 %v1593, %v1598
        %v1602 = vlaneseq
        %v1603 = vshrl.u32 %v1602, 7
        %v1604 = vsub.s32 0, %v1603
        %v1605 = vrot.slane %v1580, %v1604
        %v1607 = vadd.f32 %v1600, %v1605
        %v1608 = vld [vmem:[%s11] sm:$0xff]
        %v1609 = vld [vmem:[%s11 + $0x8] sm:$0xff]
        %v1610 = vld [vmem:[%s11 + $0x10] sm:$0xff]
        %v1611 = vld [vmem:[%s11 + $0x18] sm:$0xff]
        %v1612 = vld [vmem:[%s12] sm:$0x1]
        %v1614 = vlaneseq
        %v1615 = vshrl.u32 %v1614, 7
        %v1616 = vsub.s32 0, %v1615
        %v1617 = vrot.slane %v1612, %v1616
        %v1620 = vsel %vm695, %v1607, 0
        %1622 = vmatprep.subr.mxu0 0.0
        %1623 = vmatpush1.msra.mxu0 %v1608
        %1624 = vmatprep.subr.mxu0 0.0
        %1625 = vmatpush1.msra.mxu0 %v1609
        %1626 = vmatprep.subr.mxu0 0.0
        %1627 = vmatpush1.msra.mxu0 %v1610
        %1628 = vmatprep.subr.mxu0 0.0
        %1629 = vmatpush1.msra.mxu0 %v1611
        %1630 = vmatprep.subr.mxu0 0.0
        %1631 = vmatpush1.msra.mxu0 0.0
        %1632 = vmatprep.subr.mxu0 0.0
        %1633 = vmatpush1.msra.mxu0 0.0
        %1634 = vmatprep.subr.mxu0 0.0
        %1635 = vmatpush1.msra.mxu0 0.0
        %1636 = vmatprep.subr.mxu0 0.0
        %1637 = vmatpush1.msra.mxu0 0.0
        %1638 = vmatprep.subr.mxu0 0.0
        %1639 = vmatpush1.msra.mxu0 0.0
        %1640 = vmatprep.subr.mxu0 0.0
        %1641 = vmatpush1.msra.mxu0 0.0
        %1642 = vmatprep.subr.mxu0 0.0
        %1643 = vmatpush1.msra.mxu0 0.0
        %1644 = vmatprep.subr.mxu0 0.0
        %1645 = vmatpush1.msra.mxu0 0.0
        %1646 = vmatprep.subr.mxu0 0.0
        %1647 = vmatpush1.msra.mxu0 0.0
        %1648 = vmatprep.subr.mxu0 0.0
        %1649 = vmatpush1.msra.mxu0 0.0
        %1650 = vmatprep.subr.mxu0 0.0
        %1651 = vmatpush1.msra.mxu0 0.0
        %1652 = vmatprep.subr.mxu0 0.0
        %1653 = vmatpush1.msra.mxu0 0.0
        %1654 = vmatprep.subr.mxu0 0.0
        %1655 = vmatpush1.msra.mxu0 0.0
        %1656 = vmatprep.subr.mxu0 0.0
        %1657 = vmatpush1.msra.mxu0 0.0
        %1658 = vmatprep.subr.mxu0 0.0
        %1659 = vmatpush1.msra.mxu0 0.0
        %1660 = vmatprep.subr.mxu0 0.0
        %1661 = vmatpush1.msra.mxu0 0.0
        %1662 = vmatprep.subr.mxu0 0.0
        %1663 = vmatpush1.msra.mxu0 0.0
        %1664 = vmatprep.subr.mxu0 0.0
        %1665 = vmatpush1.msra.mxu0 0.0
        %1666 = vmatprep.subr.mxu0 0.0
        %1667 = vmatpush1.msra.mxu0 0.0
        %1668 = vmatprep.subr.mxu0 0.0
        %1669 = vmatpush1.msra.mxu0 0.0
        %1670 = vmatprep.subr.mxu0 0.0
        %1671 = vmatpush1.msra.mxu0 0.0
        %1672 = vmatprep.subr.mxu0 0.0
        %1673 = vmatpush1.msra.mxu0 0.0
        %1674 = vmatprep.subr.mxu0 0.0
        %1675 = vmatpush1.msra.mxu0 0.0
        %1676 = vmatprep.subr.mxu0 0.0
        %1677 = vmatpush1.msra.mxu0 0.0
        %1678 = vmatprep.subr.mxu0 0.0
        %1679 = vmatpush1.msra.mxu0 0.0
        %1680 = vmatprep.subr.mxu0 0.0
        %1681 = vmatpush1.msra.mxu0 0.0
        %1682 = vmatprep.subr.mxu0 0.0
        %1683 = vmatpush1.msra.mxu0 0.0
        %1684 = vmatprep.subr.mxu0 0.0
        %1685 = vmatpush1.msra.mxu0 0.0
        %1686 = vmatprep.mubr.f32.mxu0 0.0
        %1687 = vmatmul.mubr.f32.gmra.mrb[0].mxu0 %v1620
        %v1688 = vpop.f32.mrb[0].mxu0
        %v1689 = vadd.f32 %v1617, %v1688
        %v1690 = vpop.f32.mrb[0].mxu0
        %1691 = vdwg.mxu0
        %v1692 = vmul.f32 %v1689, %v1689
        %v1693 = vmul.f32 %v1689, %v1692
        %v1694 = vmul.f32 %v1693, 0.044715
        %v1695 = vadd.f32 %v1689, %v1694
        %v1696 = vmul.f32 %v1695, 0.7978846
        %v1697 = vtanh.pop %v1696
        %v1698 = vadd.f32 %v1697, 1.0
        %v1699 = vmul.f32 %v1698, 0.5
        %v1700 = vmul.f32 %v1689, %v1699
        %v1701 = vld [vmem:[%s13] sm:$0xff]
        %v1702 = vld [vmem:[%s13 + $0x8] sm:$0xff]
        %v1703 = vld [vmem:[%s13 + $0x10] sm:$0xff]
        %v1704 = vld [vmem:[%s13 + $0x18] sm:$0xff]
        %v1705 = vld [vmem:[%s13 + $0x20] sm:$0xff]
        %v1706 = vld [vmem:[%s13 + $0x28] sm:$0xff]
        %v1707 = vld [vmem:[%s13 + $0x30] sm:$0xff]
        %v1708 = vld [vmem:[%s13 + $0x38] sm:$0xff]
        %v1710 = vsel %vm616, %v1700, 0
        %1712 = vmatprep.subr.mxu0 0.0
        %1713 = vmatpush1.msra.mxu0 %v1701
        %1714 = vmatprep.subr.mxu0 0.0
        %1715 = vmatpush1.msra.mxu0 %v1702
        %1716 = vmatprep.subr.mxu0 0.0
        %1717 = vmatpush1.msra.mxu0 %v1703
        %1718 = vmatprep.subr.mxu0 0.0
        %1719 = vmatpush1.msra.mxu0 %v1704
        %1720 = vmatprep.subr.mxu0 0.0
        %1721 = vmatpush1.msra.mxu0 %v1705
        %1722 = vmatprep.subr.mxu0 0.0
        %1723 = vmatpush1.msra.mxu0 %v1706
        %1724 = vmatprep.subr.mxu0 0.0
        %1725 = vmatpush1.msra.mxu0 %v1707
        %1726 = vmatprep.subr.mxu0 0.0
        %1727 = vmatpush1.msra.mxu0 %v1708
        %1728 = vmatprep.subr.mxu0 0.0
        %1729 = vmatpush1.msra.mxu0 0.0
        %1730 = vmatprep.subr.mxu0 0.0
        %1731 = vmatpush1.msra.mxu0 0.0
        %1732 = vmatprep.subr.mxu0 0.0
        %1733 = vmatpush1.msra.mxu0 0.0
        %1734 = vmatprep.subr.mxu0 0.0
        %1735 = vmatpush1.msra.mxu0 0.0
        %1736 = vmatprep.subr.mxu0 0.0
        %1737 = vmatpush1.msra.mxu0 0.0
        %1738 = vmatprep.subr.mxu0 0.0
        %1739 = vmatpush1.msra.mxu0 0.0
        %1740 = vmatprep.subr.mxu0 0.0
        %1741 = vmatpush1.msra.mxu0 0.0
        %1742 = vmatprep.subr.mxu0 0.0
        %1743 = vmatpush1.msra.mxu0 0.0
        %1744 = vmatprep.subr.mxu0 0.0
        %1745 = vmatpush1.msra.mxu0 0.0
        %1746 = vmatprep.subr.mxu0 0.0
        %1747 = vmatpush1.msra.mxu0 0.0
        %1748 = vmatprep.subr.mxu0 0.0
        %1749 = vmatpush1.msra.mxu0 0.0
        %1750 = vmatprep.subr.mxu0 0.0
        %1751 = vmatpush1.msra.mxu0 0.0
        %1752 = vmatprep.subr.mxu0 0.0
        %1753 = vmatpush1.msra.mxu0 0.0
        %1754 = vmatprep.subr.mxu0 0.0
        %1755 = vmatpush1.msra.mxu0 0.0
        %1756 = vmatprep.subr.mxu0 0.0
        %1757 = vmatpush1.msra.mxu0 0.0
        %1758 = vmatprep.subr.mxu0 0.0
        %1759 = vmatpush1.msra.mxu0 0.0
        %1760 = vmatprep.subr.mxu0 0.0
        %1761 = vmatpush1.msra.mxu0 0.0
        %1762 = vmatprep.subr.mxu0 0.0
        %1763 = vmatpush1.msra.mxu0 0.0
        %1764 = vmatprep.subr.mxu0 0.0
        %1765 = vmatpush1.msra.mxu0 0.0
        %1766 = vmatprep.subr.mxu0 0.0
        %1767 = vmatpush1.msra.mxu0 0.0
        %1768 = vmatprep.subr.mxu0 0.0
        %1769 = vmatpush1.msra.mxu0 0.0
        %1770 = vmatprep.subr.mxu0 0.0
        %1771 = vmatpush1.msra.mxu0 0.0
        %1772 = vmatprep.subr.mxu0 0.0
        %1773 = vmatpush1.msra.mxu0 0.0
        %1774 = vmatprep.subr.mxu0 0.0
        %1775 = vmatpush1.msra.mxu0 0.0
        %1776 = vmatprep.mubr.f32.mxu0 0.0
        %1777 = vmatmul.mubr.f32.gmra.mrb[0].mxu0 %v1710
        %v1778 = vpop.f32.mrb[0].mxu0
        %v1779 = vadd.f32 0.0, %v1778
        %v1780 = vpop.f32.mrb[0].mxu0
        %1781 = vdwg.mxu0
        %v1782 = vadd.f32 %v1578, %v1779
        %v1783 = vld [vmem:[%s14] sm:$0x1]
        %v1785 = vlaneseq
        %v1786 = vshrl.u32 %v1785, 7
        %v1787 = vsub.s32 0, %v1786
        %v1788 = vrot.slane %v1783, %v1787
        %v1790 = vadd.f32 %v1782, %v1788
        %s1791 = scalar_lea.vmem %s3, 1
        %v1792 = vld [vmem:[%s1791] sm:$0x1]
        %s1793 = scalar_lea.vmem %s4, 1
        %v1794 = vld [vmem:[%s1793] sm:$0x1]
        %v1795 = vsel %vm695, %v1790, 0.0
        %1796 = vadd.xlane.f32.xlu0 %v1795
        %v1797 = vpop.xlane.xlu0 %1796
        %v1798 = vmul.f32 %v1797, %v699
        %v1799 = vsub.f32 %v1790, %v1798
        %v1800 = vmul.f32 %v1799, %v1799
        %v1801 = vsel %vm695, %v1800, 0.0
        %1802 = vadd.xlane.f32.xlu0 %v1801
        %v1803 = vpop.xlane.xlu0 %1802
        %v1804 = vmul.f32 %v1803, %v699
        %v1805 = vadd.f32 %v1804, 1e-05
        %v1806 = vrsqrt.pop %v1805
        %v1807 = vmul.f32 %v1799, %v1806
        %v1809 = vlaneseq
        %v1810 = vshrl.u32 %v1809, 7
        %v1811 = vsub.s32 0, %v1810
        %v1812 = vrot.slane %v1792, %v1811
        %v1814 = vmul.f32 %v1807, %v1812
        %v1816 = vlaneseq
        %v1817 = vshrl.u32 %v1816, 7
        %v1818 = vsub.s32 0, %v1817
        %v1819 = vrot.slane %v1794, %v1818
        %v1821 = vadd.f32 %v1814, %v1819
        %s1822 = scalar_lea.vmem %s5, 32
        %v1823 = vld [vmem:[%s1822] sm:$0xff]
        %v1824 = vld [vmem:[%s1822 + $0x8] sm:$0xff]
        %v1825 = vld [vmem:[%s1822 + $0x10] sm:$0xff]
        %v1826 = vld [vmem:[%s1822 + $0x18] sm:$0xff]
        %s1827 = scalar_lea.vmem %s6, 1
        %v1828 = vld [vmem:[%s1827] sm:$0x1]
        %v1830 = vlaneseq
        %v1831 = vshrl.u32 %v1830, 7
        %v1832 = vsub.s32 0, %v1831
        %v1833 = vrot.slane %v1828, %v1832
        %v1836 = vsel %vm695, %v1821, 0
        %1838 = vmatprep.subr.mxu0 0.0
        %1839 = vmatpush1.msra.mxu0 %v1823
        %1840 = vmatprep.subr.mxu0 0.0
        %1841 = vmatpush1.msra.mxu0 %v1824
        %1842 = vmatprep.subr.mxu0 0.0
        %1843 = vmatpush1.msra.mxu0 %v1825
        %1844 = vmatprep.subr.mxu0 0.0
        %1845 = vmatpush1.msra.mxu0 %v1826
        %1846 = vmatprep.subr.mxu0 0.0
        %1847 = vmatpush1.msra.mxu0 0.0
        %1848 = vmatprep.subr.mxu0 0.0
        %1849 = vmatpush1.msra.mxu0 0.0
        %1850 = vmatprep.subr.mxu0 0.0
        %1851 = vmatpush1.msra.mxu0 0.0
        %1852 = vmatprep.subr.mxu0 0.0
        %1853 = vmatpush1.msra.mxu0 0.0
        %1854 = vmatprep.subr.mxu0 0.0
        %1855 = vmatpush1.msra.mxu0 0.0
        %1856 = vmatprep.subr.mxu0 0.0
        %1857 = vmatpush1.msra.mxu0 0.0
        %1858 = vmatprep.subr.mxu0 0.0
        %1859 = vmatpush1.msra.mxu0 0.0
        %1860 = vmatprep.subr.mxu0 0.0
        %1861 = vmatpush1.msra.mxu0 0.0
        %1862 = vmatprep.subr.mxu0 0.0
        %1863 = vmatpush1.msra.mxu0 0.0
        %1864 = vmatprep.subr.mxu0 0.0
        %1865 = vmatpush1.msra.mxu0 0.0
        %1866 = vmatprep.subr.mxu0 0.0
        %1867 = vmatpush1.msra.mxu0 0.0
        %1868 = vmatprep.subr.mxu0 0.0
        %1869 = vmatpush1.msra.mxu0 0.0
        %1870 = vmatprep.subr.mxu0 0.0
        %1871 = vmatpush1.msra.mxu0 0.0
        %1872 = vmatprep.subr.mxu0 0.0
        %1873 = vmatpush1.msra.mxu0 0.0
        %1874 = vmatprep.subr.mxu0 0.0
        %1875 = vmatpush1.msra.mxu0 0.0
        %1876 = vmatprep.subr.mxu0 0.0
        %1877 = vmatpush1.msra.mxu0 0.0
        %1878 = vmatprep.subr.mxu0 0.0
        %1879 = vmatpush1.msra.mxu0 0.0
        %1880 = vmatprep.subr.mxu0 0.0
        %1881 = vmatpush1.msra.mxu0 0.0
        %1882 = vmatprep.subr.mxu0 0.0
        %1883 = vmatpush1.msra.mxu0 0.0
        %1884 = vmatprep.subr.mxu0 0.0
        %1885 = vmatpush1.msra.mxu0 0.0
        %1886 = vmatprep.subr.mxu0 0.0
        %1887 = vmatpush1.msra.mxu0 0.0
        %1888 = vmatprep.subr.mxu0 0.0
        %1889 = vmatpush1.msra.mxu0 0.0
        %1890 = vmatprep.subr.mxu0 0.0
        %1891 = vmatpush1.msra.mxu0 0.0
        %1892 = vmatprep.subr.mxu0 0.0
        %1893 = vmatpush1.msra.mxu0 0.0
        %1894 = vmatprep.subr.mxu0 0.0
        %1895 = vmatpush1.msra.mxu0 0.0
        %1896 = vmatprep.subr.mxu0 0.0
        %1897 = vmatpush1.msra.mxu0 0.0
        %1898 = vmatprep.subr.mxu0 0.0
        %1899 = vmatpush1.msra.mxu0 0.0
        %1900 = vmatprep.subr.mxu0 0.0
        %1901 = vmatpush1.msra.mxu0 0.0
        %1902 = vmatprep.mubr.f32.mxu0 0.0
        %1903 = vmatmul.mubr.f32.gmra.mrb[0].mxu0 %v1836
        %v1904 = vpop.f32.mrb[0].mxu0
        %v1905 = vadd.f32 %v1833, %v1904
        %v1906 = vpop.f32.mrb[0].mxu0
        %1907 = vdwg.mxu0
        %1909 = vrot.lane.b32.xlu0 %v1905, 96
        %v1910 = vpop.permute.xlu0 %1909
        %v1911 = vsel %vm811, %v1905, 0
        %v1913 = vsel %vm811, %v1910, 0
        %1915 = vmatprep.subr.mxu0 0.0
        %1916 = vmatpush1.xpose.msra.mxu0 %v1913
        %1917 = vmatprep.subr.mxu0 0.0
        %1918 = vmatpush1.xpose.msra.mxu0 0.0
        %1919 = vmatprep.subr.mxu0 0.0
        %1920 = vmatpush1.xpose.msra.mxu0 0.0
        %1921 = vmatprep.subr.mxu0 0.0
        %1922 = vmatpush1.xpose.msra.mxu0 0.0
        %1923 = vmatprep.subr.mxu0 0.0
        %1924 = vmatpush1.xpose.msra.mxu0 0.0
        %1925 = vmatprep.subr.mxu0 0.0
        %1926 = vmatpush1.xpose.msra.mxu0 0.0
        %1927 = vmatprep.subr.mxu0 0.0
        %1928 = vmatpush1.xpose.msra.mxu0 0.0
        %1929 = vmatprep.subr.mxu0 0.0
        %1930 = vmatpush1.xpose.msra.mxu0 0.0
        %1931 = vmatprep.subr.mxu0 0.0
        %1932 = vmatpush1.xpose.msra.mxu0 0.0
        %1933 = vmatprep.subr.mxu0 0.0
        %1934 = vmatpush1.xpose.msra.mxu0 0.0
        %1935 = vmatprep.subr.mxu0 0.0
        %1936 = vmatpush1.xpose.msra.mxu0 0.0
        %1937 = vmatprep.subr.mxu0 0.0
        %1938 = vmatpush1.xpose.msra.mxu0 0.0
        %1939 = vmatprep.subr.mxu0 0.0
        %1940 = vmatpush1.xpose.msra.mxu0 0.0
        %1941 = vmatprep.subr.mxu0 0.0
        %1942 = vmatpush1.xpose.msra.mxu0 0.0
        %1943 = vmatprep.subr.mxu0 0.0
        %1944 = vmatpush1.xpose.msra.mxu0 0.0
        %1945 = vmatprep.subr.mxu0 0.0
        %1946 = vmatpush1.xpose.msra.mxu0 0.0
        %1947 = vmatprep.subr.mxu0 0.0
        %1948 = vmatpush1.xpose.msra.mxu0 0.0
        %1949 = vmatprep.subr.mxu0 0.0
        %1950 = vmatpush1.xpose.msra.mxu0 0.0
        %1951 = vmatprep.subr.mxu0 0.0
        %1952 = vmatpush1.xpose.msra.mxu0 0.0
        %1953 = vmatprep.subr.mxu0 0.0
        %1954 = vmatpush1.xpose.msra.mxu0 0.0
        %1955 = vmatprep.subr.mxu0 0.0
        %1956 = vmatpush1.xpose.msra.mxu0 0.0
        %1957 = vmatprep.subr.mxu0 0.0
        %1958 = vmatpush1.xpose.msra.mxu0 0.0
        %1959 = vmatprep.subr.mxu0 0.0
        %1960 = vmatpush1.xpose.msra.mxu0 0.0
        %1961 = vmatprep.subr.mxu0 0.0
        %1962 = vmatpush1.xpose.msra.mxu0 0.0
        %1963 = vmatprep.subr.mxu0 0.0
        %1964 = vmatpush1.xpose.msra.mxu0 0.0
        %1965 = vmatprep.subr.mxu0 0.0
        %1966 = vmatpush1.xpose.msra.mxu0 0.0
        %1967 = vmatprep.subr.mxu0 0.0
        %1968 = vmatpush1.xpose.msra.mxu0 0.0
        %1969 = vmatprep.subr.mxu0 0.0
        %1970 = vmatpush1.xpose.msra.mxu0 0.0
        %1971 = vmatprep.subr.mxu0 0.0
        %1972 = vmatpush1.xpose.msra.mxu0 0.0
        %1973 = vmatprep.subr.mxu0 0.0
        %1974 = vmatpush1.xpose.msra.mxu0 0.0
        %1975 = vmatprep.subr.mxu0 0.0
        %1976 = vmatpush1.xpose.msra.mxu0 0.0
        %1977 = vmatprep.subr.mxu0 0.0
        %1978 = vmatpush1.xpose.msra.mxu0 0.0
        %1979 = vmatprep.mubr.f32.mxu0 0.0
        %1980 = vmatmul.mubr.f32.gmra.mrb[0].mxu0 %v1911
        %v1981 = vpop.f32.mrb[0].mxu0
        %v1982 = vadd.f32 0.0, %v1981
        %v1983 = vpop.f32.mrb[0].mxu0
        %1984 = vdwg.mxu0
        %v1985 = vmul.f32 %v1982, 0.35355338
        %v1986 = vsel %vm692, %v1985, -1e+30
        %v1987 = vsel %vm811, %v1986, -inf
        %1988 = vmax.xlane.f32.xlu0 %v1987
        %v1989 = vpop.xlane.xlu0 %1988
        %v1990 = vsub.f32 %v1986, %v1989
        %v1991 = vmul.f32 %v1990, 1.442695
        %v1992 = vpow.pop %v1991
        %v1993 = vsel %vm811, %v1992, 0.0
        %1994 = vadd.xlane.f32.xlu0 %v1993
        %v1995 = vpop.xlane.xlu0 %1994
        %v1996 = vrcp.pop %v1995
        %v1997 = vmul.f32 %v1992, %v1996
        %1998 = vrot.lane.b32.xlu0 %v1905, 64
        %v1999 = vpop.permute.xlu0 %1998
        %v2002 = vsel %vm811, %v1997, 0
        %2004 = vmatprep.subr.mxu0 0.0
        %2005 = vmatpush1.msra.mxu0 %v1999
        %2006 = vmatprep.subr.mxu0 0.0
        %2007 = vmatpush1.msra.mxu0 0.0
        %2008 = vmatprep.subr.mxu0 0.0
        %2009 = vmatpush1.msra.mxu0 0.0
        %2010 = vmatprep.subr.mxu0 0.0
        %2011 = vmatpush1.msra.mxu0 0.0
        %2012 = vmatprep.subr.mxu0 0.0
        %2013 = vmatpush1.msra.mxu0 0.0
        %2014 = vmatprep.subr.mxu0 0.0
        %2015 = vmatpush1.msra.mxu0 0.0
        %2016 = vmatprep.subr.mxu0 0.0
        %2017 = vmatpush1.msra.mxu0 0.0
        %2018 = vmatprep.subr.mxu0 0.0
        %2019 = vmatpush1.msra.mxu0 0.0
        %2020 = vmatprep.subr.mxu0 0.0
        %2021 = vmatpush1.msra.mxu0 0.0
        %2022 = vmatprep.subr.mxu0 0.0
        %2023 = vmatpush1.msra.mxu0 0.0
        %2024 = vmatprep.subr.mxu0 0.0
        %2025 = vmatpush1.msra.mxu0 0.0
        %2026 = vmatprep.subr.mxu0 0.0
        %2027 = vmatpush1.msra.mxu0 0.0
        %2028 = vmatprep.subr.mxu0 0.0
        %2029 = vmatpush1.msra.mxu0 0.0
        %2030 = vmatprep.subr.mxu0 0.0
        %2031 = vmatpush1.msra.mxu0 0.0
        %2032 = vmatprep.subr.mxu0 0.0
        %2033 = vmatpush1.msra.mxu0 0.0
        %2034 = vmatprep.subr.mxu0 0.0
        %2035 = vmatpush1.msra.mxu0 0.0
        %2036 = vmatprep.subr.mxu0 0.0
        %2037 = vmatpush1.msra.mxu0 0.0
        %2038 = vmatprep.subr.mxu0 0.0
        %2039 = vmatpush1.msra.mxu0 0.0
        %2040 = vmatprep.subr.mxu0 0.0
        %2041 = vmatpush1.msra.mxu0 0.0
        %2042 = vmatprep.subr.mxu0 0.0
        %2043 = vmatpush1.msra.mxu0 0.0
        %2044 = vmatprep.subr.mxu0 0.0
        %2045 = vmatpush1.msra.mxu0 0.0
        %2046 = vmatprep.subr.mxu0 0.0
        %2047 = vmatpush1.msra.mxu0 0.0
        %2048 = vmatprep.subr.mxu0 0.0
        %2049 = vmatpush1.msra.mxu0 0.0
        %2050 = vmatprep.subr.mxu0 0.0
        %2051 = vmatpush1.msra.mxu0 0.0
        %2052 = vmatprep.subr.mxu0 0.0
        %2053 = vmatpush1.msra.mxu0 0.0
        %2054 = vmatprep.subr.mxu0 0.0
        %2055 = vmatpush1.msra.mxu0 0.0
        %2056 = vmatprep.subr.mxu0 0.0
        %2057 = vmatpush1.msra.mxu0 0.0
        %2058 = vmatprep.subr.mxu0 0.0
        %2059 = vmatpush1.msra.mxu0 0.0
        %2060 = vmatprep.subr.mxu0 0.0
        %2061 = vmatpush1.msra.mxu0 0.0
        %2062 = vmatprep.subr.mxu0 0.0
        %2063 = vmatpush1.msra.mxu0 0.0
        %2064 = vmatprep.subr.mxu0 0.0
        %2065 = vmatpush1.msra.mxu0 0.0
        %2066 = vmatprep.subr.mxu0 0.0
        %2067 = vmatpush1.msra.mxu0 0.0
        %2068 = vmatprep.mubr.f32.mxu0 0.0
        %2069 = vmatmul.mubr.f32.gmra.mrb[0].mxu0 %v2002
        %v2070 = vpop.f32.mrb[0].mxu0
        %v2071 = vadd.f32 0.0, %v2070
        %v2072 = vpop.f32.mrb[0].mxu0
        %2073 = vdwg.mxu0
        %2074 = vrot.lane.b32.xlu0 %v1905, 120
        %v2075 = vpop.permute.xlu0 %2074
        %2076 = vrot.lane.b32.xlu0 %v1905, 88
        %v2077 = vpop.permute.xlu0 %2076
        %v2078 = vsel %vm811, %v2075, 0
        %v2080 = vsel %vm811, %v2077, 0
        %2082 = vmatprep.subr.mxu0 0.0
        %2083 = vmatpush1.xpose.msra.mxu0 %v2080
        %2084 = vmatprep.subr.mxu0 0.0
        %2085 = vmatpush1.xpose.msra.mxu0 0.0
        %2086 = vmatprep.subr.mxu0 0.0
        %2087 = vmatpush1.xpose.msra.mxu0 0.0
        %2088 = vmatprep.subr.mxu0 0.0
        %2089 = vmatpush1.xpose.msra.mxu0 0.0
        %2090 = vmatprep.subr.mxu0 0.0
        %2091 = vmatpush1.xpose.msra.mxu0 0.0
        %2092 = vmatprep.subr.mxu0 0.0
        %2093 = vmatpush1.xpose.msra.mxu0 0.0
        %2094 = vmatprep.subr.mxu0 0.0
        %2095 = vmatpush1.xpose.msra.mxu0 0.0
        %2096 = vmatprep.subr.mxu0 0.0
        %2097 = vmatpush1.xpose.msra.mxu0 0.0
        %2098 = vmatprep.subr.mxu0 0.0
        %2099 = vmatpush1.xpose.msra.mxu0 0.0
        %2100 = vmatprep.subr.mxu0 0.0
        %2101 = vmatpush1.xpose.msra.mxu0 0.0
        %2102 = vmatprep.subr.mxu0 0.0
        %2103 = vmatpush1.xpose.msra.mxu0 0.0
        %2104 = vmatprep.subr.mxu0 0.0
        %2105 = vmatpush1.xpose.msra.mxu0 0.0
        %2106 = vmatprep.subr.mxu0 0.0
        %2107 = vmatpush1.xpose.msra.mxu0 0.0
        %2108 = vmatprep.subr.mxu0 0.0
        %2109 = vmatpush1.xpose.msra.mxu0 0.0
        %2110 = vmatprep.subr.mxu0 0.0
        %2111 = vmatpush1.xpose.msra.mxu0 0.0
        %2112 = vmatprep.subr.mxu0 0.0
        %2113 = vmatpush1.xpose.msra.mxu0 0.0
        %2114 = vmatprep.subr.mxu0 0.0
        %2115 = vmatpush1.xpose.msra.mxu0 0.0
        %2116 = vmatprep.subr.mxu0 0.0
        %2117 = vmatpush1.xpose.msra.mxu0 0.0
        %2118 = vmatprep.subr.mxu0 0.0
        %2119 = vmatpush1.xpose.msra.mxu0 0.0
        %2120 = vmatprep.subr.mxu0 0.0
        %2121 = vmatpush1.xpose.msra.mxu0 0.0
        %2122 = vmatprep.subr.mxu0 0.0
        %2123 = vmatpush1.xpose.msra.mxu0 0.0
        %2124 = vmatprep.subr.mxu0 0.0
        %2125 = vmatpush1.xpose.msra.mxu0 0.0
        %2126 = vmatprep.subr.mxu0 0.0
        %2127 = vmatpush1.xpose.msra.mxu0 0.0
        %2128 = vmatprep.subr.mxu0 0.0
        %2129 = vmatpush1.xpose.msra.mxu0 0.0
        %2130 = vmatprep.subr.mxu0 0.0
        %2131 = vmatpush1.xpose.msra.mxu0 0.0
        %2132 = vmatprep.subr.mxu0 0.0
        %2133 = vmatpush1.xpose.msra.mxu0 0.0
        %2134 = vmatprep.subr.mxu0 0.0
        %2135 = vmatpush1.xpose.msra.mxu0 0.0
        %2136 = vmatprep.subr.mxu0 0.0
        %2137 = vmatpush1.xpose.msra.mxu0 0.0
        %2138 = vmatprep.subr.mxu0 0.0
        %2139 = vmatpush1.xpose.msra.mxu0 0.0
        %2140 = vmatprep.subr.mxu0 0.0
        %2141 = vmatpush1.xpose.msra.mxu0 0.0
        %2142 = vmatprep.subr.mxu0 0.0
        %2143 = vmatpush1.xpose.msra.mxu0 0.0
        %2144 = vmatprep.subr.mxu0 0.0
        %2145 = vmatpush1.xpose.msra.mxu0 0.0
        %2146 = vmatprep.mubr.f32.mxu0 0.0
        %2147 = vmatmul.mubr.f32.gmra.mrb[0].mxu0 %v2078
        %v2148 = vpop.f32.mrb[0].mxu0
        %v2149 = vadd.f32 0.0, %v2148
        %v2150 = vpop.f32.mrb[0].mxu0
        %2151 = vdwg.mxu0
        %v2152 = vmul.f32 %v2149, 0.35355338
        %v2153 = vsel %vm692, %v2152, -1e+30
        %v2154 = vsel %vm811, %v2153, -inf
        %2155 = vmax.xlane.f32.xlu0 %v2154
        %v2156 = vpop.xlane.xlu0 %2155
        %v2157 = vsub.f32 %v2153, %v2156
        %v2158 = vmul.f32 %v2157, 1.442695
        %v2159 = vpow.pop %v2158
        %v2160 = vsel %vm811, %v2159, 0.0
        %2161 = vadd.xlane.f32.xlu0 %v2160
        %v2162 = vpop.xlane.xlu0 %2161
        %v2163 = vrcp.pop %v2162
        %v2164 = vmul.f32 %v2159, %v2163
        %2165 = vrot.lane.b32.xlu0 %v1905, 56
        %v2166 = vpop.permute.xlu0 %2165
        %v2169 = vsel %vm811, %v2164, 0
        %2171 = vmatprep.subr.mxu0 0.0
        %2172 = vmatpush1.msra.mxu0 %v2166
        %2173 = vmatprep.subr.mxu0 0.0
        %2174 = vmatpush1.msra.mxu0 0.0
        %2175 = vmatprep.subr.mxu0 0.0
        %2176 = vmatpush1.msra.mxu0 0.0
        %2177 = vmatprep.subr.mxu0 0.0
        %2178 = vmatpush1.msra.mxu0 0.0
        %2179 = vmatprep.subr.mxu0 0.0
        %2180 = vmatpush1.msra.mxu0 0.0
        %2181 = vmatprep.subr.mxu0 0.0
        %2182 = vmatpush1.msra.mxu0 0.0
        %2183 = vmatprep.subr.mxu0 0.0
        %2184 = vmatpush1.msra.mxu0 0.0
        %2185 = vmatprep.subr.mxu0 0.0
        %2186 = vmatpush1.msra.mxu0 0.0
        %2187 = vmatprep.subr.mxu0 0.0
        %2188 = vmatpush1.msra.mxu0 0.0
        %2189 = vmatprep.subr.mxu0 0.0
        %2190 = vmatpush1.msra.mxu0 0.0
        %2191 = vmatprep.subr.mxu0 0.0
        %2192 = vmatpush1.msra.mxu0 0.0
        %2193 = vmatprep.subr.mxu0 0.0
        %2194 = vmatpush1.msra.mxu0 0.0
        %2195 = vmatprep.subr.mxu0 0.0
        %2196 = vmatpush1.msra.mxu0 0.0
        %2197 = vmatprep.subr.mxu0 0.0
        %2198 = vmatpush1.msra.mxu0 0.0
        %2199 = vmatprep.subr.mxu0 0.0
        %2200 = vmatpush1.msra.mxu0 0.0
        %2201 = vmatprep.subr.mxu0 0.0
        %2202 = vmatpush1.msra.mxu0 0.0
        %2203 = vmatprep.subr.mxu0 0.0
        %2204 = vmatpush1.msra.mxu0 0.0
        %2205 = vmatprep.subr.mxu0 0.0
        %2206 = vmatpush1.msra.mxu0 0.0
        %2207 = vmatprep.subr.mxu0 0.0
        %2208 = vmatpush1.msra.mxu0 0.0
        %2209 = vmatprep.subr.mxu0 0.0
        %2210 = vmatpush1.msra.mxu0 0.0
        %2211 = vmatprep.subr.mxu0 0.0
        %2212 = vmatpush1.msra.mxu0 0.0
        %2213 = vmatprep.subr.mxu0 0.0
        %2214 = vmatpush1.msra.mxu0 0.0
        %2215 = vmatprep.subr.mxu0 0.0
        %2216 = vmatpush1.msra.mxu0 0.0
        %2217 = vmatprep.subr.mxu0 0.0
        %2218 = vmatpush1.msra.mxu0 0.0
        %2219 = vmatprep.subr.mxu0 0.0
        %2220 = vmatpush1.msra.mxu0 0.0
        %2221 = vmatprep.subr.mxu0 0.0
        %2222 = vmatpush1.msra.mxu0 0.0
        %2223 = vmatprep.subr.mxu0 0.0
        %2224 = vmatpush1.msra.mxu0 0.0
        %2225 = vmatprep.subr.mxu0 0.0
        %2226 = vmatpush1.msra.mxu0 0.0
        %2227 = vmatprep.subr.mxu0 0.0
        %2228 = vmatpush1.msra.mxu0 0.0
        %2229 = vmatprep.subr.mxu0 0.0
        %2230 = vmatpush1.msra.mxu0 0.0
        %2231 = vmatprep.subr.mxu0 0.0
        %2232 = vmatpush1.msra.mxu0 0.0
        %2233 = vmatprep.subr.mxu0 0.0
        %2234 = vmatpush1.msra.mxu0 0.0
        %2235 = vmatprep.mubr.f32.mxu0 0.0
        %2236 = vmatmul.mubr.f32.gmra.mrb[0].mxu0 %v2169
        %v2237 = vpop.f32.mrb[0].mxu0
        %v2238 = vadd.f32 0.0, %v2237
        %v2239 = vpop.f32.mrb[0].mxu0
        %2240 = vdwg.mxu0
        %2241 = vrot.lane.b32.xlu0 %v1905, 112
        %v2242 = vpop.permute.xlu0 %2241
        %2243 = vrot.lane.b32.xlu0 %v1905, 80
        %v2244 = vpop.permute.xlu0 %2243
        %v2245 = vsel %vm811, %v2242, 0
        %v2247 = vsel %vm811, %v2244, 0
        %2249 = vmatprep.subr.mxu0 0.0
        %2250 = vmatpush1.xpose.msra.mxu0 %v2247
        %2251 = vmatprep.subr.mxu0 0.0
        %2252 = vmatpush1.xpose.msra.mxu0 0.0
        %2253 = vmatprep.subr.mxu0 0.0
        %2254 = vmatpush1.xpose.msra.mxu0 0.0
        %2255 = vmatprep.subr.mxu0 0.0
        %2256 = vmatpush1.xpose.msra.mxu0 0.0
        %2257 = vmatprep.subr.mxu0 0.0
        %2258 = vmatpush1.xpose.msra.mxu0 0.0
        %2259 = vmatprep.subr.mxu0 0.0
        %2260 = vmatpush1.xpose.msra.mxu0 0.0
        %2261 = vmatprep.subr.mxu0 0.0
        %2262 = vmatpush1.xpose.msra.mxu0 0.0
        %2263 = vmatprep.subr.mxu0 0.0
        %2264 = vmatpush1.xpose.msra.mxu0 0.0
        %2265 = vmatprep.subr.mxu0 0.0
        %2266 = vmatpush1.xpose.msra.mxu0 0.0
        %2267 = vmatprep.subr.mxu0 0.0
        %2268 = vmatpush1.xpose.msra.mxu0 0.0
        %2269 = vmatprep.subr.mxu0 0.0
        %2270 = vmatpush1.xpose.msra.mxu0 0.0
        %2271 = vmatprep.subr.mxu0 0.0
        %2272 = vmatpush1.xpose.msra.mxu0 0.0
        %2273 = vmatprep.subr.mxu0 0.0
        %2274 = vmatpush1.xpose.msra.mxu0 0.0
        %2275 = vmatprep.subr.mxu0 0.0
        %2276 = vmatpush1.xpose.msra.mxu0 0.0
        %2277 = vmatprep.subr.mxu0 0.0
        %2278 = vmatpush1.xpose.msra.mxu0 0.0
        %2279 = vmatprep.subr.mxu0 0.0
        %2280 = vmatpush1.xpose.msra.mxu0 0.0
        %2281 = vmatprep.subr.mxu0 0.0
        %2282 = vmatpush1.xpose.msra.mxu0 0.0
        %2283 = vmatprep.subr.mxu0 0.0
        %2284 = vmatpush1.xpose.msra.mxu0 0.0
        %2285 = vmatprep.subr.mxu0 0.0
        %2286 = vmatpush1.xpose.msra.mxu0 0.0
        %2287 = vmatprep.subr.mxu0 0.0
        %2288 = vmatpush1.xpose.msra.mxu0 0.0
        %2289 = vmatprep.subr.mxu0 0.0
        %2290 = vmatpush1.xpose.msra.mxu0 0.0
        %2291 = vmatprep.subr.mxu0 0.0
        %2292 = vmatpush1.xpose.msra.mxu0 0.0
        %2293 = vmatprep.subr.mxu0 0.0
        %2294 = vmatpush1.xpose.msra.mxu0 0.0
        %2295 = vmatprep.subr.mxu0 0.0
        %2296 = vmatpush1.xpose.msra.mxu0 0.0
        %2297 = vmatprep.subr.mxu0 0.0
        %2298 = vmatpush1.xpose.msra.mxu0 0.0
        %2299 = vmatprep.subr.mxu0 0.0
        %2300 = vmatpush1.xpose.msra.mxu0 0.0
        %2301 = vmatprep.subr.mxu0 0.0
        %2302 = vmatpush1.xpose.msra.mxu0 0.0
        %2303 = vmatprep.subr.mxu0 0.0
        %2304 = vmatpush1.xpose.msra.mxu0 0.0
        %2305 = vmatprep.subr.mxu0 0.0
        %2306 = vmatpush1.xpose.msra.mxu0 0.0
        %2307 = vmatprep.subr.mxu0 0.0
        %2308 = vmatpush1.xpose.msra.mxu0 0.0
        %2309 = vmatprep.subr.mxu0 0.0
        %2310 = vmatpush1.xpose.msra.mxu0 0.0
        %2311 = vmatprep.subr.mxu0 0.0
        %2312 = vmatpush1.xpose.msra.mxu0 0.0
        %2313 = vmatprep.mubr.f32.mxu0 0.0
        %2314 = vmatmul.mubr.f32.gmra.mrb[0].mxu0 %v2245
        %v2315 = vpop.f32.mrb[0].mxu0
        %v2316 = vadd.f32 0.0, %v2315
        %v2317 = vpop.f32.mrb[0].mxu0
        %2318 = vdwg.mxu0
        %v2319 = vmul.f32 %v2316, 0.35355338
        %v2320 = vsel %vm692, %v2319, -1e+30
        %v2321 = vsel %vm811, %v2320, -inf
        %2322 = vmax.xlane.f32.xlu0 %v2321
        %v2323 = vpop.xlane.xlu0 %2322
        %v2324 = vsub.f32 %v2320, %v2323
        %v2325 = vmul.f32 %v2324, 1.442695
        %v2326 = vpow.pop %v2325
        %v2327 = vsel %vm811, %v2326, 0.0
        %2328 = vadd.xlane.f32.xlu0 %v2327
        %v2329 = vpop.xlane.xlu0 %2328
        %v2330 = vrcp.pop %v2329
        %v2331 = vmul.f32 %v2326, %v2330
        %2332 = vrot.lane.b32.xlu0 %v1905, 48
        %v2333 = vpop.permute.xlu0 %2332
        %v2336 = vsel %vm811, %v2331, 0
        %2338 = vmatprep.subr.mxu0 0.0
        %2339 = vmatpush1.msra.mxu0 %v2333
        %2340 = vmatprep.subr.mxu0 0.0
        %2341 = vmatpush1.msra.mxu0 0.0
        %2342 = vmatprep.subr.mxu0 0.0
        %2343 = vmatpush1.msra.mxu0 0.0
        %2344 = vmatprep.subr.mxu0 0.0
        %2345 = vmatpush1.msra.mxu0 0.0
        %2346 = vmatprep.subr.mxu0 0.0
        %2347 = vmatpush1.msra.mxu0 0.0
        %2348 = vmatprep.subr.mxu0 0.0
        %2349 = vmatpush1.msra.mxu0 0.0
        %2350 = vmatprep.subr.mxu0 0.0
        %2351 = vmatpush1.msra.mxu0 0.0
        %2352 = vmatprep.subr.mxu0 0.0
        %2353 = vmatpush1.msra.mxu0 0.0
        %2354 = vmatprep.subr.mxu0 0.0
        %2355 = vmatpush1.msra.mxu0 0.0
        %2356 = vmatprep.subr.mxu0 0.0
        %2357 = vmatpush1.msra.mxu0 0.0
        %2358 = vmatprep.subr.mxu0 0.0
        %2359 = vmatpush1.msra.mxu0 0.0
        %2360 = vmatprep.subr.mxu0 0.0
        %2361 = vmatpush1.msra.mxu0 0.0
        %2362 = vmatprep.subr.mxu0 0.0
        %2363 = vmatpush1.msra.mxu0 0.0
        %2364 = vmatprep.subr.mxu0 0.0
        %2365 = vmatpush1.msra.mxu0 0.0
        %2366 = vmatprep.subr.mxu0 0.0
        %2367 = vmatpush1.msra.mxu0 0.0
        %2368 = vmatprep.subr.mxu0 0.0
        %2369 = vmatpush1.msra.mxu0 0.0
        %2370 = vmatprep.subr.mxu0 0.0
        %2371 = vmatpush1.msra.mxu0 0.0
        %2372 = vmatprep.subr.mxu0 0.0
        %2373 = vmatpush1.msra.mxu0 0.0
        %2374 = vmatprep.subr.mxu0 0.0
        %2375 = vmatpush1.msra.mxu0 0.0
        %2376 = vmatprep.subr.mxu0 0.0
        %2377 = vmatpush1.msra.mxu0 0.0
        %2378 = vmatprep.subr.mxu0 0.0
        %2379 = vmatpush1.msra.mxu0 0.0
        %2380 = vmatprep.subr.mxu0 0.0
        %2381 = vmatpush1.msra.mxu0 0.0
        %2382 = vmatprep.subr.mxu0 0.0
        %2383 = vmatpush1.msra.mxu0 0.0
        %2384 = vmatprep.subr.mxu0 0.0
        %2385 = vmatpush1.msra.mxu0 0.0
        %2386 = vmatprep.subr.mxu0 0.0
        %2387 = vmatpush1.msra.mxu0 0.0
        %2388 = vmatprep.subr.mxu0 0.0
        %2389 = vmatpush1.msra.mxu0 0.0
        %2390 = vmatprep.subr.mxu0 0.0
        %2391 = vmatpush1.msra.mxu0 0.0
        %2392 = vmatprep.subr.mxu0 0.0
        %2393 = vmatpush1.msra.mxu0 0.0
        %2394 = vmatprep.subr.mxu0 0.0
        %2395 = vmatpush1.msra.mxu0 0.0
        %2396 = vmatprep.subr.mxu0 0.0
        %2397 = vmatpush1.msra.mxu0 0.0
        %2398 = vmatprep.subr.mxu0 0.0
        %2399 = vmatpush1.msra.mxu0 0.0
        %2400 = vmatprep.subr.mxu0 0.0
        %2401 = vmatpush1.msra.mxu0 0.0
        %2402 = vmatprep.mubr.f32.mxu0 0.0
        %2403 = vmatmul.mubr.f32.gmra.mrb[0].mxu0 %v2336
        %v2404 = vpop.f32.mrb[0].mxu0
        %v2405 = vadd.f32 0.0, %v2404
        %v2406 = vpop.f32.mrb[0].mxu0
        %2407 = vdwg.mxu0
        %2408 = vrot.lane.b32.xlu0 %v1905, 104
        %v2409 = vpop.permute.xlu0 %2408
        %2410 = vrot.lane.b32.xlu0 %v1905, 72
        %v2411 = vpop.permute.xlu0 %2410
        %v2412 = vsel %vm811, %v2409, 0
        %v2414 = vsel %vm811, %v2411, 0
        %2416 = vmatprep.subr.mxu0 0.0
        %2417 = vmatpush1.xpose.msra.mxu0 %v2414
        %2418 = vmatprep.subr.mxu0 0.0
        %2419 = vmatpush1.xpose.msra.mxu0 0.0
        %2420 = vmatprep.subr.mxu0 0.0
        %2421 = vmatpush1.xpose.msra.mxu0 0.0
        %2422 = vmatprep.subr.mxu0 0.0
        %2423 = vmatpush1.xpose.msra.mxu0 0.0
        %2424 = vmatprep.subr.mxu0 0.0
        %2425 = vmatpush1.xpose.msra.mxu0 0.0
        %2426 = vmatprep.subr.mxu0 0.0
        %2427 = vmatpush1.xpose.msra.mxu0 0.0
        %2428 = vmatprep.subr.mxu0 0.0
        %2429 = vmatpush1.xpose.msra.mxu0 0.0
        %2430 = vmatprep.subr.mxu0 0.0
        %2431 = vmatpush1.xpose.msra.mxu0 0.0
        %2432 = vmatprep.subr.mxu0 0.0
        %2433 = vmatpush1.xpose.msra.mxu0 0.0
        %2434 = vmatprep.subr.mxu0 0.0
        %2435 = vmatpush1.xpose.msra.mxu0 0.0
        %2436 = vmatprep.subr.mxu0 0.0
        %2437 = vmatpush1.xpose.msra.mxu0 0.0
        %2438 = vmatprep.subr.mxu0 0.0
        %2439 = vmatpush1.xpose.msra.mxu0 0.0
        %2440 = vmatprep.subr.mxu0 0.0
        %2441 = vmatpush1.xpose.msra.mxu0 0.0
        %2442 = vmatprep.subr.mxu0 0.0
        %2443 = vmatpush1.xpose.msra.mxu0 0.0
        %2444 = vmatprep.subr.mxu0 0.0
        %2445 = vmatpush1.xpose.msra.mxu0 0.0
        %2446 = vmatprep.subr.mxu0 0.0
        %2447 = vmatpush1.xpose.msra.mxu0 0.0
        %2448 = vmatprep.subr.mxu0 0.0
        %2449 = vmatpush1.xpose.msra.mxu0 0.0
        %2450 = vmatprep.subr.mxu0 0.0
        %2451 = vmatpush1.xpose.msra.mxu0 0.0
        %2452 = vmatprep.subr.mxu0 0.0
        %2453 = vmatpush1.xpose.msra.mxu0 0.0
        %2454 = vmatprep.subr.mxu0 0.0
        %2455 = vmatpush1.xpose.msra.mxu0 0.0
        %2456 = vmatprep.subr.mxu0 0.0
        %2457 = vmatpush1.xpose.msra.mxu0 0.0
        %2458 = vmatprep.subr.mxu0 0.0
        %2459 = vmatpush1.xpose.msra.mxu0 0.0
        %2460 = vmatprep.subr.mxu0 0.0
        %2461 = vmatpush1.xpose.msra.mxu0 0.0
        %2462 = vmatprep.subr.mxu0 0.0
        %2463 = vmatpush1.xpose.msra.mxu0 0.0
        %2464 = vmatprep.subr.mxu0 0.0
        %2465 = vmatpush1.xpose.msra.mxu0 0.0
        %2466 = vmatprep.subr.mxu0 0.0
        %2467 = vmatpush1.xpose.msra.mxu0 0.0
        %2468 = vmatprep.subr.mxu0 0.0
        %2469 = vmatpush1.xpose.msra.mxu0 0.0
        %2470 = vmatprep.subr.mxu0 0.0
        %2471 = vmatpush1.xpose.msra.mxu0 0.0
        %2472 = vmatprep.subr.mxu0 0.0
        %2473 = vmatpush1.xpose.msra.mxu0 0.0
        %2474 = vmatprep.subr.mxu0 0.0
        %2475 = vmatpush1.xpose.msra.mxu0 0.0
        %2476 = vmatprep.subr.mxu0 0.0
        %2477 = vmatpush1.xpose.msra.mxu0 0.0
        %2478 = vmatprep.subr.mxu0 0.0
        %2479 = vmatpush1.xpose.msra.mxu0 0.0
        %2480 = vmatprep.mubr.f32.mxu0 0.0
        %2481 = vmatmul.mubr.f32.gmra.mrb[0].mxu0 %v2412
        %v2482 = vpop.f32.mrb[0].mxu0
        %v2483 = vadd.f32 0.0, %v2482
        %v2484 = vpop.f32.mrb[0].mxu0
        %2485 = vdwg.mxu0
        %v2486 = vmul.f32 %v2483, 0.35355338
        %v2487 = vsel %vm692, %v2486, -1e+30
        %v2488 = vsel %vm811, %v2487, -inf
        %2489 = vmax.xlane.f32.xlu0 %v2488
        %v2490 = vpop.xlane.xlu0 %2489
        %v2491 = vsub.f32 %v2487, %v2490
        %v2492 = vmul.f32 %v2491, 1.442695
        %v2493 = vpow.pop %v2492
        %v2494 = vsel %vm811, %v2493, 0.0
        %2495 = vadd.xlane.f32.xlu0 %v2494
        %v2496 = vpop.xlane.xlu0 %2495
        %v2497 = vrcp.pop %v2496
        %v2498 = vmul.f32 %v2493, %v2497
        %2499 = vrot.lane.b32.xlu0 %v1905, 40
        %v2500 = vpop.permute.xlu0 %2499
        %v2503 = vsel %vm811, %v2498, 0
        %2505 = vmatprep.subr.mxu0 0.0
        %2506 = vmatpush1.msra.mxu0 %v2500
        %2507 = vmatprep.subr.mxu0 0.0
        %2508 = vmatpush1.msra.mxu0 0.0
        %2509 = vmatprep.subr.mxu0 0.0
        %2510 = vmatpush1.msra.mxu0 0.0
        %2511 = vmatprep.subr.mxu0 0.0
        %2512 = vmatpush1.msra.mxu0 0.0
        %2513 = vmatprep.subr.mxu0 0.0
        %2514 = vmatpush1.msra.mxu0 0.0
        %2515 = vmatprep.subr.mxu0 0.0
        %2516 = vmatpush1.msra.mxu0 0.0
        %2517 = vmatprep.subr.mxu0 0.0
        %2518 = vmatpush1.msra.mxu0 0.0
        %2519 = vmatprep.subr.mxu0 0.0
        %2520 = vmatpush1.msra.mxu0 0.0
        %2521 = vmatprep.subr.mxu0 0.0
        %2522 = vmatpush1.msra.mxu0 0.0
        %2523 = vmatprep.subr.mxu0 0.0
        %2524 = vmatpush1.msra.mxu0 0.0
        %2525 = vmatprep.subr.mxu0 0.0
        %2526 = vmatpush1.msra.mxu0 0.0
        %2527 = vmatprep.subr.mxu0 0.0
        %2528 = vmatpush1.msra.mxu0 0.0
        %2529 = vmatprep.subr.mxu0 0.0
        %2530 = vmatpush1.msra.mxu0 0.0
        %2531 = vmatprep.subr.mxu0 0.0
        %2532 = vmatpush1.msra.mxu0 0.0
        %2533 = vmatprep.subr.mxu0 0.0
        %2534 = vmatpush1.msra.mxu0 0.0
        %2535 = vmatprep.subr.mxu0 0.0
        %2536 = vmatpush1.msra.mxu0 0.0
        %2537 = vmatprep.subr.mxu0 0.0
        %2538 = vmatpush1.msra.mxu0 0.0
        %2539 = vmatprep.subr.mxu0 0.0
        %2540 = vmatpush1.msra.mxu0 0.0
        %2541 = vmatprep.subr.mxu0 0.0
        %2542 = vmatpush1.msra.mxu0 0.0
        %2543 = vmatprep.subr.mxu0 0.0
        %2544 = vmatpush1.msra.mxu0 0.0
        %2545 = vmatprep.subr.mxu0 0.0
        %2546 = vmatpush1.msra.mxu0 0.0
        %2547 = vmatprep.subr.mxu0 0.0
        %2548 = vmatpush1.msra.mxu0 0.0
        %2549 = vmatprep.subr.mxu0 0.0
        %2550 = vmatpush1.msra.mxu0 0.0
        %2551 = vmatprep.subr.mxu0 0.0
        %2552 = vmatpush1.msra.mxu0 0.0
        %2553 = vmatprep.subr.mxu0 0.0
        %2554 = vmatpush1.msra.mxu0 0.0
        %2555 = vmatprep.subr.mxu0 0.0
        %2556 = vmatpush1.msra.mxu0 0.0
        %2557 = vmatprep.subr.mxu0 0.0
        %2558 = vmatpush1.msra.mxu0 0.0
        %2559 = vmatprep.subr.mxu0 0.0
        %2560 = vmatpush1.msra.mxu0 0.0
        %2561 = vmatprep.subr.mxu0 0.0
        %2562 = vmatpush1.msra.mxu0 0.0
        %2563 = vmatprep.subr.mxu0 0.0
        %2564 = vmatpush1.msra.mxu0 0.0
        %2565 = vmatprep.subr.mxu0 0.0
        %2566 = vmatpush1.msra.mxu0 0.0
        %2567 = vmatprep.subr.mxu0 0.0
        %2568 = vmatpush1.msra.mxu0 0.0
        %2569 = vmatprep.mubr.f32.mxu0 0.0
        %2570 = vmatmul.mubr.f32.gmra.mrb[0].mxu0 %v2503
        %v2571 = vpop.f32.mrb[0].mxu0
        %v2572 = vadd.f32 0.0, %v2571
        %v2573 = vpop.f32.mrb[0].mxu0
        %2574 = vdwg.mxu0
        %2576 = vrot.lane.b32.xlu0 %v2238, 8
        %v2577 = vpop.permute.xlu0 %2576
        %2580 = vrot.lane.b32.xlu0 %v2405, 16
        %v2581 = vpop.permute.xlu0 %2580
        %2584 = vrot.lane.b32.xlu0 %v2572, 24
        %v2585 = vpop.permute.xlu0 %2584
        %v2587 = vsel %vm811, %v2071, %v2577
        %v2588 = vsel %vm1489, %v2587, %v2581
        %v2589 = vsel %vm1491, %v2588, %v2585
        %s2590 = scalar_lea.vmem %s7, 32
        %v2591 = vld [vmem:[%s2590] sm:$0xff]
        %v2592 = vld [vmem:[%s2590 + $0x8] sm:$0xff]
        %v2593 = vld [vmem:[%s2590 + $0x10] sm:$0xff]
        %v2594 = vld [vmem:[%s2590 + $0x18] sm:$0xff]
        %v2596 = vsel %vm695, %v2589, 0
        %2598 = vmatprep.subr.mxu0 0.0
        %2599 = vmatpush1.msra.mxu0 %v2591
        %2600 = vmatprep.subr.mxu0 0.0
        %2601 = vmatpush1.msra.mxu0 %v2592
        %2602 = vmatprep.subr.mxu0 0.0
        %2603 = vmatpush1.msra.mxu0 %v2593
        %2604 = vmatprep.subr.mxu0 0.0
        %2605 = vmatpush1.msra.mxu0 %v2594
        %2606 = vmatprep.subr.mxu0 0.0
        %2607 = vmatpush1.msra.mxu0 0.0
        %2608 = vmatprep.subr.mxu0 0.0
        %2609 = vmatpush1.msra.mxu0 0.0
        %2610 = vmatprep.subr.mxu0 0.0
        %2611 = vmatpush1.msra.mxu0 0.0
        %2612 = vmatprep.subr.mxu0 0.0
        %2613 = vmatpush1.msra.mxu0 0.0
        %2614 = vmatprep.subr.mxu0 0.0
        %2615 = vmatpush1.msra.mxu0 0.0
        %2616 = vmatprep.subr.mxu0 0.0
        %2617 = vmatpush1.msra.mxu0 0.0
        %2618 = vmatprep.subr.mxu0 0.0
        %2619 = vmatpush1.msra.mxu0 0.0
        %2620 = vmatprep.subr.mxu0 0.0
        %2621 = vmatpush1.msra.mxu0 0.0
        %2622 = vmatprep.subr.mxu0 0.0
        %2623 = vmatpush1.msra.mxu0 0.0
        %2624 = vmatprep.subr.mxu0 0.0
        %2625 = vmatpush1.msra.mxu0 0.0
        %2626 = vmatprep.subr.mxu0 0.0
        %2627 = vmatpush1.msra.mxu0 0.0
        %2628 = vmatprep.subr.mxu0 0.0
        %2629 = vmatpush1.msra.mxu0 0.0
        %2630 = vmatprep.subr.mxu0 0.0
        %2631 = vmatpush1.msra.mxu0 0.0
        %2632 = vmatprep.subr.mxu0 0.0
        %2633 = vmatpush1.msra.mxu0 0.0
        %2634 = vmatprep.subr.mxu0 0.0
        %2635 = vmatpush1.msra.mxu0 0.0
        %2636 = vmatprep.subr.mxu0 0.0
        %2637 = vmatpush1.msra.mxu0 0.0
        %2638 = vmatprep.subr.mxu0 0.0
        %2639 = vmatpush1.msra.mxu0 0.0
        %2640 = vmatprep.subr.mxu0 0.0
        %2641 = vmatpush1.msra.mxu0 0.0
        %2642 = vmatprep.subr.mxu0 0.0
        %2643 = vmatpush1.msra.mxu0 0.0
        %2644 = vmatprep.subr.mxu0 0.0
        %2645 = vmatpush1.msra.mxu0 0.0
        %2646 = vmatprep.subr.mxu0 0.0
        %2647 = vmatpush1.msra.mxu0 0.0
        %2648 = vmatprep.subr.mxu0 0.0
        %2649 = vmatpush1.msra.mxu0 0.0
        %2650 = vmatprep.subr.mxu0 0.0
        %2651 = vmatpush1.msra.mxu0 0.0
        %2652 = vmatprep.subr.mxu0 0.0
        %2653 = vmatpush1.msra.mxu0 0.0
        %2654 = vmatprep.subr.mxu0 0.0
        %2655 = vmatpush1.msra.mxu0 0.0
        %2656 = vmatprep.subr.mxu0 0.0
        %2657 = vmatpush1.msra.mxu0 0.0
        %2658 = vmatprep.subr.mxu0 0.0
        %2659 = vmatpush1.msra.mxu0 0.0
        %2660 = vmatprep.subr.mxu0 0.0
        %2661 = vmatpush1.msra.mxu0 0.0
        %2662 = vmatprep.mubr.f32.mxu0 0.0
        %2663 = vmatmul.mubr.f32.gmra.mrb[0].mxu0 %v2596
        %v2664 = vpop.f32.mrb[0].mxu0
        %v2665 = vadd.f32 0.0, %v2664
        %v2666 = vpop.f32.mrb[0].mxu0
        %2667 = vdwg.mxu0
        %v2668 = vadd.f32 %v1790, %v2665
        %s2669 = scalar_lea.vmem %s8, 1
        %v2670 = vld [vmem:[%s2669] sm:$0x1]
        %v2672 = vlaneseq
        %v2673 = vshrl.u32 %v2672, 7
        %v2674 = vsub.s32 0, %v2673
        %v2675 = vrot.slane %v2670, %v2674
        %v2677 = vadd.f32 %v2668, %v2675
        %s2678 = scalar_lea.vmem %s9, 1
        %v2679 = vld [vmem:[%s2678] sm:$0x1]
        %s2680 = scalar_lea.vmem %s10, 1
        %v2681 = vld [vmem:[%s2680] sm:$0x1]
        %v2682 = vsel %vm695, %v2677, 0.0
        %2683 = vadd.xlane.f32.xlu0 %v2682
        %v2684 = vpop.xlane.xlu0 %2683
        %v2685 = vmul.f32 %v2684, %v699
        %v2686 = vsub.f32 %v2677, %v2685
        %v2687 = vmul.f32 %v2686, %v2686
        %v2688 = vsel %vm695, %v2687, 0.0
        %2689 = vadd.xlane.f32.xlu0 %v2688
        %v2690 = vpop.xlane.xlu0 %2689
        %v2691 = vmul.f32 %v2690, %v699
        %v2692 = vadd.f32 %v2691, 1e-05
        %v2693 = vrsqrt.pop %v2692
        %v2694 = vmul.f32 %v2686, %v2693
        %v2696 = vlaneseq
        %v2697 = vshrl.u32 %v2696, 7
        %v2698 = vsub.s32 0, %v2697
        %v2699 = vrot.slane %v2679, %v2698
        %v2701 = vmul.f32 %v2694, %v2699
        %v2703 = vlaneseq
        %v2704 = vshrl.u32 %v2703, 7
        %v2705 = vsub.s32 0, %v2704
        %v2706 = vrot.slane %v2681, %v2705
        %v2708 = vadd.f32 %v2701, %v2706
        %s2709 = scalar_lea.vmem %s11, 32
        %v2710 = vld [vmem:[%s2709] sm:$0xff]
        %v2711 = vld [vmem:[%s2709 + $0x8] sm:$0xff]
        %v2712 = vld [vmem:[%s2709 + $0x10] sm:$0xff]
        %v2713 = vld [vmem:[%s2709 + $0x18] sm:$0xff]
        %s2714 = scalar_lea.vmem %s12, 1
        %v2715 = vld [vmem:[%s2714] sm:$0x1]
        %v2717 = vlaneseq
        %v2718 = vshrl.u32 %v2717, 7
        %v2719 = vsub.s32 0, %v2718
        %v2720 = vrot.slane %v2715, %v2719
        %v2723 = vsel %vm695, %v2708, 0
        %2725 = vmatprep.subr.mxu0 0.0
        %2726 = vmatpush1.msra.mxu0 %v2710
        %2727 = vmatprep.subr.mxu0 0.0
        %2728 = vmatpush1.msra.mxu0 %v2711
        %2729 = vmatprep.subr.mxu0 0.0
        %2730 = vmatpush1.msra.mxu0 %v2712
        %2731 = vmatprep.subr.mxu0 0.0
        %2732 = vmatpush1.msra.mxu0 %v2713
        %2733 = vmatprep.subr.mxu0 0.0
        %2734 = vmatpush1.msra.mxu0 0.0
        %2735 = vmatprep.subr.mxu0 0.0
        %2736 = vmatpush1.msra.mxu0 0.0
        %2737 = vmatprep.subr.mxu0 0.0
        %2738 = vmatpush1.msra.mxu0 0.0
        %2739 = vmatprep.subr.mxu0 0.0
        %2740 = vmatpush1.msra.mxu0 0.0
        %2741 = vmatprep.subr.mxu0 0.0
        %2742 = vmatpush1.msra.mxu0 0.0
        %2743 = vmatprep.subr.mxu0 0.0
        %2744 = vmatpush1.msra.mxu0 0.0
        %2745 = vmatprep.subr.mxu0 0.0
        %2746 = vmatpush1.msra.mxu0 0.0
        %2747 = vmatprep.subr.mxu0 0.0
        %2748 = vmatpush1.msra.mxu0 0.0
        %2749 = vmatprep.subr.mxu0 0.0
        %2750 = vmatpush1.msra.mxu0 0.0
        %2751 = vmatprep.subr.mxu0 0.0
        %2752 = vmatpush1.msra.mxu0 0.0
        %2753 = vmatprep.subr.mxu0 0.0
        %2754 = vmatpush1.msra.mxu0 0.0
        %2755 = vmatprep.subr.mxu0 0.0
        %2756 = vmatpush1.msra.mxu0 0.0
        %2757 = vmatprep.subr.mxu0 0.0
        %2758 = vmatpush1.msra.mxu0 0.0
        %2759 = vmatprep.subr.mxu0 0.0
        %2760 = vmatpush1.msra.mxu0 0.0
        %2761 = vmatprep.subr.mxu0 0.0
        %2762 = vmatpush1.msra.mxu0 0.0
        %2763 = vmatprep.subr.mxu0 0.0
        %2764 = vmatpush1.msra.mxu0 0.0
        %2765 = vmatprep.subr.mxu0 0.0
        %2766 = vmatpush1.msra.mxu0 0.0
        %2767 = vmatprep.subr.mxu0 0.0
        %2768 = vmatpush1.msra.mxu0 0.0
        %2769 = vmatprep.subr.mxu0 0.0
        %2770 = vmatpush1.msra.mxu0 0.0
        %2771 = vmatprep.subr.mxu0 0.0
        %2772 = vmatpush1.msra.mxu0 0.0
        %2773 = vmatprep.subr.mxu0 0.0
        %2774 = vmatpush1.msra.mxu0 0.0
        %2775 = vmatprep.subr.mxu0 0.0
        %2776 = vmatpush1.msra.mxu0 0.0
        %2777 = vmatprep.subr.mxu0 0.0
        %2778 = vmatpush1.msra.mxu0 0.0
        %2779 = vmatprep.subr.mxu0 0.0
        %2780 = vmatpush1.msra.mxu0 0.0
        %2781 = vmatprep.subr.mxu0 0.0
        %2782 = vmatpush1.msra.mxu0 0.0
        %2783 = vmatprep.subr.mxu0 0.0
        %2784 = vmatpush1.msra.mxu0 0.0
        %2785 = vmatprep.subr.mxu0 0.0
        %2786 = vmatpush1.msra.mxu0 0.0
        %2787 = vmatprep.subr.mxu0 0.0
        %2788 = vmatpush1.msra.mxu0 0.0
        %2789 = vmatprep.mubr.f32.mxu0 0.0
        %2790 = vmatmul.mubr.f32.gmra.mrb[0].mxu0 %v2723
        %v2791 = vpop.f32.mrb[0].mxu0
        %v2792 = vadd.f32 %v2720, %v2791
        %v2793 = vpop.f32.mrb[0].mxu0
        %2794 = vdwg.mxu0
        %v2795 = vmul.f32 %v2792, %v2792
        %v2796 = vmul.f32 %v2792, %v2795
        %v2797 = vmul.f32 %v2796, 0.044715
        %v2798 = vadd.f32 %v2792, %v2797
        %v2799 = vmul.f32 %v2798, 0.7978846
        %v2800 = vtanh.pop %v2799
        %v2801 = vadd.f32 %v2800, 1.0
        %v2802 = vmul.f32 %v2801, 0.5
        %v2803 = vmul.f32 %v2792, %v2802
        %s2804 = scalar_lea.vmem %s13, 64
        %v2805 = vld [vmem:[%s2804] sm:$0xff]
        %v2806 = vld [vmem:[%s2804 + $0x8] sm:$0xff]
        %v2807 = vld [vmem:[%s2804 + $0x10] sm:$0xff]
        %v2808 = vld [vmem:[%s2804 + $0x18] sm:$0xff]
        %v2809 = vld [vmem:[%s2804 + $0x20] sm:$0xff]
        %v2810 = vld [vmem:[%s2804 + $0x28] sm:$0xff]
        %v2811 = vld [vmem:[%s2804 + $0x30] sm:$0xff]
        %v2812 = vld [vmem:[%s2804 + $0x38] sm:$0xff]
        %v2814 = vsel %vm616, %v2803, 0
        %2816 = vmatprep.subr.mxu0 0.0
        %2817 = vmatpush1.msra.mxu0 %v2805
        %2818 = vmatprep.subr.mxu0 0.0
        %2819 = vmatpush1.msra.mxu0 %v2806
        %2820 = vmatprep.subr.mxu0 0.0
        %2821 = vmatpush1.msra.mxu0 %v2807
        %2822 = vmatprep.subr.mxu0 0.0
        %2823 = vmatpush1.msra.mxu0 %v2808
        %2824 = vmatprep.subr.mxu0 0.0
        %2825 = vmatpush1.msra.mxu0 %v2809
        %2826 = vmatprep.subr.mxu0 0.0
        %2827 = vmatpush1.msra.mxu0 %v2810
        %2828 = vmatprep.subr.mxu0 0.0
        %2829 = vmatpush1.msra.mxu0 %v2811
        %2830 = vmatprep.subr.mxu0 0.0
        %2831 = vmatpush1.msra.mxu0 %v2812
        %2832 = vmatprep.subr.mxu0 0.0
        %2833 = vmatpush1.msra.mxu0 0.0
        %2834 = vmatprep.subr.mxu0 0.0
        %2835 = vmatpush1.msra.mxu0 0.0
        %2836 = vmatprep.subr.mxu0 0.0
        %2837 = vmatpush1.msra.mxu0 0.0
        %2838 = vmatprep.subr.mxu0 0.0
        %2839 = vmatpush1.msra.mxu0 0.0
        %2840 = vmatprep.subr.mxu0 0.0
        %2841 = vmatpush1.msra.mxu0 0.0
        %2842 = vmatprep.subr.mxu0 0.0
        %2843 = vmatpush1.msra.mxu0 0.0
        %2844 = vmatprep.subr.mxu0 0.0
        %2845 = vmatpush1.msra.mxu0 0.0
        %2846 = vmatprep.subr.mxu0 0.0
        %2847 = vmatpush1.msra.mxu0 0.0
        %2848 = vmatprep.subr.mxu0 0.0
        %2849 = vmatpush1.msra.mxu0 0.0
        %2850 = vmatprep.subr.mxu0 0.0
        %2851 = vmatpush1.msra.mxu0 0.0
        %2852 = vmatprep.subr.mxu0 0.0
        %2853 = vmatpush1.msra.mxu0 0.0
        %2854 = vmatprep.subr.mxu0 0.0
        %2855 = vmatpush1.msra.mxu0 0.0
        %2856 = vmatprep.subr.mxu0 0.0
        %2857 = vmatpush1.msra.mxu0 0.0
        %2858 = vmatprep.subr.mxu0 0.0
        %2859 = vmatpush1.msra.mxu0 0.0
        %2860 = vmatprep.subr.mxu0 0.0
        %2861 = vmatpush1.msra.mxu0 0.0
        %2862 = vmatprep.subr.mxu0 0.0
        %2863 = vmatpush1.msra.mxu0 0.0
        %2864 = vmatprep.subr.mxu0 0.0
        %2865 = vmatpush1.msra.mxu0 0.0
        %2866 = vmatprep.subr.mxu0 0.0
        %2867 = vmatpush1.msra.mxu0 0.0
        %2868 = vmatprep.subr.mxu0 0.0
        %2869 = vmatpush1.msra.mxu0 0.0
        %2870 = vmatprep.subr.mxu0 0.0
        %2871 = vmatpush1.msra.mxu0 0.0
        %2872 = vmatprep.subr.mxu0 0.0
        %2873 = vmatpush1.msra.mxu0 0.0
        %2874 = vmatprep.subr.mxu0 0.0
        %2875 = vmatpush1.msra.mxu0 0.0
        %2876 = vmatprep.subr.mxu0 0.0
        %2877 = vmatpush1.msra.mxu0 0.0
        %2878 = vmatprep.subr.mxu0 0.0
        %2879 = vmatpush1.msra.mxu0 0.0
        %2880 = vmatprep.mubr.f32.mxu0 0.0
        %2881 = vmatmul.mubr.f32.gmra.mrb[0].mxu0 %v2814
        %v2882 = vpop.f32.mrb[0].mxu0
        %v2883 = vadd.f32 0.0, %v2882
        %v2884 = vpop.f32.mrb[0].mxu0
        %2885 = vdwg.mxu0
        %v2886 = vadd.f32 %v2677, %v2883
        %s2887 = scalar_lea.vmem %s14, 1
        %v2888 = vld [vmem:[%s2887] sm:$0x1]
        %v2890 = vlaneseq
        %v2891 = vshrl.u32 %v2890, 7
        %v2892 = vsub.s32 0, %v2891
        %v2893 = vrot.slane %v2888, %v2892
        %v2895 = vadd.f32 %v2886, %v2893
        %v2896 = vld [vmem:[%s15] sm:$0x1]
        %v2897 = vld [vmem:[%s16] sm:$0x1]
        %v2898 = vsel %vm695, %v2895, 0.0
        %2899 = vadd.xlane.f32.xlu0 %v2898
        %v2900 = vpop.xlane.xlu0 %2899
        %v2901 = vmul.f32 %v2900, %v699
        %v2902 = vsub.f32 %v2895, %v2901
        %v2903 = vmul.f32 %v2902, %v2902
        %v2904 = vsel %vm695, %v2903, 0.0
        %2905 = vadd.xlane.f32.xlu0 %v2904
        %v2906 = vpop.xlane.xlu0 %2905
        %v2907 = vmul.f32 %v2906, %v699
        %v2908 = vadd.f32 %v2907, 1e-05
        %v2909 = vrsqrt.pop %v2908
        %v2910 = vmul.f32 %v2902, %v2909
        %v2912 = vlaneseq
        %v2913 = vshrl.u32 %v2912, 7
        %v2914 = vsub.s32 0, %v2913
        %v2915 = vrot.slane %v2896, %v2914
        %v2917 = vmul.f32 %v2910, %v2915
        %v2919 = vlaneseq
        %v2920 = vshrl.u32 %v2919, 7
        %v2921 = vsub.s32 0, %v2920
        %v2922 = vrot.slane %v2897, %v2921
        %v2924 = vadd.f32 %v2917, %v2922
        %v2925 = vld [vmem:[%s17] sm:$0xff]
        %v2926 = vld [vmem:[%s17 + $0x8] sm:$0xff]
        %v2927 = vld [vmem:[%s17 + $0x10] sm:$0xff]
        %v2928 = vld [vmem:[%s17 + $0x18] sm:$0xff]
        %v2929 = vld [vmem:[%s18] sm:$0x1]
        %v2931 = vlaneseq
        %v2932 = vshrl.u32 %v2931, 7
        %v2933 = vsub.s32 0, %v2932
        %v2934 = vrot.slane %v2929, %v2933
        %v2937 = vsel %vm695, %v2924, 0
        %2939 = vmatprep.subr.mxu0 0.0
        %2940 = vmatpush1.msra.mxu0 %v2925
        %2941 = vmatprep.subr.mxu0 0.0
        %2942 = vmatpush1.msra.mxu0 %v2926
        %2943 = vmatprep.subr.mxu0 0.0
        %2944 = vmatpush1.msra.mxu0 %v2927
        %2945 = vmatprep.subr.mxu0 0.0
        %2946 = vmatpush1.msra.mxu0 %v2928
        %2947 = vmatprep.subr.mxu0 0.0
        %2948 = vmatpush1.msra.mxu0 0.0
        %2949 = vmatprep.subr.mxu0 0.0
        %2950 = vmatpush1.msra.mxu0 0.0
        %2951 = vmatprep.subr.mxu0 0.0
        %2952 = vmatpush1.msra.mxu0 0.0
        %2953 = vmatprep.subr.mxu0 0.0
        %2954 = vmatpush1.msra.mxu0 0.0
        %2955 = vmatprep.subr.mxu0 0.0
        %2956 = vmatpush1.msra.mxu0 0.0
        %2957 = vmatprep.subr.mxu0 0.0
        %2958 = vmatpush1.msra.mxu0 0.0
        %2959 = vmatprep.subr.mxu0 0.0
        %2960 = vmatpush1.msra.mxu0 0.0
        %2961 = vmatprep.subr.mxu0 0.0
        %2962 = vmatpush1.msra.mxu0 0.0
        %2963 = vmatprep.subr.mxu0 0.0
        %2964 = vmatpush1.msra.mxu0 0.0
        %2965 = vmatprep.subr.mxu0 0.0
        %2966 = vmatpush1.msra.mxu0 0.0
        %2967 = vmatprep.subr.mxu0 0.0
        %2968 = vmatpush1.msra.mxu0 0.0
        %2969 = vmatprep.subr.mxu0 0.0
        %2970 = vmatpush1.msra.mxu0 0.0
        %2971 = vmatprep.subr.mxu0 0.0
        %2972 = vmatpush1.msra.mxu0 0.0
        %2973 = vmatprep.subr.mxu0 0.0
        %2974 = vmatpush1.msra.mxu0 0.0
        %2975 = vmatprep.subr.mxu0 0.0
        %2976 = vmatpush1.msra.mxu0 0.0
        %2977 = vmatprep.subr.mxu0 0.0
        %2978 = vmatpush1.msra.mxu0 0.0
        %2979 = vmatprep.subr.mxu0 0.0
        %2980 = vmatpush1.msra.mxu0 0.0
        %2981 = vmatprep.subr.mxu0 0.0
        %2982 = vmatpush1.msra.mxu0 0.0
        %2983 = vmatprep.subr.mxu0 0.0
        %2984 = vmatpush1.msra.mxu0 0.0
        %2985 = vmatprep.subr.mxu0 0.0
        %2986 = vmatpush1.msra.mxu0 0.0
        %2987 = vmatprep.subr.mxu0 0.0
        %2988 = vmatpush1.msra.mxu0 0.0
        %2989 = vmatprep.subr.mxu0 0.0
        %2990 = vmatpush1.msra.mxu0 0.0
        %2991 = vmatprep.subr.mxu0 0.0
        %2992 = vmatpush1.msra.mxu0 0.0
        %2993 = vmatprep.subr.mxu0 0.0
        %2994 = vmatpush1.msra.mxu0 0.0
        %2995 = vmatprep.subr.mxu0 0.0
        %2996 = vmatpush1.msra.mxu0 0.0
        %2997 = vmatprep.subr.mxu0 0.0
        %2998 = vmatpush1.msra.mxu0 0.0
        %2999 = vmatprep.subr.mxu0 0.0
        %3000 = vmatpush1.msra.mxu0 0.0
        %3001 = vmatprep.subr.mxu0 0.0
        %3002 = vmatpush1.msra.mxu0 0.0
        %3003 = vmatprep.mubr.f32.mxu0 0.0
        %3004 = vmatmul.mubr.f32.gmra.mrb[0].mxu0 %v2937
        %v3005 = vpop.f32.mrb[0].mxu0
        %v3006 = vadd.f32 %v2934, %v3005
        %v3007 = vpop.f32.mrb[0].mxu0
        %3008 = vdwg.mxu0
        %3009 = vst [vmem:[%s593] sm:$0xff] %v3006
        %s3010 = sand.u32 %s445, 1
        %s3011 = scalar_lea.sflag [#allocation3], %s3010
        %s3012 = sand.u32 %s445, 1
        %s3013 = smul.addr %s3012, 8
        %s3014 = scalar_lea.vmem [#allocation2], %s3013
        // Predicated region
        $region97: #{tpu_custom_call.1} parent=95 // pred_check
          %p3015 = pneg %p455
        $region98: #{tpu_custom_call.1} parent=95 // pred_check_branch
          %3017 = sbr.rel (%p3015) target = $region100
        $region99: #{tpu_custom_call.1} parent=95 // pred_region
          %s3019 = ssub.s32 128, 128
          %3020 = vsyncadd %s3011, %s3019
          %s3021 = smul.addr %s33, 128
          %s3022 = scalar_lea.hbm %s19, %s3021
          %s3024 = sshll.u32 %s3014, 4
          %s3025 = int_to_ptr.vmem [resolvable:$true] %s3024
          %3027 = dma.vmem_to_hbm [thread:$0]  %s3025, 128, %s3022, %s3011
        $region100: #{tpu_custom_call.1} parent=95 // pred_fallthru
          _
      $region96: #{tpu_custom_call.1} parent=5 // pred_fallthru
        _
      %p3028 = scmp.le.s32.totalorder 2, %s28
      // Predicated region
      $region101: #{tpu_custom_call.1} parent=5 // pred_check
        %p3029 = pneg %p3028
      $region102: #{tpu_custom_call.1} parent=5 // pred_check_branch
        %3031 = sbr.rel (%p3029) target = $region104
      $region103: #{tpu_custom_call.1} parent=5 // pred_region
        %s3032 = ssub.s32 %s28, 2
        // Predicated region
        $region105: #{tpu_custom_call.1} parent=103 // pred_check
          %p3033 = pneg %p461
        $region106: #{tpu_custom_call.1} parent=103 // pred_check_branch
          %3035 = sbr.rel (%p3033) target = $region108
        $region107: #{tpu_custom_call.1} parent=103 // pred_region
          %s3036 = sand.u32 %s446, 1
          %s3037 = scalar_lea.sflag [#allocation3], %s3036
          %s3038 = sand.u32 %s446, 1
          %s3039 = smul.addr %s3038, 8
          %s3040 = scalar_lea.vmem [#allocation2], %s3039
          %3041 = dma.done %s3037, 128
        $region108: #{tpu_custom_call.1} parent=103 // pred_fallthru
          _
      $region104: #{tpu_custom_call.1} parent=5 // pred_fallthru
        _
    $region6: #{tpu_custom_call.1} parent=1 // loop_footer
      %s32 = sadd.s32 1, %s28
    $region7: #{tpu_custom_call.1} parent=1 // loop_footer_branch
      %27 = sbr.rel target = $region3
    $region8: #{tpu_custom_call.1} parent=1 // loop_exit
      _
    %3042 = vsyncpa [#allocation3], 1
    %s3043 = scalar_lea.sflag [#allocation3], 1
    %3044 = vsyncpa %s3043, 1

</llo_original>
